<compile_context>
chip_gen: v7x
topology: tpu7x:2x2x1
jax: 0.10.0
libtpu: 0.0.40
codegen_flags: <defaults>
</compile_context>

<pallas_src>
import jax
import jax.numpy as jnp
from jax.experimental import pallas as pl
from jax.experimental.pallas import tpu as pltpu

GRID_SIZE = 5
SPLINE_ORDER = 3
NUM_BASES = GRID_SIZE + SPLINE_ORDER            # 8
GRID_LEN = GRID_SIZE + 2 * SPLINE_ORDER + 1     # 12
GRID_H = 2.0 / GRID_SIZE                        # uniform knot spacing (0.4)
KNOTS = tuple(float((j - SPLINE_ORDER) * GRID_H - 1.0) for j in range(GRID_LEN))
BN_EPS = 1e-5

LANE = 128                                      # TPU lane width
OUT_PAD = LANE                                  # lane-dense output slab (16 real cols)

# MXU operand dtype.  bf16 halves weight DMA/VMEM bytes and keeps every matmul
# single-pass on the bf16 MXU.  All elementwise/VPU math stays f32.
MXU_DTYPE = jnp.bfloat16


def _dot(a, w):
    """MXU matmul, bf16 operands, f32 accumulation (weights are pre-cast)."""
    return jnp.dot(a.astype(MXU_DTYPE), w, preferred_element_type=jnp.float32)


def _spline_planes(x):
    """8 cubic B-spline basis planes of x, each (tb, In) f32.

    Closed-form uniform cubic B-spline: per element only 4 basis polynomials
    are nonzero; they are routed to the right basis index with cell-index
    masks.  Knots/spacing are compile-time constants (no divides, no grid
    tensor), and only ~7 (tb, In) temporaries are live vs ~20 for the unrolled
    Cox-de Boor recursion.  Out-of-range x never matches any cell mask, so all
    bases are zero there, matching the reference half-open indicator chain.
    """
    u = (x - KNOTS[0]) * (1.0 / GRID_H)       # position in knot units
    c = jnp.floor(u)                          # cell index (float; may be <0 or >10)
    t = u - c                                 # local parameter in [0, 1)
    t2 = t * t
    t3 = t2 * t
    w3 = t3 * (1.0 / 6.0)                     # -> basis index c        (t^3/6)
    w0 = (1.0 / 6.0) + 0.5 * (t2 - t) - w3    # -> basis index c-3      ((1-t)^3/6)
    w1 = (2.0 / 3.0) - t2 + 0.5 * t3          # -> basis index c-2      ((3t^3-6t^2+4)/6)
    w2 = 1.0 - w0 - w1 - w3                   # -> basis index c-1      (partition of unity)
    zero = jnp.zeros_like(x)
    planes = []
    for j in range(NUM_BASES):
        bj = (jnp.where(c == float(j), w3, zero)
              + jnp.where(c == float(j + 1), w2, zero)
              + jnp.where(c == float(j + 2), w1, zero)
              + jnp.where(c == float(j + 3), w0, zero))
        planes.append(bj)
    return planes


def _kan_layer(x, w_ref):
    """One KANLinear as a single wide-K MXU matmul.

    x's lane width is always a multiple of 128 (activations are zero-padded via
    the weights), so the [silu(x) | B_0(x) .. B_7(x)] concat is lane-aligned:
    no cross-lane relayout, one matmul with K = 9 * In_padded.
    """
    silu_x = x * jax.nn.sigmoid(x)
    feats = [silu_x.astype(MXU_DTYPE)] + [p.astype(MXU_DTYPE) for p in _spline_planes(x)]
    f = jnp.concatenate(feats, axis=-1)
    return jnp.dot(f, w_ref[...], preferred_element_type=jnp.float32)


# ----------------------------------------------------------------------------
# Fused Pallas kernel: whole Kan13Block forward, intermediates never leave VMEM
# ----------------------------------------------------------------------------
def _kan13_fused_kernel(x_ref, w_eff_ref, b_eff_ref, kan1a_ref, kan1b_ref,
                        fc2_w_ref, fc2_b_ref, fc3_w_ref, fc3_b_ref,
                        kan3a_ref, kan3b_ref, o_ref):
    # prep1 (Conv1d k=1, no bias) + bn1 (eval) + fc1 : folded into one affine
    h = _dot(x_ref[...], w_eff_ref[...]) + b_eff_ref[...]      # (tb, 256)
    # KAN [256 -> 18 -> 128]  (outputs zero-padded to 128 lanes by the weights)
    h = _kan_layer(h, kan1a_ref)                                # (tb, 128); cols 18.. = 0
    h = _kan_layer(h, kan1b_ref)                                # (tb, 128)
    # relu -> dropout(eval=id) -> fc2 -> relu -> dropout(eval=id) -> fc3
    h = jnp.maximum(h, 0.0)
    h = _dot(h, fc2_w_ref[...]) + fc2_b_ref[...]                # (tb, 128); cols 64.. = 0
    h = jnp.maximum(h, 0.0)
    h = _dot(h, fc3_w_ref[...]) + fc3_b_ref[...]                # (tb, 128); cols 32.. = 0
    # KAN [32 -> 20 -> 16]
    h = _kan_layer(h, kan3a_ref)                                # (tb, 128); cols 20.. = 0
    h = _kan_layer(h, kan3b_ref)                                # (tb, 128); cols 16.. = 0
    o_ref[...] = h.astype(o_ref.dtype)                          # lane-dense store


def kan13_forward(x, p, *, batch_block=128):
    """x: (B, in_channel, 1) NCL (L must be 1 so fc1 sees the conv output directly)."""
    B = x.shape[0]
    xb = x[:, :, 0].astype(jnp.float32)                         # (B, in_c)
    in_c = xb.shape[1]

    # Batch tiling: weights stay VMEM-resident across tiles (constant index
    # maps); batch axis is "parallel".  At B=8 this is a single grid step.
    # TODO(synk): on v7x use pltpu.CORE_PARALLEL and pick tb so the grid has
    #             >=2 steps to engage both TensorCores.
    tb = batch_block if B > batch_block else max(8, -(-B // 8) * 8)
    bp = -(-B // tb) * tb
    if bp != B:
        xb = jnp.pad(xb, ((0, bp - B), (0, 0)))
    grid = (bp // tb,)

    weights = (p["w_eff"], p["b_eff"], p["kan1a_w"], p["kan1b_w"],
               p["fc2_w_pad"], p["fc2_b_pad"], p["fc3_w_pad"], p["fc3_b_pad"],
               p["kan3a_w"], p["kan3b_w"])
    mxu_ws = (p["w_eff"], p["kan1a_w"], p["kan1b_w"], p["fc2_w_pad"],
              p["fc3_w_pad"], p["kan3a_w"], p["kan3b_w"])

    def _resident(w):
        # Full-array block, constant index map -> DMA'd once, stays in VMEM.
        return pl.BlockSpec(w.shape, lambda i: (0,) * w.ndim)

    cost = pl.CostEstimate(
        flops=int(2 * bp * sum(int(w.shape[0]) * int(w.shape[1]) for w in mxu_ws)),
        transcendentals=int(bp * (256 + 3 * LANE)),     # one sigmoid per KAN input elem
        bytes_accessed=int(xb.size * 4 + bp * OUT_PAD * 4
                           + sum(int(w.size) * jnp.dtype(w.dtype).itemsize
                                 for w in weights)),
    )

    out = pl.pallas_call(
        _kan13_fused_kernel,
        out_shape=jax.ShapeDtypeStruct((bp, OUT_PAD), jnp.float32),
        grid=grid,
        in_specs=[pl.BlockSpec((tb, in_c), lambda i: (i, 0))]
                 + [_resident(w) for w in weights],
        out_specs=pl.BlockSpec((tb, OUT_PAD), lambda i: (i, 0)),
        compiler_params=pltpu.CompilerParams(
            dimension_semantics=("parallel",)),
        cost_estimate=cost,
    )(xb, *weights)
    return out[:B, :16]


# ----------------------------------------------------------------------------
# Parameter construction (deterministic, synthetic)
# ----------------------------------------------------------------------------
def _pad2(a, rows, cols):
    return jnp.pad(a, ((0, rows - a.shape[0]), (0, cols - a.shape[1])))


def make_kan_layer(key, in_dim, out_dim, pad_in, pad_out):
    k1, k2 = jax.random.split(key)
    wb = jax.random.normal(k1, (in_dim, out_dim), jnp.float32) / jnp.sqrt(float(in_dim))
    # spline weight with the standalone scaler folded in: ws[k, i, o]
    ws = 0.1 * jax.random.normal(k2, (NUM_BASES, in_dim, out_dim), jnp.float32) \
        / jnp.sqrt(float(in_dim))
    # single wide-K MXU weight: blocks [base ; spline_0..7], each block's rows
    # padded to pad_in (matches the 128-lane-aligned feature concat) and cols
    # padded to pad_out (keeps the next layer's activation lane-aligned).
    blocks = [wb] + [ws[k] for k in range(NUM_BASES)]
    w_cat = jnp.concatenate([_pad2(b, pad_in, pad_out) for b in blocks], axis=0)
    return {"wb": wb, "ws": ws, "w_cat": w_cat.astype(MXU_DTYPE)}


def init_params(key, in_channel):
    ks = jax.random.split(key, 12)
    p = {}
    # ----- native (un-folded) parameters, used by the pure-JAX reference -----
    p["prep_w"] = jax.random.normal(ks[0], (in_channel, 512), jnp.float32) \
        / jnp.sqrt(float(in_channel))
    gamma = 0.5 + jax.random.uniform(ks[1], (512,), jnp.float32)
    beta = 0.1 * jax.random.normal(ks[2], (512,), jnp.float32)
    rmean = 0.1 * jax.random.normal(ks[3], (512,), jnp.float32)
    rvar = 0.5 + jax.random.uniform(ks[4], (512,), jnp.float32)
    bn_scale = gamma / jnp.sqrt(rvar + BN_EPS)
    p["bn_scale"] = bn_scale
    p["bn_shift"] = beta - rmean * bn_scale
    p["fc1_w"] = jax.random.normal(ks[5], (512, 256), jnp.float32) / jnp.sqrt(512.0)
    p["fc1_b"] = 0.01 * jax.random.normal(ks[6], (256,), jnp.float32)
    p["fc2_w"] = jax.random.normal(ks[7], (128, 64), jnp.float32) / jnp.sqrt(128.0)
    p["fc2_b"] = 0.01 * jax.random.normal(ks[8], (64,), jnp.float32)
    p["fc3_w"] = jax.random.normal(ks[9], (64, 32), jnp.float32) / jnp.sqrt(64.0)
    p["fc3_b"] = 0.01 * jax.random.normal(ks[10], (32,), jnp.float32)
    kk = jax.random.split(ks[11], 4)
    p["kan1_l1"] = make_kan_layer(kk[0], 256, 18, 256, LANE)
    p["kan1_l2"] = make_kan_layer(kk[1], 18, 128, LANE, LANE)
    p["kan3_l1"] = make_kan_layer(kk[2], 32, 20, LANE, LANE)
    p["kan3_l2"] = make_kan_layer(kk[3], 20, 16, LANE, OUT_PAD)

    # ----- kernel-ready parameters (folded / zero-padded / MXU dtype) -----
    # prep1 (Conv1d k=1, no bias) + eval-mode BN + fc1 compose into one affine:
    #   W_eff = prep_w @ diag(bn_scale) @ fc1_w ,  b_eff = bn_shift @ fc1_w + fc1_b
    # computed in f32, then cast (exact eval-mode algebra, no compounded rounding).
    w_eff = (p["prep_w"] * bn_scale[None, :]) @ p["fc1_w"]
    b_eff = p["bn_shift"][None, :] @ p["fc1_w"] + p["fc1_b"][None, :]
    p["w_eff"] = w_eff.astype(MXU_DTYPE)                       # (in_channel, 256)
    p["b_eff"] = b_eff                                         # (1, 256) f32
    p["kan1a_w"] = p["kan1_l1"]["w_cat"]                       # (9*256, 128)
    p["kan1b_w"] = p["kan1_l2"]["w_cat"]                       # (9*128, 128)
    p["kan3a_w"] = p["kan3_l1"]["w_cat"]                       # (9*128, 128)
    p["kan3b_w"] = p["kan3_l2"]["w_cat"]                       # (9*128, 128)
    # fc weights/biases zero-padded to 128 lanes so every activation (and the
    # KAN feature concats that consume them) stays 128-lane aligned; padded
    # rows/cols are exact zeros so results are unchanged.
    p["fc2_w_pad"] = _pad2(p["fc2_w"], LANE, LANE).astype(MXU_DTYPE)
    p["fc2_b_pad"] = _pad2(p["fc2_b"][None, :], 1, LANE)
    p["fc3_w_pad"] = _pad2(p["fc3_w"], LANE, LANE).astype(MXU_DTYPE)
    p["fc3_b_pad"] = _pad2(p["fc3_b"][None, :], 1, LANE)
    return p


# ----------------------------------------------------------------------------
# Pure-JAX reference (independent code path: un-folded params, 3-D grid-tensor
# Cox-de Boor recursion)
# ----------------------------------------------------------------------------
def _kan_linear_ref(x, wb, ws):
    in_dim = x.shape[1]
    base_grid = jnp.asarray(KNOTS, jnp.float32)
    g = jnp.tile(base_grid[:, None], (1, in_dim))[None, :, :]      # (1, GRID_LEN, In)
    xe = x[:, None, :]
    bases = jnp.logical_and(xe >= g[:, :-1, :], xe < g[:, 1:, :]).astype(jnp.float32)
    for k in range(1, SPLINE_ORDER + 1):
        bases = ((xe - g[:, :-(k + 1), :]) / (g[:, k:-1, :] - g[:, :-(k + 1), :])
                 * bases[:, :-1, :]
                 + (g[:, k + 1:, :] - xe) / (g[:, k + 1:, :] - g[:, 1:-k, :])
                 * bases[:, 1:, :])
    return (x * jax.nn.sigmoid(x)) @ wb + jnp.einsum("bki,kio->bo", bases, ws)


def kan13_forward_ref(x, p):
    xb = x[:, :, 0].astype(jnp.float32)
    h = xb @ p["prep_w"]
    h = h * p["bn_scale"][None, :] + p["bn_shift"][None, :]
    h = h @ p["fc1_w"] + p["fc1_b"][None, :]
    h = _kan_linear_ref(h, p["kan1_l1"]["wb"], p["kan1_l1"]["ws"])
    h = _kan_linear_ref(h, p["kan1_l2"]["wb"], p["kan1_l2"]["ws"])
    h = jnp.maximum(h, 0.0)                      # relu ; dropout(eval) = id
    h = h @ p["fc2_w"] + p["fc2_b"][None, :]
    h = jnp.maximum(h, 0.0)                      # relu ; dropout(eval) = id
    h = h @ p["fc3_w"] + p["fc3_b"][None, :]
    h = _kan_linear_ref(h, p["kan3_l1"]["wb"], p["kan3_l1"]["ws"])
    h = _kan_linear_ref(h, p["kan3_l2"]["wb"], p["kan3_l2"]["ws"])
    return h


# TODO(synk): train-mode Dropout(0.5) masking and BatchNorm1d batch-statistics
#             updates are not modeled; eval-mode semantics are implemented.

if __name__ == "__main__":
    key = jax.random.PRNGKey(0)
    kx, kp = jax.random.split(key)

    B, IN_CHANNEL = 8, 4                       # small shapes; L must be 1 (see layout note)
    x = jax.random.normal(kx, (B, IN_CHANNEL, 1), jnp.float32)
    params = init_params(kp, IN_CHANNEL)

    out = kan13_forward(x, params)
    out = jax.block_until_ready(out)

    ref = kan13_forward_ref(x, params)
    assert out.shape == (B, 16), out.shape
    assert bool(jnp.all(jnp.isfinite(out)))
    # 2e-2 tolerance: MXU operands (weights + activations) are bf16 at each of
    # the 7 matmuls; spline/BN/bias math stays f32, so the residual is pure
    # bf16 operand rounding accumulated through the layer stack.
    assert bool(jnp.allclose(out, ref, rtol=2e-2, atol=2e-2)), (
        float(jnp.max(jnp.abs(out - ref))))

    print("KERNEL_OK")
</pallas_src>

<mosaic_0001>
module attributes {stable_mosaic.version = 11 : i64} {
  func.func @_kan13_fused_kernel(%arg0: i32, %arg1: memref<8x4xf32, #tpu.memory_space<vmem>>, %arg2: memref<4x256xbf16, #tpu.memory_space<vmem>>, %arg3: memref<1x256xf32, #tpu.memory_space<vmem>>, %arg4: memref<2304x128xbf16, #tpu.memory_space<vmem>>, %arg5: memref<1152x128xbf16, #tpu.memory_space<vmem>>, %arg6: memref<128x128xbf16, #tpu.memory_space<vmem>>, %arg7: memref<1x128xf32, #tpu.memory_space<vmem>>, %arg8: memref<128x128xbf16, #tpu.memory_space<vmem>>, %arg9: memref<1x128xf32, #tpu.memory_space<vmem>>, %arg10: memref<1152x128xbf16, #tpu.memory_space<vmem>>, %arg11: memref<1152x128xbf16, #tpu.memory_space<vmem>>, %arg12: memref<8x128xf32, #tpu.memory_space<vmem>>) attributes {dimension_semantics = [#tpu.dimension_semantics<parallel>], iteration_bounds = array<i64: 1>, scalar_prefetch = 0 : i64, scratch_operands = 0 : i64, tpu.core_type = #tpu.core_type<tc>, window_params = [{transform_indices = @transform_0, window_bounds = array<i64: 8, 4>}, {pipeline_mode = #tpu.pipeline_mode<synchronous>, transform_indices = @transform_1, window_bounds = array<i64: 4, 256>}, {pipeline_mode = #tpu.pipeline_mode<synchronous>, transform_indices = @transform_2, window_bounds = array<i64: 1, 256>}, {pipeline_mode = #tpu.pipeline_mode<synchronous>, transform_indices = @transform_3, window_bounds = array<i64: 2304, 128>}, {pipeline_mode = #tpu.pipeline_mode<synchronous>, transform_indices = @transform_4, window_bounds = array<i64: 1152, 128>}, {pipeline_mode = #tpu.pipeline_mode<synchronous>, transform_indices = @transform_5, window_bounds = array<i64: 128, 128>}, {pipeline_mode = #tpu.pipeline_mode<synchronous>, transform_indices = @transform_6, window_bounds = array<i64: 1, 128>}, {pipeline_mode = #tpu.pipeline_mode<synchronous>, transform_indices = @transform_7, window_bounds = array<i64: 128, 128>}, {pipeline_mode = #tpu.pipeline_mode<synchronous>, transform_indices = @transform_8, window_bounds = array<i64: 1, 128>}, {pipeline_mode = #tpu.pipeline_mode<synchronous>, transform_indices = @transform_9, window_bounds = array<i64: 1152, 128>}, {pipeline_mode = #tpu.pipeline_mode<synchronous>, transform_indices = @transform_10, window_bounds = array<i64: 1152, 128>}, {transform_indices = @transform_11, window_bounds = array<i64: 8, 128>}]} {
    %c0 = arith.constant 0 : index
    %c0_0 = arith.constant 0 : index
    %0 = vector.load %arg1[%c0, %c0_0] : memref<8x4xf32, #tpu.memory_space<vmem>>, vector<8x4xf32>
    %c0_1 = arith.constant 0 : index
    %c0_2 = arith.constant 0 : index
    %1 = vector.load %arg2[%c0_1, %c0_2] : memref<4x256xbf16, #tpu.memory_space<vmem>>, vector<4x256xbf16>
    %2 = arith.truncf %0 : vector<8x4xf32> to vector<8x4xbf16>
    %cst = arith.constant dense<0.000000e+00> : vector<8x256xf32>
    %3 = tpu.matmul %2, %1, %cst {dimension_numbers = #tpu.dot_dimension_numbers<[1], [0], [0], [1], [0, 0, 1, 1], [], []>} : vector<8x4xbf16>, vector<4x256xbf16>, vector<8x256xf32> -> vector<8x256xf32>
    %c0_3 = arith.constant 0 : index
    %c0_4 = arith.constant 0 : index
    %4 = vector.load %arg3[%c0_3, %c0_4] : memref<1x256xf32, #tpu.memory_space<vmem>>, vector<1x256xf32>
    %5 = vector.broadcast %4 : vector<1x256xf32> to vector<8x256xf32>
    %6 = arith.addf %3, %5 : vector<8x256xf32>
    %7 = arith.negf %6 : vector<8x256xf32>
    %8 = math.exp %7 : vector<8x256xf32>
    %cst_5 = arith.constant 1.000000e+00 : f32
    %9 = vector.broadcast %cst_5 : f32 to vector<8x256xf32>
    %10 = arith.addf %9, %8 : vector<8x256xf32>
    %11 = arith.divf %9, %10 : vector<8x256xf32>
    %12 = arith.mulf %6, %11 : vector<8x256xf32>
    %13 = arith.truncf %12 : vector<8x256xf32> to vector<8x256xbf16>
    %cst_6 = arith.constant -2.200000e+00 : f32
    %14 = vector.broadcast %cst_6 : f32 to vector<8x256xf32>
    %15 = arith.subf %6, %14 : vector<8x256xf32>
    %cst_7 = arith.constant 2.500000e+00 : f32
    %16 = vector.broadcast %cst_7 : f32 to vector<8x256xf32>
    %17 = arith.mulf %15, %16 : vector<8x256xf32>
    %18 = math.floor %17 : vector<8x256xf32>
    %19 = arith.subf %17, %18 : vector<8x256xf32>
    %20 = arith.mulf %19, %19 : vector<8x256xf32>
    %21 = arith.mulf %20, %19 : vector<8x256xf32>
    %cst_8 = arith.constant 0.166666672 : f32
    %22 = vector.broadcast %cst_8 : f32 to vector<8x256xf32>
    %23 = arith.mulf %21, %22 : vector<8x256xf32>
    %24 = arith.subf %20, %19 : vector<8x256xf32>
    %cst_9 = arith.constant 5.000000e-01 : f32
    %25 = vector.broadcast %cst_9 : f32 to vector<8x256xf32>
    %26 = arith.mulf %25, %24 : vector<8x256xf32>
    %cst_10 = arith.constant 0.166666672 : f32
    %27 = vector.broadcast %cst_10 : f32 to vector<8x256xf32>
    %28 = arith.addf %27, %26 : vector<8x256xf32>
    %29 = arith.subf %28, %23 : vector<8x256xf32>
    %cst_11 = arith.constant 0.666666686 : f32
    %30 = vector.broadcast %cst_11 : f32 to vector<8x256xf32>
    %31 = arith.subf %30, %20 : vector<8x256xf32>
    %cst_12 = arith.constant 5.000000e-01 : f32
    %32 = vector.broadcast %cst_12 : f32 to vector<8x256xf32>
    %33 = arith.mulf %32, %21 : vector<8x256xf32>
    %34 = arith.addf %31, %33 : vector<8x256xf32>
    %cst_13 = arith.constant 1.000000e+00 : f32
    %35 = vector.broadcast %cst_13 : f32 to vector<8x256xf32>
    %36 = arith.subf %35, %29 : vector<8x256xf32>
    %37 = arith.subf %36, %34 : vector<8x256xf32>
    %38 = arith.subf %37, %23 : vector<8x256xf32>
    %cst_14 = arith.constant 0.000000e+00 : f32
    %39 = vector.broadcast %cst_14 : f32 to vector<8x256xf32>
    %cst_15 = arith.constant 0.000000e+00 : f32
    %40 = vector.broadcast %cst_15 : f32 to vector<8x256xf32>
    %41 = arith.cmpf oeq, %18, %40 : vector<8x256xf32>
    %42 = arith.select %41, %23, %39 : vector<8x256xi1>, vector<8x256xf32>
    %cst_16 = arith.constant 1.000000e+00 : f32
    %43 = vector.broadcast %cst_16 : f32 to vector<8x256xf32>
    %44 = arith.cmpf oeq, %18, %43 : vector<8x256xf32>
    %45 = arith.select %44, %38, %39 : vector<8x256xi1>, vector<8x256xf32>
    %46 = arith.addf %42, %45 : vector<8x256xf32>
    %cst_17 = arith.constant 2.000000e+00 : f32
    %47 = vector.broadcast %cst_17 : f32 to vector<8x256xf32>
    %48 = arith.cmpf oeq, %18, %47 : vector<8x256xf32>
    %49 = arith.select %48, %34, %39 : vector<8x256xi1>, vector<8x256xf32>
    %50 = arith.addf %46, %49 : vector<8x256xf32>
    %cst_18 = arith.constant 3.000000e+00 : f32
    %51 = vector.broadcast %cst_18 : f32 to vector<8x256xf32>
    %52 = arith.cmpf oeq, %18, %51 : vector<8x256xf32>
    %53 = arith.select %52, %29, %39 : vector<8x256xi1>, vector<8x256xf32>
    %54 = arith.addf %50, %53 : vector<8x256xf32>
    %cst_19 = arith.constant 1.000000e+00 : f32
    %55 = vector.broadcast %cst_19 : f32 to vector<8x256xf32>
    %56 = arith.cmpf oeq, %18, %55 : vector<8x256xf32>
    %57 = arith.select %56, %23, %39 : vector<8x256xi1>, vector<8x256xf32>
    %cst_20 = arith.constant 2.000000e+00 : f32
    %58 = vector.broadcast %cst_20 : f32 to vector<8x256xf32>
    %59 = arith.cmpf oeq, %18, %58 : vector<8x256xf32>
    %60 = arith.select %59, %38, %39 : vector<8x256xi1>, vector<8x256xf32>
    %61 = arith.addf %57, %60 : vector<8x256xf32>
    %cst_21 = arith.constant 3.000000e+00 : f32
    %62 = vector.broadcast %cst_21 : f32 to vector<8x256xf32>
    %63 = arith.cmpf oeq, %18, %62 : vector<8x256xf32>
    %64 = arith.select %63, %34, %39 : vector<8x256xi1>, vector<8x256xf32>
    %65 = arith.addf %61, %64 : vector<8x256xf32>
    %cst_22 = arith.constant 4.000000e+00 : f32
    %66 = vector.broadcast %cst_22 : f32 to vector<8x256xf32>
    %67 = arith.cmpf oeq, %18, %66 : vector<8x256xf32>
    %68 = arith.select %67, %29, %39 : vector<8x256xi1>, vector<8x256xf32>
    %69 = arith.addf %65, %68 : vector<8x256xf32>
    %cst_23 = arith.constant 2.000000e+00 : f32
    %70 = vector.broadcast %cst_23 : f32 to vector<8x256xf32>
    %71 = arith.cmpf oeq, %18, %70 : vector<8x256xf32>
    %72 = arith.select %71, %23, %39 : vector<8x256xi1>, vector<8x256xf32>
    %cst_24 = arith.constant 3.000000e+00 : f32
    %73 = vector.broadcast %cst_24 : f32 to vector<8x256xf32>
    %74 = arith.cmpf oeq, %18, %73 : vector<8x256xf32>
    %75 = arith.select %74, %38, %39 : vector<8x256xi1>, vector<8x256xf32>
    %76 = arith.addf %72, %75 : vector<8x256xf32>
    %cst_25 = arith.constant 4.000000e+00 : f32
    %77 = vector.broadcast %cst_25 : f32 to vector<8x256xf32>
    %78 = arith.cmpf oeq, %18, %77 : vector<8x256xf32>
    %79 = arith.select %78, %34, %39 : vector<8x256xi1>, vector<8x256xf32>
    %80 = arith.addf %76, %79 : vector<8x256xf32>
    %cst_26 = arith.constant 5.000000e+00 : f32
    %81 = vector.broadcast %cst_26 : f32 to vector<8x256xf32>
    %82 = arith.cmpf oeq, %18, %81 : vector<8x256xf32>
    %83 = arith.select %82, %29, %39 : vector<8x256xi1>, vector<8x256xf32>
    %84 = arith.addf %80, %83 : vector<8x256xf32>
    %cst_27 = arith.constant 3.000000e+00 : f32
    %85 = vector.broadcast %cst_27 : f32 to vector<8x256xf32>
    %86 = arith.cmpf oeq, %18, %85 : vector<8x256xf32>
    %87 = arith.select %86, %23, %39 : vector<8x256xi1>, vector<8x256xf32>
    %cst_28 = arith.constant 4.000000e+00 : f32
    %88 = vector.broadcast %cst_28 : f32 to vector<8x256xf32>
    %89 = arith.cmpf oeq, %18, %88 : vector<8x256xf32>
    %90 = arith.select %89, %38, %39 : vector<8x256xi1>, vector<8x256xf32>
    %91 = arith.addf %87, %90 : vector<8x256xf32>
    %cst_29 = arith.constant 5.000000e+00 : f32
    %92 = vector.broadcast %cst_29 : f32 to vector<8x256xf32>
    %93 = arith.cmpf oeq, %18, %92 : vector<8x256xf32>
    %94 = arith.select %93, %34, %39 : vector<8x256xi1>, vector<8x256xf32>
    %95 = arith.addf %91, %94 : vector<8x256xf32>
    %cst_30 = arith.constant 6.000000e+00 : f32
    %96 = vector.broadcast %cst_30 : f32 to vector<8x256xf32>
    %97 = arith.cmpf oeq, %18, %96 : vector<8x256xf32>
    %98 = arith.select %97, %29, %39 : vector<8x256xi1>, vector<8x256xf32>
    %99 = arith.addf %95, %98 : vector<8x256xf32>
    %cst_31 = arith.constant 4.000000e+00 : f32
    %100 = vector.broadcast %cst_31 : f32 to vector<8x256xf32>
    %101 = arith.cmpf oeq, %18, %100 : vector<8x256xf32>
    %102 = arith.select %101, %23, %39 : vector<8x256xi1>, vector<8x256xf32>
    %cst_32 = arith.constant 5.000000e+00 : f32
    %103 = vector.broadcast %cst_32 : f32 to vector<8x256xf32>
    %104 = arith.cmpf oeq, %18, %103 : vector<8x256xf32>
    %105 = arith.select %104, %38, %39 : vector<8x256xi1>, vector<8x256xf32>
    %106 = arith.addf %102, %105 : vector<8x256xf32>
    %cst_33 = arith.constant 6.000000e+00 : f32
    %107 = vector.broadcast %cst_33 : f32 to vector<8x256xf32>
    %108 = arith.cmpf oeq, %18, %107 : vector<8x256xf32>
    %109 = arith.select %108, %34, %39 : vector<8x256xi1>, vector<8x256xf32>
    %110 = arith.addf %106, %109 : vector<8x256xf32>
    %cst_34 = arith.constant 7.000000e+00 : f32
    %111 = vector.broadcast %cst_34 : f32 to vector<8x256xf32>
    %112 = arith.cmpf oeq, %18, %111 : vector<8x256xf32>
    %113 = arith.select %112, %29, %39 : vector<8x256xi1>, vector<8x256xf32>
    %114 = arith.addf %110, %113 : vector<8x256xf32>
    %cst_35 = arith.constant 5.000000e+00 : f32
    %115 = vector.broadcast %cst_35 : f32 to vector<8x256xf32>
    %116 = arith.cmpf oeq, %18, %115 : vector<8x256xf32>
    %117 = arith.select %116, %23, %39 : vector<8x256xi1>, vector<8x256xf32>
    %cst_36 = arith.constant 6.000000e+00 : f32
    %118 = vector.broadcast %cst_36 : f32 to vector<8x256xf32>
    %119 = arith.cmpf oeq, %18, %118 : vector<8x256xf32>
    %120 = arith.select %119, %38, %39 : vector<8x256xi1>, vector<8x256xf32>
    %121 = arith.addf %117, %120 : vector<8x256xf32>
    %cst_37 = arith.constant 7.000000e+00 : f32
    %122 = vector.broadcast %cst_37 : f32 to vector<8x256xf32>
    %123 = arith.cmpf oeq, %18, %122 : vector<8x256xf32>
    %124 = arith.select %123, %34, %39 : vector<8x256xi1>, vector<8x256xf32>
    %125 = arith.addf %121, %124 : vector<8x256xf32>
    %cst_38 = arith.constant 8.000000e+00 : f32
    %126 = vector.broadcast %cst_38 : f32 to vector<8x256xf32>
    %127 = arith.cmpf oeq, %18, %126 : vector<8x256xf32>
    %128 = arith.select %127, %29, %39 : vector<8x256xi1>, vector<8x256xf32>
    %129 = arith.addf %125, %128 : vector<8x256xf32>
    %cst_39 = arith.constant 6.000000e+00 : f32
    %130 = vector.broadcast %cst_39 : f32 to vector<8x256xf32>
    %131 = arith.cmpf oeq, %18, %130 : vector<8x256xf32>
    %132 = arith.select %131, %23, %39 : vector<8x256xi1>, vector<8x256xf32>
    %cst_40 = arith.constant 7.000000e+00 : f32
    %133 = vector.broadcast %cst_40 : f32 to vector<8x256xf32>
    %134 = arith.cmpf oeq, %18, %133 : vector<8x256xf32>
    %135 = arith.select %134, %38, %39 : vector<8x256xi1>, vector<8x256xf32>
    %136 = arith.addf %132, %135 : vector<8x256xf32>
    %cst_41 = arith.constant 8.000000e+00 : f32
    %137 = vector.broadcast %cst_41 : f32 to vector<8x256xf32>
    %138 = arith.cmpf oeq, %18, %137 : vector<8x256xf32>
    %139 = arith.select %138, %34, %39 : vector<8x256xi1>, vector<8x256xf32>
    %140 = arith.addf %136, %139 : vector<8x256xf32>
    %cst_42 = arith.constant 9.000000e+00 : f32
    %141 = vector.broadcast %cst_42 : f32 to vector<8x256xf32>
    %142 = arith.cmpf oeq, %18, %141 : vector<8x256xf32>
    %143 = arith.select %142, %29, %39 : vector<8x256xi1>, vector<8x256xf32>
    %144 = arith.addf %140, %143 : vector<8x256xf32>
    %cst_43 = arith.constant 7.000000e+00 : f32
    %145 = vector.broadcast %cst_43 : f32 to vector<8x256xf32>
    %146 = arith.cmpf oeq, %18, %145 : vector<8x256xf32>
    %147 = arith.select %146, %23, %39 : vector<8x256xi1>, vector<8x256xf32>
    %cst_44 = arith.constant 8.000000e+00 : f32
    %148 = vector.broadcast %cst_44 : f32 to vector<8x256xf32>
    %149 = arith.cmpf oeq, %18, %148 : vector<8x256xf32>
    %150 = arith.select %149, %38, %39 : vector<8x256xi1>, vector<8x256xf32>
    %151 = arith.addf %147, %150 : vector<8x256xf32>
    %cst_45 = arith.constant 9.000000e+00 : f32
    %152 = vector.broadcast %cst_45 : f32 to vector<8x256xf32>
    %153 = arith.cmpf oeq, %18, %152 : vector<8x256xf32>
    %154 = arith.select %153, %34, %39 : vector<8x256xi1>, vector<8x256xf32>
    %155 = arith.addf %151, %154 : vector<8x256xf32>
    %cst_46 = arith.constant 1.000000e+01 : f32
    %156 = vector.broadcast %cst_46 : f32 to vector<8x256xf32>
    %157 = arith.cmpf oeq, %18, %156 : vector<8x256xf32>
    %158 = arith.select %157, %29, %39 : vector<8x256xi1>, vector<8x256xf32>
    %159 = arith.addf %155, %158 : vector<8x256xf32>
    %160 = arith.truncf %54 : vector<8x256xf32> to vector<8x256xbf16>
    %161 = arith.truncf %69 : vector<8x256xf32> to vector<8x256xbf16>
    %162 = arith.truncf %84 : vector<8x256xf32> to vector<8x256xbf16>
    %163 = arith.truncf %99 : vector<8x256xf32> to vector<8x256xbf16>
    %164 = arith.truncf %114 : vector<8x256xf32> to vector<8x256xbf16>
    %165 = arith.truncf %129 : vector<8x256xf32> to vector<8x256xbf16>
    %166 = arith.truncf %144 : vector<8x256xf32> to vector<8x256xbf16>
    %167 = arith.truncf %159 : vector<8x256xf32> to vector<8x256xbf16>
    %168 = tpu.concatenate %13, %160, %161, %162, %163, %164, %165, %166, %167 in 1 : vector<8x256xbf16>, vector<8x256xbf16>, vector<8x256xbf16>, vector<8x256xbf16>, vector<8x256xbf16>, vector<8x256xbf16>, vector<8x256xbf16>, vector<8x256xbf16>, vector<8x256xbf16> -> vector<8x2304xbf16>
    %c0_47 = arith.constant 0 : index
    %c0_48 = arith.constant 0 : index
    %169 = vector.load %arg4[%c0_47, %c0_48] : memref<2304x128xbf16, #tpu.memory_space<vmem>>, vector<2304x128xbf16>
    %cst_49 = arith.constant dense<0.000000e+00> : vector<8x128xf32>
    %170 = tpu.matmul %168, %169, %cst_49 {dimension_numbers = #tpu.dot_dimension_numbers<[1], [0], [0], [1], [0, 0, 1, 1], [], []>} : vector<8x2304xbf16>, vector<2304x128xbf16>, vector<8x128xf32> -> vector<8x128xf32>
    %171 = arith.negf %170 : vector<8x128xf32>
    %172 = math.exp %171 : vector<8x128xf32>
    %cst_50 = arith.constant 1.000000e+00 : f32
    %173 = vector.broadcast %cst_50 : f32 to vector<8x128xf32>
    %174 = arith.addf %173, %172 : vector<8x128xf32>
    %175 = arith.divf %173, %174 : vector<8x128xf32>
    %176 = arith.mulf %170, %175 : vector<8x128xf32>
    %177 = arith.truncf %176 : vector<8x128xf32> to vector<8x128xbf16>
    %cst_51 = arith.constant -2.200000e+00 : f32
    %178 = vector.broadcast %cst_51 : f32 to vector<8x128xf32>
    %179 = arith.subf %170, %178 : vector<8x128xf32>
    %cst_52 = arith.constant 2.500000e+00 : f32
    %180 = vector.broadcast %cst_52 : f32 to vector<8x128xf32>
    %181 = arith.mulf %179, %180 : vector<8x128xf32>
    %182 = math.floor %181 : vector<8x128xf32>
    %183 = arith.subf %181, %182 : vector<8x128xf32>
    %184 = arith.mulf %183, %183 : vector<8x128xf32>
    %185 = arith.mulf %184, %183 : vector<8x128xf32>
    %cst_53 = arith.constant 0.166666672 : f32
    %186 = vector.broadcast %cst_53 : f32 to vector<8x128xf32>
    %187 = arith.mulf %185, %186 : vector<8x128xf32>
    %188 = arith.subf %184, %183 : vector<8x128xf32>
    %cst_54 = arith.constant 5.000000e-01 : f32
    %189 = vector.broadcast %cst_54 : f32 to vector<8x128xf32>
    %190 = arith.mulf %189, %188 : vector<8x128xf32>
    %cst_55 = arith.constant 0.166666672 : f32
    %191 = vector.broadcast %cst_55 : f32 to vector<8x128xf32>
    %192 = arith.addf %191, %190 : vector<8x128xf32>
    %193 = arith.subf %192, %187 : vector<8x128xf32>
    %cst_56 = arith.constant 0.666666686 : f32
    %194 = vector.broadcast %cst_56 : f32 to vector<8x128xf32>
    %195 = arith.subf %194, %184 : vector<8x128xf32>
    %cst_57 = arith.constant 5.000000e-01 : f32
    %196 = vector.broadcast %cst_57 : f32 to vector<8x128xf32>
    %197 = arith.mulf %196, %185 : vector<8x128xf32>
    %198 = arith.addf %195, %197 : vector<8x128xf32>
    %cst_58 = arith.constant 1.000000e+00 : f32
    %199 = vector.broadcast %cst_58 : f32 to vector<8x128xf32>
    %200 = arith.subf %199, %193 : vector<8x128xf32>
    %201 = arith.subf %200, %198 : vector<8x128xf32>
    %202 = arith.subf %201, %187 : vector<8x128xf32>
    %cst_59 = arith.constant 0.000000e+00 : f32
    %203 = vector.broadcast %cst_59 : f32 to vector<8x128xf32>
    %cst_60 = arith.constant 0.000000e+00 : f32
    %204 = vector.broadcast %cst_60 : f32 to vector<8x128xf32>
    %205 = arith.cmpf oeq, %182, %204 : vector<8x128xf32>
    %206 = arith.select %205, %187, %203 : vector<8x128xi1>, vector<8x128xf32>
    %cst_61 = arith.constant 1.000000e+00 : f32
    %207 = vector.broadcast %cst_61 : f32 to vector<8x128xf32>
    %208 = arith.cmpf oeq, %182, %207 : vector<8x128xf32>
    %209 = arith.select %208, %202, %203 : vector<8x128xi1>, vector<8x128xf32>
    %210 = arith.addf %206, %209 : vector<8x128xf32>
    %cst_62 = arith.constant 2.000000e+00 : f32
    %211 = vector.broadcast %cst_62 : f32 to vector<8x128xf32>
    %212 = arith.cmpf oeq, %182, %211 : vector<8x128xf32>
    %213 = arith.select %212, %198, %203 : vector<8x128xi1>, vector<8x128xf32>
    %214 = arith.addf %210, %213 : vector<8x128xf32>
    %cst_63 = arith.constant 3.000000e+00 : f32
    %215 = vector.broadcast %cst_63 : f32 to vector<8x128xf32>
    %216 = arith.cmpf oeq, %182, %215 : vector<8x128xf32>
    %217 = arith.select %216, %193, %203 : vector<8x128xi1>, vector<8x128xf32>
    %218 = arith.addf %214, %217 : vector<8x128xf32>
    %cst_64 = arith.constant 1.000000e+00 : f32
    %219 = vector.broadcast %cst_64 : f32 to vector<8x128xf32>
    %220 = arith.cmpf oeq, %182, %219 : vector<8x128xf32>
    %221 = arith.select %220, %187, %203 : vector<8x128xi1>, vector<8x128xf32>
    %cst_65 = arith.constant 2.000000e+00 : f32
    %222 = vector.broadcast %cst_65 : f32 to vector<8x128xf32>
    %223 = arith.cmpf oeq, %182, %222 : vector<8x128xf32>
    %224 = arith.select %223, %202, %203 : vector<8x128xi1>, vector<8x128xf32>
    %225 = arith.addf %221, %224 : vector<8x128xf32>
    %cst_66 = arith.constant 3.000000e+00 : f32
    %226 = vector.broadcast %cst_66 : f32 to vector<8x128xf32>
    %227 = arith.cmpf oeq, %182, %226 : vector<8x128xf32>
    %228 = arith.select %227, %198, %203 : vector<8x128xi1>, vector<8x128xf32>
    %229 = arith.addf %225, %228 : vector<8x128xf32>
    %cst_67 = arith.constant 4.000000e+00 : f32
    %230 = vector.broadcast %cst_67 : f32 to vector<8x128xf32>
    %231 = arith.cmpf oeq, %182, %230 : vector<8x128xf32>
    %232 = arith.select %231, %193, %203 : vector<8x128xi1>, vector<8x128xf32>
    %233 = arith.addf %229, %232 : vector<8x128xf32>
    %cst_68 = arith.constant 2.000000e+00 : f32
    %234 = vector.broadcast %cst_68 : f32 to vector<8x128xf32>
    %235 = arith.cmpf oeq, %182, %234 : vector<8x128xf32>
    %236 = arith.select %235, %187, %203 : vector<8x128xi1>, vector<8x128xf32>
    %cst_69 = arith.constant 3.000000e+00 : f32
    %237 = vector.broadcast %cst_69 : f32 to vector<8x128xf32>
    %238 = arith.cmpf oeq, %182, %237 : vector<8x128xf32>
    %239 = arith.select %238, %202, %203 : vector<8x128xi1>, vector<8x128xf32>
    %240 = arith.addf %236, %239 : vector<8x128xf32>
    %cst_70 = arith.constant 4.000000e+00 : f32
    %241 = vector.broadcast %cst_70 : f32 to vector<8x128xf32>
    %242 = arith.cmpf oeq, %182, %241 : vector<8x128xf32>
    %243 = arith.select %242, %198, %203 : vector<8x128xi1>, vector<8x128xf32>
    %244 = arith.addf %240, %243 : vector<8x128xf32>
    %cst_71 = arith.constant 5.000000e+00 : f32
    %245 = vector.broadcast %cst_71 : f32 to vector<8x128xf32>
    %246 = arith.cmpf oeq, %182, %245 : vector<8x128xf32>
    %247 = arith.select %246, %193, %203 : vector<8x128xi1>, vector<8x128xf32>
    %248 = arith.addf %244, %247 : vector<8x128xf32>
    %cst_72 = arith.constant 3.000000e+00 : f32
    %249 = vector.broadcast %cst_72 : f32 to vector<8x128xf32>
    %250 = arith.cmpf oeq, %182, %249 : vector<8x128xf32>
    %251 = arith.select %250, %187, %203 : vector<8x128xi1>, vector<8x128xf32>
    %cst_73 = arith.constant 4.000000e+00 : f32
    %252 = vector.broadcast %cst_73 : f32 to vector<8x128xf32>
    %253 = arith.cmpf oeq, %182, %252 : vector<8x128xf32>
    %254 = arith.select %253, %202, %203 : vector<8x128xi1>, vector<8x128xf32>
    %255 = arith.addf %251, %254 : vector<8x128xf32>
    %cst_74 = arith.constant 5.000000e+00 : f32
    %256 = vector.broadcast %cst_74 : f32 to vector<8x128xf32>
    %257 = arith.cmpf oeq, %182, %256 : vector<8x128xf32>
    %258 = arith.select %257, %198, %203 : vector<8x128xi1>, vector<8x128xf32>
    %259 = arith.addf %255, %258 : vector<8x128xf32>
    %cst_75 = arith.constant 6.000000e+00 : f32
    %260 = vector.broadcast %cst_75 : f32 to vector<8x128xf32>
    %261 = arith.cmpf oeq, %182, %260 : vector<8x128xf32>
    %262 = arith.select %261, %193, %203 : vector<8x128xi1>, vector<8x128xf32>
    %263 = arith.addf %259, %262 : vector<8x128xf32>
    %cst_76 = arith.constant 4.000000e+00 : f32
    %264 = vector.broadcast %cst_76 : f32 to vector<8x128xf32>
    %265 = arith.cmpf oeq, %182, %264 : vector<8x128xf32>
    %266 = arith.select %265, %187, %203 : vector<8x128xi1>, vector<8x128xf32>
    %cst_77 = arith.constant 5.000000e+00 : f32
    %267 = vector.broadcast %cst_77 : f32 to vector<8x128xf32>
    %268 = arith.cmpf oeq, %182, %267 : vector<8x128xf32>
    %269 = arith.select %268, %202, %203 : vector<8x128xi1>, vector<8x128xf32>
    %270 = arith.addf %266, %269 : vector<8x128xf32>
    %cst_78 = arith.constant 6.000000e+00 : f32
    %271 = vector.broadcast %cst_78 : f32 to vector<8x128xf32>
    %272 = arith.cmpf oeq, %182, %271 : vector<8x128xf32>
    %273 = arith.select %272, %198, %203 : vector<8x128xi1>, vector<8x128xf32>
    %274 = arith.addf %270, %273 : vector<8x128xf32>
    %cst_79 = arith.constant 7.000000e+00 : f32
    %275 = vector.broadcast %cst_79 : f32 to vector<8x128xf32>
    %276 = arith.cmpf oeq, %182, %275 : vector<8x128xf32>
    %277 = arith.select %276, %193, %203 : vector<8x128xi1>, vector<8x128xf32>
    %278 = arith.addf %274, %277 : vector<8x128xf32>
    %cst_80 = arith.constant 5.000000e+00 : f32
    %279 = vector.broadcast %cst_80 : f32 to vector<8x128xf32>
    %280 = arith.cmpf oeq, %182, %279 : vector<8x128xf32>
    %281 = arith.select %280, %187, %203 : vector<8x128xi1>, vector<8x128xf32>
    %cst_81 = arith.constant 6.000000e+00 : f32
    %282 = vector.broadcast %cst_81 : f32 to vector<8x128xf32>
    %283 = arith.cmpf oeq, %182, %282 : vector<8x128xf32>
    %284 = arith.select %283, %202, %203 : vector<8x128xi1>, vector<8x128xf32>
    %285 = arith.addf %281, %284 : vector<8x128xf32>
    %cst_82 = arith.constant 7.000000e+00 : f32
    %286 = vector.broadcast %cst_82 : f32 to vector<8x128xf32>
    %287 = arith.cmpf oeq, %182, %286 : vector<8x128xf32>
    %288 = arith.select %287, %198, %203 : vector<8x128xi1>, vector<8x128xf32>
    %289 = arith.addf %285, %288 : vector<8x128xf32>
    %cst_83 = arith.constant 8.000000e+00 : f32
    %290 = vector.broadcast %cst_83 : f32 to vector<8x128xf32>
    %291 = arith.cmpf oeq, %182, %290 : vector<8x128xf32>
    %292 = arith.select %291, %193, %203 : vector<8x128xi1>, vector<8x128xf32>
    %293 = arith.addf %289, %292 : vector<8x128xf32>
    %cst_84 = arith.constant 6.000000e+00 : f32
    %294 = vector.broadcast %cst_84 : f32 to vector<8x128xf32>
    %295 = arith.cmpf oeq, %182, %294 : vector<8x128xf32>
    %296 = arith.select %295, %187, %203 : vector<8x128xi1>, vector<8x128xf32>
    %cst_85 = arith.constant 7.000000e+00 : f32
    %297 = vector.broadcast %cst_85 : f32 to vector<8x128xf32>
    %298 = arith.cmpf oeq, %182, %297 : vector<8x128xf32>
    %299 = arith.select %298, %202, %203 : vector<8x128xi1>, vector<8x128xf32>
    %300 = arith.addf %296, %299 : vector<8x128xf32>
    %cst_86 = arith.constant 8.000000e+00 : f32
    %301 = vector.broadcast %cst_86 : f32 to vector<8x128xf32>
    %302 = arith.cmpf oeq, %182, %301 : vector<8x128xf32>
    %303 = arith.select %302, %198, %203 : vector<8x128xi1>, vector<8x128xf32>
    %304 = arith.addf %300, %303 : vector<8x128xf32>
    %cst_87 = arith.constant 9.000000e+00 : f32
    %305 = vector.broadcast %cst_87 : f32 to vector<8x128xf32>
    %306 = arith.cmpf oeq, %182, %305 : vector<8x128xf32>
    %307 = arith.select %306, %193, %203 : vector<8x128xi1>, vector<8x128xf32>
    %308 = arith.addf %304, %307 : vector<8x128xf32>
    %cst_88 = arith.constant 7.000000e+00 : f32
    %309 = vector.broadcast %cst_88 : f32 to vector<8x128xf32>
    %310 = arith.cmpf oeq, %182, %309 : vector<8x128xf32>
    %311 = arith.select %310, %187, %203 : vector<8x128xi1>, vector<8x128xf32>
    %cst_89 = arith.constant 8.000000e+00 : f32
    %312 = vector.broadcast %cst_89 : f32 to vector<8x128xf32>
    %313 = arith.cmpf oeq, %182, %312 : vector<8x128xf32>
    %314 = arith.select %313, %202, %203 : vector<8x128xi1>, vector<8x128xf32>
    %315 = arith.addf %311, %314 : vector<8x128xf32>
    %cst_90 = arith.constant 9.000000e+00 : f32
    %316 = vector.broadcast %cst_90 : f32 to vector<8x128xf32>
    %317 = arith.cmpf oeq, %182, %316 : vector<8x128xf32>
    %318 = arith.select %317, %198, %203 : vector<8x128xi1>, vector<8x128xf32>
    %319 = arith.addf %315, %318 : vector<8x128xf32>
    %cst_91 = arith.constant 1.000000e+01 : f32
    %320 = vector.broadcast %cst_91 : f32 to vector<8x128xf32>
    %321 = arith.cmpf oeq, %182, %320 : vector<8x128xf32>
    %322 = arith.select %321, %193, %203 : vector<8x128xi1>, vector<8x128xf32>
    %323 = arith.addf %319, %322 : vector<8x128xf32>
    %324 = arith.truncf %218 : vector<8x128xf32> to vector<8x128xbf16>
    %325 = arith.truncf %233 : vector<8x128xf32> to vector<8x128xbf16>
    %326 = arith.truncf %248 : vector<8x128xf32> to vector<8x128xbf16>
    %327 = arith.truncf %263 : vector<8x128xf32> to vector<8x128xbf16>
    %328 = arith.truncf %278 : vector<8x128xf32> to vector<8x128xbf16>
    %329 = arith.truncf %293 : vector<8x128xf32> to vector<8x128xbf16>
    %330 = arith.truncf %308 : vector<8x128xf32> to vector<8x128xbf16>
    %331 = arith.truncf %323 : vector<8x128xf32> to vector<8x128xbf16>
    %332 = tpu.concatenate %177, %324, %325, %326, %327, %328, %329, %330, %331 in 1 : vector<8x128xbf16>, vector<8x128xbf16>, vector<8x128xbf16>, vector<8x128xbf16>, vector<8x128xbf16>, vector<8x128xbf16>, vector<8x128xbf16>, vector<8x128xbf16>, vector<8x128xbf16> -> vector<8x1152xbf16>
    %c0_92 = arith.constant 0 : index
    %c0_93 = arith.constant 0 : index
    %333 = vector.load %arg5[%c0_92, %c0_93] : memref<1152x128xbf16, #tpu.memory_space<vmem>>, vector<1152x128xbf16>
    %cst_94 = arith.constant dense<0.000000e+00> : vector<8x128xf32>
    %334 = tpu.matmul %332, %333, %cst_94 {dimension_numbers = #tpu.dot_dimension_numbers<[1], [0], [0], [1], [0, 0, 1, 1], [], []>} : vector<8x1152xbf16>, vector<1152x128xbf16>, vector<8x128xf32> -> vector<8x128xf32>
    %cst_95 = arith.constant 0.000000e+00 : f32
    %335 = vector.broadcast %cst_95 : f32 to vector<8x128xf32>
    %336 = arith.maximumf %334, %335 : vector<8x128xf32>
    %c0_96 = arith.constant 0 : index
    %c0_97 = arith.constant 0 : index
    %337 = vector.load %arg6[%c0_96, %c0_97] : memref<128x128xbf16, #tpu.memory_space<vmem>>, vector<128x128xbf16>
    %338 = arith.truncf %336 : vector<8x128xf32> to vector<8x128xbf16>
    %cst_98 = arith.constant dense<0.000000e+00> : vector<8x128xf32>
    %339 = tpu.matmul %338, %337, %cst_98 {dimension_numbers = #tpu.dot_dimension_numbers<[1], [0], [0], [1], [0, 0, 1, 1], [], []>} : vector<8x128xbf16>, vector<128x128xbf16>, vector<8x128xf32> -> vector<8x128xf32>
    %c0_99 = arith.constant 0 : index
    %c0_100 = arith.constant 0 : index
    %340 = vector.load %arg7[%c0_99, %c0_100] : memref<1x128xf32, #tpu.memory_space<vmem>>, vector<1x128xf32>
    %341 = vector.broadcast %340 : vector<1x128xf32> to vector<8x128xf32>
    %342 = arith.addf %339, %341 : vector<8x128xf32>
    %cst_101 = arith.constant 0.000000e+00 : f32
    %343 = vector.broadcast %cst_101 : f32 to vector<8x128xf32>
    %344 = arith.maximumf %342, %343 : vector<8x128xf32>
    %c0_102 = arith.constant 0 : index
    %c0_103 = arith.constant 0 : index
    %345 = vector.load %arg8[%c0_102, %c0_103] : memref<128x128xbf16, #tpu.memory_space<vmem>>, vector<128x128xbf16>
    %346 = arith.truncf %344 : vector<8x128xf32> to vector<8x128xbf16>
    %cst_104 = arith.constant dense<0.000000e+00> : vector<8x128xf32>
    %347 = tpu.matmul %346, %345, %cst_104 {dimension_numbers = #tpu.dot_dimension_numbers<[1], [0], [0], [1], [0, 0, 1, 1], [], []>} : vector<8x128xbf16>, vector<128x128xbf16>, vector<8x128xf32> -> vector<8x128xf32>
    %c0_105 = arith.constant 0 : index
    %c0_106 = arith.constant 0 : index
    %348 = vector.load %arg9[%c0_105, %c0_106] : memref<1x128xf32, #tpu.memory_space<vmem>>, vector<1x128xf32>
    %349 = vector.broadcast %348 : vector<1x128xf32> to vector<8x128xf32>
    %350 = arith.addf %347, %349 : vector<8x128xf32>
    %351 = arith.negf %350 : vector<8x128xf32>
    %352 = math.exp %351 : vector<8x128xf32>
    %cst_107 = arith.constant 1.000000e+00 : f32
    %353 = vector.broadcast %cst_107 : f32 to vector<8x128xf32>
    %354 = arith.addf %353, %352 : vector<8x128xf32>
    %355 = arith.divf %353, %354 : vector<8x128xf32>
    %356 = arith.mulf %350, %355 : vector<8x128xf32>
    %357 = arith.truncf %356 : vector<8x128xf32> to vector<8x128xbf16>
    %cst_108 = arith.constant -2.200000e+00 : f32
    %358 = vector.broadcast %cst_108 : f32 to vector<8x128xf32>
    %359 = arith.subf %350, %358 : vector<8x128xf32>
    %cst_109 = arith.constant 2.500000e+00 : f32
    %360 = vector.broadcast %cst_109 : f32 to vector<8x128xf32>
    %361 = arith.mulf %359, %360 : vector<8x128xf32>
    %362 = math.floor %361 : vector<8x128xf32>
    %363 = arith.subf %361, %362 : vector<8x128xf32>
    %364 = arith.mulf %363, %363 : vector<8x128xf32>
    %365 = arith.mulf %364, %363 : vector<8x128xf32>
    %cst_110 = arith.constant 0.166666672 : f32
    %366 = vector.broadcast %cst_110 : f32 to vector<8x128xf32>
    %367 = arith.mulf %365, %366 : vector<8x128xf32>
    %368 = arith.subf %364, %363 : vector<8x128xf32>
    %cst_111 = arith.constant 5.000000e-01 : f32
    %369 = vector.broadcast %cst_111 : f32 to vector<8x128xf32>
    %370 = arith.mulf %369, %368 : vector<8x128xf32>
    %cst_112 = arith.constant 0.166666672 : f32
    %371 = vector.broadcast %cst_112 : f32 to vector<8x128xf32>
    %372 = arith.addf %371, %370 : vector<8x128xf32>
    %373 = arith.subf %372, %367 : vector<8x128xf32>
    %cst_113 = arith.constant 0.666666686 : f32
    %374 = vector.broadcast %cst_113 : f32 to vector<8x128xf32>
    %375 = arith.subf %374, %364 : vector<8x128xf32>
    %cst_114 = arith.constant 5.000000e-01 : f32
    %376 = vector.broadcast %cst_114 : f32 to vector<8x128xf32>
    %377 = arith.mulf %376, %365 : vector<8x128xf32>
    %378 = arith.addf %375, %377 : vector<8x128xf32>
    %cst_115 = arith.constant 1.000000e+00 : f32
    %379 = vector.broadcast %cst_115 : f32 to vector<8x128xf32>
    %380 = arith.subf %379, %373 : vector<8x128xf32>
    %381 = arith.subf %380, %378 : vector<8x128xf32>
    %382 = arith.subf %381, %367 : vector<8x128xf32>
    %cst_116 = arith.constant 0.000000e+00 : f32
    %383 = vector.broadcast %cst_116 : f32 to vector<8x128xf32>
    %cst_117 = arith.constant 0.000000e+00 : f32
    %384 = vector.broadcast %cst_117 : f32 to vector<8x128xf32>
    %385 = arith.cmpf oeq, %362, %384 : vector<8x128xf32>
    %386 = arith.select %385, %367, %383 : vector<8x128xi1>, vector<8x128xf32>
    %cst_118 = arith.constant 1.000000e+00 : f32
    %387 = vector.broadcast %cst_118 : f32 to vector<8x128xf32>
    %388 = arith.cmpf oeq, %362, %387 : vector<8x128xf32>
    %389 = arith.select %388, %382, %383 : vector<8x128xi1>, vector<8x128xf32>
    %390 = arith.addf %386, %389 : vector<8x128xf32>
    %cst_119 = arith.constant 2.000000e+00 : f32
    %391 = vector.broadcast %cst_119 : f32 to vector<8x128xf32>
    %392 = arith.cmpf oeq, %362, %391 : vector<8x128xf32>
    %393 = arith.select %392, %378, %383 : vector<8x128xi1>, vector<8x128xf32>
    %394 = arith.addf %390, %393 : vector<8x128xf32>
    %cst_120 = arith.constant 3.000000e+00 : f32
    %395 = vector.broadcast %cst_120 : f32 to vector<8x128xf32>
    %396 = arith.cmpf oeq, %362, %395 : vector<8x128xf32>
    %397 = arith.select %396, %373, %383 : vector<8x128xi1>, vector<8x128xf32>
    %398 = arith.addf %394, %397 : vector<8x128xf32>
    %cst_121 = arith.constant 1.000000e+00 : f32
    %399 = vector.broadcast %cst_121 : f32 to vector<8x128xf32>
    %400 = arith.cmpf oeq, %362, %399 : vector<8x128xf32>
    %401 = arith.select %400, %367, %383 : vector<8x128xi1>, vector<8x128xf32>
    %cst_122 = arith.constant 2.000000e+00 : f32
    %402 = vector.broadcast %cst_122 : f32 to vector<8x128xf32>
    %403 = arith.cmpf oeq, %362, %402 : vector<8x128xf32>
    %404 = arith.select %403, %382, %383 : vector<8x128xi1>, vector<8x128xf32>
    %405 = arith.addf %401, %404 : vector<8x128xf32>
    %cst_123 = arith.constant 3.000000e+00 : f32
    %406 = vector.broadcast %cst_123 : f32 to vector<8x128xf32>
    %407 = arith.cmpf oeq, %362, %406 : vector<8x128xf32>
    %408 = arith.select %407, %378, %383 : vector<8x128xi1>, vector<8x128xf32>
    %409 = arith.addf %405, %408 : vector<8x128xf32>
    %cst_124 = arith.constant 4.000000e+00 : f32
    %410 = vector.broadcast %cst_124 : f32 to vector<8x128xf32>
    %411 = arith.cmpf oeq, %362, %410 : vector<8x128xf32>
    %412 = arith.select %411, %373, %383 : vector<8x128xi1>, vector<8x128xf32>
    %413 = arith.addf %409, %412 : vector<8x128xf32>
    %cst_125 = arith.constant 2.000000e+00 : f32
    %414 = vector.broadcast %cst_125 : f32 to vector<8x128xf32>
    %415 = arith.cmpf oeq, %362, %414 : vector<8x128xf32>
    %416 = arith.select %415, %367, %383 : vector<8x128xi1>, vector<8x128xf32>
    %cst_126 = arith.constant 3.000000e+00 : f32
    %417 = vector.broadcast %cst_126 : f32 to vector<8x128xf32>
    %418 = arith.cmpf oeq, %362, %417 : vector<8x128xf32>
    %419 = arith.select %418, %382, %383 : vector<8x128xi1>, vector<8x128xf32>
    %420 = arith.addf %416, %419 : vector<8x128xf32>
    %cst_127 = arith.constant 4.000000e+00 : f32
    %421 = vector.broadcast %cst_127 : f32 to vector<8x128xf32>
    %422 = arith.cmpf oeq, %362, %421 : vector<8x128xf32>
    %423 = arith.select %422, %378, %383 : vector<8x128xi1>, vector<8x128xf32>
    %424 = arith.addf %420, %423 : vector<8x128xf32>
    %cst_128 = arith.constant 5.000000e+00 : f32
    %425 = vector.broadcast %cst_128 : f32 to vector<8x128xf32>
    %426 = arith.cmpf oeq, %362, %425 : vector<8x128xf32>
    %427 = arith.select %426, %373, %383 : vector<8x128xi1>, vector<8x128xf32>
    %428 = arith.addf %424, %427 : vector<8x128xf32>
    %cst_129 = arith.constant 3.000000e+00 : f32
    %429 = vector.broadcast %cst_129 : f32 to vector<8x128xf32>
    %430 = arith.cmpf oeq, %362, %429 : vector<8x128xf32>
    %431 = arith.select %430, %367, %383 : vector<8x128xi1>, vector<8x128xf32>
    %cst_130 = arith.constant 4.000000e+00 : f32
    %432 = vector.broadcast %cst_130 : f32 to vector<8x128xf32>
    %433 = arith.cmpf oeq, %362, %432 : vector<8x128xf32>
    %434 = arith.select %433, %382, %383 : vector<8x128xi1>, vector<8x128xf32>
    %435 = arith.addf %431, %434 : vector<8x128xf32>
    %cst_131 = arith.constant 5.000000e+00 : f32
    %436 = vector.broadcast %cst_131 : f32 to vector<8x128xf32>
    %437 = arith.cmpf oeq, %362, %436 : vector<8x128xf32>
    %438 = arith.select %437, %378, %383 : vector<8x128xi1>, vector<8x128xf32>
    %439 = arith.addf %435, %438 : vector<8x128xf32>
    %cst_132 = arith.constant 6.000000e+00 : f32
    %440 = vector.broadcast %cst_132 : f32 to vector<8x128xf32>
    %441 = arith.cmpf oeq, %362, %440 : vector<8x128xf32>
    %442 = arith.select %441, %373, %383 : vector<8x128xi1>, vector<8x128xf32>
    %443 = arith.addf %439, %442 : vector<8x128xf32>
    %cst_133 = arith.constant 4.000000e+00 : f32
    %444 = vector.broadcast %cst_133 : f32 to vector<8x128xf32>
    %445 = arith.cmpf oeq, %362, %444 : vector<8x128xf32>
    %446 = arith.select %445, %367, %383 : vector<8x128xi1>, vector<8x128xf32>
    %cst_134 = arith.constant 5.000000e+00 : f32
    %447 = vector.broadcast %cst_134 : f32 to vector<8x128xf32>
    %448 = arith.cmpf oeq, %362, %447 : vector<8x128xf32>
    %449 = arith.select %448, %382, %383 : vector<8x128xi1>, vector<8x128xf32>
    %450 = arith.addf %446, %449 : vector<8x128xf32>
    %cst_135 = arith.constant 6.000000e+00 : f32
    %451 = vector.broadcast %cst_135 : f32 to vector<8x128xf32>
    %452 = arith.cmpf oeq, %362, %451 : vector<8x128xf32>
    %453 = arith.select %452, %378, %383 : vector<8x128xi1>, vector<8x128xf32>
    %454 = arith.addf %450, %453 : vector<8x128xf32>
    %cst_136 = arith.constant 7.000000e+00 : f32
    %455 = vector.broadcast %cst_136 : f32 to vector<8x128xf32>
    %456 = arith.cmpf oeq, %362, %455 : vector<8x128xf32>
    %457 = arith.select %456, %373, %383 : vector<8x128xi1>, vector<8x128xf32>
    %458 = arith.addf %454, %457 : vector<8x128xf32>
    %cst_137 = arith.constant 5.000000e+00 : f32
    %459 = vector.broadcast %cst_137 : f32 to vector<8x128xf32>
    %460 = arith.cmpf oeq, %362, %459 : vector<8x128xf32>
    %461 = arith.select %460, %367, %383 : vector<8x128xi1>, vector<8x128xf32>
    %cst_138 = arith.constant 6.000000e+00 : f32
    %462 = vector.broadcast %cst_138 : f32 to vector<8x128xf32>
    %463 = arith.cmpf oeq, %362, %462 : vector<8x128xf32>
    %464 = arith.select %463, %382, %383 : vector<8x128xi1>, vector<8x128xf32>
    %465 = arith.addf %461, %464 : vector<8x128xf32>
    %cst_139 = arith.constant 7.000000e+00 : f32
    %466 = vector.broadcast %cst_139 : f32 to vector<8x128xf32>
    %467 = arith.cmpf oeq, %362, %466 : vector<8x128xf32>
    %468 = arith.select %467, %378, %383 : vector<8x128xi1>, vector<8x128xf32>
    %469 = arith.addf %465, %468 : vector<8x128xf32>
    %cst_140 = arith.constant 8.000000e+00 : f32
    %470 = vector.broadcast %cst_140 : f32 to vector<8x128xf32>
    %471 = arith.cmpf oeq, %362, %470 : vector<8x128xf32>
    %472 = arith.select %471, %373, %383 : vector<8x128xi1>, vector<8x128xf32>
    %473 = arith.addf %469, %472 : vector<8x128xf32>
    %cst_141 = arith.constant 6.000000e+00 : f32
    %474 = vector.broadcast %cst_141 : f32 to vector<8x128xf32>
    %475 = arith.cmpf oeq, %362, %474 : vector<8x128xf32>
    %476 = arith.select %475, %367, %383 : vector<8x128xi1>, vector<8x128xf32>
    %cst_142 = arith.constant 7.000000e+00 : f32
    %477 = vector.broadcast %cst_142 : f32 to vector<8x128xf32>
    %478 = arith.cmpf oeq, %362, %477 : vector<8x128xf32>
    %479 = arith.select %478, %382, %383 : vector<8x128xi1>, vector<8x128xf32>
    %480 = arith.addf %476, %479 : vector<8x128xf32>
    %cst_143 = arith.constant 8.000000e+00 : f32
    %481 = vector.broadcast %cst_143 : f32 to vector<8x128xf32>
    %482 = arith.cmpf oeq, %362, %481 : vector<8x128xf32>
    %483 = arith.select %482, %378, %383 : vector<8x128xi1>, vector<8x128xf32>
    %484 = arith.addf %480, %483 : vector<8x128xf32>
    %cst_144 = arith.constant 9.000000e+00 : f32
    %485 = vector.broadcast %cst_144 : f32 to vector<8x128xf32>
    %486 = arith.cmpf oeq, %362, %485 : vector<8x128xf32>
    %487 = arith.select %486, %373, %383 : vector<8x128xi1>, vector<8x128xf32>
    %488 = arith.addf %484, %487 : vector<8x128xf32>
    %cst_145 = arith.constant 7.000000e+00 : f32
    %489 = vector.broadcast %cst_145 : f32 to vector<8x128xf32>
    %490 = arith.cmpf oeq, %362, %489 : vector<8x128xf32>
    %491 = arith.select %490, %367, %383 : vector<8x128xi1>, vector<8x128xf32>
    %cst_146 = arith.constant 8.000000e+00 : f32
    %492 = vector.broadcast %cst_146 : f32 to vector<8x128xf32>
    %493 = arith.cmpf oeq, %362, %492 : vector<8x128xf32>
    %494 = arith.select %493, %382, %383 : vector<8x128xi1>, vector<8x128xf32>
    %495 = arith.addf %491, %494 : vector<8x128xf32>
    %cst_147 = arith.constant 9.000000e+00 : f32
    %496 = vector.broadcast %cst_147 : f32 to vector<8x128xf32>
    %497 = arith.cmpf oeq, %362, %496 : vector<8x128xf32>
    %498 = arith.select %497, %378, %383 : vector<8x128xi1>, vector<8x128xf32>
    %499 = arith.addf %495, %498 : vector<8x128xf32>
    %cst_148 = arith.constant 1.000000e+01 : f32
    %500 = vector.broadcast %cst_148 : f32 to vector<8x128xf32>
    %501 = arith.cmpf oeq, %362, %500 : vector<8x128xf32>
    %502 = arith.select %501, %373, %383 : vector<8x128xi1>, vector<8x128xf32>
    %503 = arith.addf %499, %502 : vector<8x128xf32>
    %504 = arith.truncf %398 : vector<8x128xf32> to vector<8x128xbf16>
    %505 = arith.truncf %413 : vector<8x128xf32> to vector<8x128xbf16>
    %506 = arith.truncf %428 : vector<8x128xf32> to vector<8x128xbf16>
    %507 = arith.truncf %443 : vector<8x128xf32> to vector<8x128xbf16>
    %508 = arith.truncf %458 : vector<8x128xf32> to vector<8x128xbf16>
    %509 = arith.truncf %473 : vector<8x128xf32> to vector<8x128xbf16>
    %510 = arith.truncf %488 : vector<8x128xf32> to vector<8x128xbf16>
    %511 = arith.truncf %503 : vector<8x128xf32> to vector<8x128xbf16>
    %512 = tpu.concatenate %357, %504, %505, %506, %507, %508, %509, %510, %511 in 1 : vector<8x128xbf16>, vector<8x128xbf16>, vector<8x128xbf16>, vector<8x128xbf16>, vector<8x128xbf16>, vector<8x128xbf16>, vector<8x128xbf16>, vector<8x128xbf16>, vector<8x128xbf16> -> vector<8x1152xbf16>
    %c0_149 = arith.constant 0 : index
    %c0_150 = arith.constant 0 : index
    %513 = vector.load %arg10[%c0_149, %c0_150] : memref<1152x128xbf16, #tpu.memory_space<vmem>>, vector<1152x128xbf16>
    %cst_151 = arith.constant dense<0.000000e+00> : vector<8x128xf32>
    %514 = tpu.matmul %512, %513, %cst_151 {dimension_numbers = #tpu.dot_dimension_numbers<[1], [0], [0], [1], [0, 0, 1, 1], [], []>} : vector<8x1152xbf16>, vector<1152x128xbf16>, vector<8x128xf32> -> vector<8x128xf32>
    %515 = arith.negf %514 : vector<8x128xf32>
    %516 = math.exp %515 : vector<8x128xf32>
    %cst_152 = arith.constant 1.000000e+00 : f32
    %517 = vector.broadcast %cst_152 : f32 to vector<8x128xf32>
    %518 = arith.addf %517, %516 : vector<8x128xf32>
    %519 = arith.divf %517, %518 : vector<8x128xf32>
    %520 = arith.mulf %514, %519 : vector<8x128xf32>
    %521 = arith.truncf %520 : vector<8x128xf32> to vector<8x128xbf16>
    %cst_153 = arith.constant -2.200000e+00 : f32
    %522 = vector.broadcast %cst_153 : f32 to vector<8x128xf32>
    %523 = arith.subf %514, %522 : vector<8x128xf32>
    %cst_154 = arith.constant 2.500000e+00 : f32
    %524 = vector.broadcast %cst_154 : f32 to vector<8x128xf32>
    %525 = arith.mulf %523, %524 : vector<8x128xf32>
    %526 = math.floor %525 : vector<8x128xf32>
    %527 = arith.subf %525, %526 : vector<8x128xf32>
    %528 = arith.mulf %527, %527 : vector<8x128xf32>
    %529 = arith.mulf %528, %527 : vector<8x128xf32>
    %cst_155 = arith.constant 0.166666672 : f32
    %530 = vector.broadcast %cst_155 : f32 to vector<8x128xf32>
    %531 = arith.mulf %529, %530 : vector<8x128xf32>
    %532 = arith.subf %528, %527 : vector<8x128xf32>
    %cst_156 = arith.constant 5.000000e-01 : f32
    %533 = vector.broadcast %cst_156 : f32 to vector<8x128xf32>
    %534 = arith.mulf %533, %532 : vector<8x128xf32>
    %cst_157 = arith.constant 0.166666672 : f32
    %535 = vector.broadcast %cst_157 : f32 to vector<8x128xf32>
    %536 = arith.addf %535, %534 : vector<8x128xf32>
    %537 = arith.subf %536, %531 : vector<8x128xf32>
    %cst_158 = arith.constant 0.666666686 : f32
    %538 = vector.broadcast %cst_158 : f32 to vector<8x128xf32>
    %539 = arith.subf %538, %528 : vector<8x128xf32>
    %cst_159 = arith.constant 5.000000e-01 : f32
    %540 = vector.broadcast %cst_159 : f32 to vector<8x128xf32>
    %541 = arith.mulf %540, %529 : vector<8x128xf32>
    %542 = arith.addf %539, %541 : vector<8x128xf32>
    %cst_160 = arith.constant 1.000000e+00 : f32
    %543 = vector.broadcast %cst_160 : f32 to vector<8x128xf32>
    %544 = arith.subf %543, %537 : vector<8x128xf32>
    %545 = arith.subf %544, %542 : vector<8x128xf32>
    %546 = arith.subf %545, %531 : vector<8x128xf32>
    %cst_161 = arith.constant 0.000000e+00 : f32
    %547 = vector.broadcast %cst_161 : f32 to vector<8x128xf32>
    %cst_162 = arith.constant 0.000000e+00 : f32
    %548 = vector.broadcast %cst_162 : f32 to vector<8x128xf32>
    %549 = arith.cmpf oeq, %526, %548 : vector<8x128xf32>
    %550 = arith.select %549, %531, %547 : vector<8x128xi1>, vector<8x128xf32>
    %cst_163 = arith.constant 1.000000e+00 : f32
    %551 = vector.broadcast %cst_163 : f32 to vector<8x128xf32>
    %552 = arith.cmpf oeq, %526, %551 : vector<8x128xf32>
    %553 = arith.select %552, %546, %547 : vector<8x128xi1>, vector<8x128xf32>
    %554 = arith.addf %550, %553 : vector<8x128xf32>
    %cst_164 = arith.constant 2.000000e+00 : f32
    %555 = vector.broadcast %cst_164 : f32 to vector<8x128xf32>
    %556 = arith.cmpf oeq, %526, %555 : vector<8x128xf32>
    %557 = arith.select %556, %542, %547 : vector<8x128xi1>, vector<8x128xf32>
    %558 = arith.addf %554, %557 : vector<8x128xf32>
    %cst_165 = arith.constant 3.000000e+00 : f32
    %559 = vector.broadcast %cst_165 : f32 to vector<8x128xf32>
    %560 = arith.cmpf oeq, %526, %559 : vector<8x128xf32>
    %561 = arith.select %560, %537, %547 : vector<8x128xi1>, vector<8x128xf32>
    %562 = arith.addf %558, %561 : vector<8x128xf32>
    %cst_166 = arith.constant 1.000000e+00 : f32
    %563 = vector.broadcast %cst_166 : f32 to vector<8x128xf32>
    %564 = arith.cmpf oeq, %526, %563 : vector<8x128xf32>
    %565 = arith.select %564, %531, %547 : vector<8x128xi1>, vector<8x128xf32>
    %cst_167 = arith.constant 2.000000e+00 : f32
    %566 = vector.broadcast %cst_167 : f32 to vector<8x128xf32>
    %567 = arith.cmpf oeq, %526, %566 : vector<8x128xf32>
    %568 = arith.select %567, %546, %547 : vector<8x128xi1>, vector<8x128xf32>
    %569 = arith.addf %565, %568 : vector<8x128xf32>
    %cst_168 = arith.constant 3.000000e+00 : f32
    %570 = vector.broadcast %cst_168 : f32 to vector<8x128xf32>
    %571 = arith.cmpf oeq, %526, %570 : vector<8x128xf32>
    %572 = arith.select %571, %542, %547 : vector<8x128xi1>, vector<8x128xf32>
    %573 = arith.addf %569, %572 : vector<8x128xf32>
    %cst_169 = arith.constant 4.000000e+00 : f32
    %574 = vector.broadcast %cst_169 : f32 to vector<8x128xf32>
    %575 = arith.cmpf oeq, %526, %574 : vector<8x128xf32>
    %576 = arith.select %575, %537, %547 : vector<8x128xi1>, vector<8x128xf32>
    %577 = arith.addf %573, %576 : vector<8x128xf32>
    %cst_170 = arith.constant 2.000000e+00 : f32
    %578 = vector.broadcast %cst_170 : f32 to vector<8x128xf32>
    %579 = arith.cmpf oeq, %526, %578 : vector<8x128xf32>
    %580 = arith.select %579, %531, %547 : vector<8x128xi1>, vector<8x128xf32>
    %cst_171 = arith.constant 3.000000e+00 : f32
    %581 = vector.broadcast %cst_171 : f32 to vector<8x128xf32>
    %582 = arith.cmpf oeq, %526, %581 : vector<8x128xf32>
    %583 = arith.select %582, %546, %547 : vector<8x128xi1>, vector<8x128xf32>
    %584 = arith.addf %580, %583 : vector<8x128xf32>
    %cst_172 = arith.constant 4.000000e+00 : f32
    %585 = vector.broadcast %cst_172 : f32 to vector<8x128xf32>
    %586 = arith.cmpf oeq, %526, %585 : vector<8x128xf32>
    %587 = arith.select %586, %542, %547 : vector<8x128xi1>, vector<8x128xf32>
    %588 = arith.addf %584, %587 : vector<8x128xf32>
    %cst_173 = arith.constant 5.000000e+00 : f32
    %589 = vector.broadcast %cst_173 : f32 to vector<8x128xf32>
    %590 = arith.cmpf oeq, %526, %589 : vector<8x128xf32>
    %591 = arith.select %590, %537, %547 : vector<8x128xi1>, vector<8x128xf32>
    %592 = arith.addf %588, %591 : vector<8x128xf32>
    %cst_174 = arith.constant 3.000000e+00 : f32
    %593 = vector.broadcast %cst_174 : f32 to vector<8x128xf32>
    %594 = arith.cmpf oeq, %526, %593 : vector<8x128xf32>
    %595 = arith.select %594, %531, %547 : vector<8x128xi1>, vector<8x128xf32>
    %cst_175 = arith.constant 4.000000e+00 : f32
    %596 = vector.broadcast %cst_175 : f32 to vector<8x128xf32>
    %597 = arith.cmpf oeq, %526, %596 : vector<8x128xf32>
    %598 = arith.select %597, %546, %547 : vector<8x128xi1>, vector<8x128xf32>
    %599 = arith.addf %595, %598 : vector<8x128xf32>
    %cst_176 = arith.constant 5.000000e+00 : f32
    %600 = vector.broadcast %cst_176 : f32 to vector<8x128xf32>
    %601 = arith.cmpf oeq, %526, %600 : vector<8x128xf32>
    %602 = arith.select %601, %542, %547 : vector<8x128xi1>, vector<8x128xf32>
    %603 = arith.addf %599, %602 : vector<8x128xf32>
    %cst_177 = arith.constant 6.000000e+00 : f32
    %604 = vector.broadcast %cst_177 : f32 to vector<8x128xf32>
    %605 = arith.cmpf oeq, %526, %604 : vector<8x128xf32>
    %606 = arith.select %605, %537, %547 : vector<8x128xi1>, vector<8x128xf32>
    %607 = arith.addf %603, %606 : vector<8x128xf32>
    %cst_178 = arith.constant 4.000000e+00 : f32
    %608 = vector.broadcast %cst_178 : f32 to vector<8x128xf32>
    %609 = arith.cmpf oeq, %526, %608 : vector<8x128xf32>
    %610 = arith.select %609, %531, %547 : vector<8x128xi1>, vector<8x128xf32>
    %cst_179 = arith.constant 5.000000e+00 : f32
    %611 = vector.broadcast %cst_179 : f32 to vector<8x128xf32>
    %612 = arith.cmpf oeq, %526, %611 : vector<8x128xf32>
    %613 = arith.select %612, %546, %547 : vector<8x128xi1>, vector<8x128xf32>
    %614 = arith.addf %610, %613 : vector<8x128xf32>
    %cst_180 = arith.constant 6.000000e+00 : f32
    %615 = vector.broadcast %cst_180 : f32 to vector<8x128xf32>
    %616 = arith.cmpf oeq, %526, %615 : vector<8x128xf32>
    %617 = arith.select %616, %542, %547 : vector<8x128xi1>, vector<8x128xf32>
    %618 = arith.addf %614, %617 : vector<8x128xf32>
    %cst_181 = arith.constant 7.000000e+00 : f32
    %619 = vector.broadcast %cst_181 : f32 to vector<8x128xf32>
    %620 = arith.cmpf oeq, %526, %619 : vector<8x128xf32>
    %621 = arith.select %620, %537, %547 : vector<8x128xi1>, vector<8x128xf32>
    %622 = arith.addf %618, %621 : vector<8x128xf32>
    %cst_182 = arith.constant 5.000000e+00 : f32
    %623 = vector.broadcast %cst_182 : f32 to vector<8x128xf32>
    %624 = arith.cmpf oeq, %526, %623 : vector<8x128xf32>
    %625 = arith.select %624, %531, %547 : vector<8x128xi1>, vector<8x128xf32>
    %cst_183 = arith.constant 6.000000e+00 : f32
    %626 = vector.broadcast %cst_183 : f32 to vector<8x128xf32>
    %627 = arith.cmpf oeq, %526, %626 : vector<8x128xf32>
    %628 = arith.select %627, %546, %547 : vector<8x128xi1>, vector<8x128xf32>
    %629 = arith.addf %625, %628 : vector<8x128xf32>
    %cst_184 = arith.constant 7.000000e+00 : f32
    %630 = vector.broadcast %cst_184 : f32 to vector<8x128xf32>
    %631 = arith.cmpf oeq, %526, %630 : vector<8x128xf32>
    %632 = arith.select %631, %542, %547 : vector<8x128xi1>, vector<8x128xf32>
    %633 = arith.addf %629, %632 : vector<8x128xf32>
    %cst_185 = arith.constant 8.000000e+00 : f32
    %634 = vector.broadcast %cst_185 : f32 to vector<8x128xf32>
    %635 = arith.cmpf oeq, %526, %634 : vector<8x128xf32>
    %636 = arith.select %635, %537, %547 : vector<8x128xi1>, vector<8x128xf32>
    %637 = arith.addf %633, %636 : vector<8x128xf32>
    %cst_186 = arith.constant 6.000000e+00 : f32
    %638 = vector.broadcast %cst_186 : f32 to vector<8x128xf32>
    %639 = arith.cmpf oeq, %526, %638 : vector<8x128xf32>
    %640 = arith.select %639, %531, %547 : vector<8x128xi1>, vector<8x128xf32>
    %cst_187 = arith.constant 7.000000e+00 : f32
    %641 = vector.broadcast %cst_187 : f32 to vector<8x128xf32>
    %642 = arith.cmpf oeq, %526, %641 : vector<8x128xf32>
    %643 = arith.select %642, %546, %547 : vector<8x128xi1>, vector<8x128xf32>
    %644 = arith.addf %640, %643 : vector<8x128xf32>
    %cst_188 = arith.constant 8.000000e+00 : f32
    %645 = vector.broadcast %cst_188 : f32 to vector<8x128xf32>
    %646 = arith.cmpf oeq, %526, %645 : vector<8x128xf32>
    %647 = arith.select %646, %542, %547 : vector<8x128xi1>, vector<8x128xf32>
    %648 = arith.addf %644, %647 : vector<8x128xf32>
    %cst_189 = arith.constant 9.000000e+00 : f32
    %649 = vector.broadcast %cst_189 : f32 to vector<8x128xf32>
    %650 = arith.cmpf oeq, %526, %649 : vector<8x128xf32>
    %651 = arith.select %650, %537, %547 : vector<8x128xi1>, vector<8x128xf32>
    %652 = arith.addf %648, %651 : vector<8x128xf32>
    %cst_190 = arith.constant 7.000000e+00 : f32
    %653 = vector.broadcast %cst_190 : f32 to vector<8x128xf32>
    %654 = arith.cmpf oeq, %526, %653 : vector<8x128xf32>
    %655 = arith.select %654, %531, %547 : vector<8x128xi1>, vector<8x128xf32>
    %cst_191 = arith.constant 8.000000e+00 : f32
    %656 = vector.broadcast %cst_191 : f32 to vector<8x128xf32>
    %657 = arith.cmpf oeq, %526, %656 : vector<8x128xf32>
    %658 = arith.select %657, %546, %547 : vector<8x128xi1>, vector<8x128xf32>
    %659 = arith.addf %655, %658 : vector<8x128xf32>
    %cst_192 = arith.constant 9.000000e+00 : f32
    %660 = vector.broadcast %cst_192 : f32 to vector<8x128xf32>
    %661 = arith.cmpf oeq, %526, %660 : vector<8x128xf32>
    %662 = arith.select %661, %542, %547 : vector<8x128xi1>, vector<8x128xf32>
    %663 = arith.addf %659, %662 : vector<8x128xf32>
    %cst_193 = arith.constant 1.000000e+01 : f32
    %664 = vector.broadcast %cst_193 : f32 to vector<8x128xf32>
    %665 = arith.cmpf oeq, %526, %664 : vector<8x128xf32>
    %666 = arith.select %665, %537, %547 : vector<8x128xi1>, vector<8x128xf32>
    %667 = arith.addf %663, %666 : vector<8x128xf32>
    %668 = arith.truncf %562 : vector<8x128xf32> to vector<8x128xbf16>
    %669 = arith.truncf %577 : vector<8x128xf32> to vector<8x128xbf16>
    %670 = arith.truncf %592 : vector<8x128xf32> to vector<8x128xbf16>
    %671 = arith.truncf %607 : vector<8x128xf32> to vector<8x128xbf16>
    %672 = arith.truncf %622 : vector<8x128xf32> to vector<8x128xbf16>
    %673 = arith.truncf %637 : vector<8x128xf32> to vector<8x128xbf16>
    %674 = arith.truncf %652 : vector<8x128xf32> to vector<8x128xbf16>
    %675 = arith.truncf %667 : vector<8x128xf32> to vector<8x128xbf16>
    %676 = tpu.concatenate %521, %668, %669, %670, %671, %672, %673, %674, %675 in 1 : vector<8x128xbf16>, vector<8x128xbf16>, vector<8x128xbf16>, vector<8x128xbf16>, vector<8x128xbf16>, vector<8x128xbf16>, vector<8x128xbf16>, vector<8x128xbf16>, vector<8x128xbf16> -> vector<8x1152xbf16>
    %c0_194 = arith.constant 0 : index
    %c0_195 = arith.constant 0 : index
    %677 = vector.load %arg11[%c0_194, %c0_195] : memref<1152x128xbf16, #tpu.memory_space<vmem>>, vector<1152x128xbf16>
    %cst_196 = arith.constant dense<0.000000e+00> : vector<8x128xf32>
    %678 = tpu.matmul %676, %677, %cst_196 {dimension_numbers = #tpu.dot_dimension_numbers<[1], [0], [0], [1], [0, 0, 1, 1], [], []>} : vector<8x1152xbf16>, vector<1152x128xbf16>, vector<8x128xf32> -> vector<8x128xf32>
    %c0_197 = arith.constant 0 : index
    %c0_198 = arith.constant 0 : index
    %679 = vector.load %arg12[%c0_197, %c0_198] : memref<8x128xf32, #tpu.memory_space<vmem>>, vector<8x128xf32>
    tpu.vector_store %arg12[%c0_197, %c0_198], %678 {strides = array<i32>} : memref<8x128xf32, #tpu.memory_space<vmem>>, vector<8x128xf32>,
    return
  }
  func.func @transform_0(%arg0: i32) -> (i32, i32) {
    %c0_i32 = arith.constant 0 : i32
    %c0_i32_0 = arith.constant 0 : i32
    return %arg0, %c0_i32 : i32, i32
  }
  func.func @transform_1(%arg0: i32) -> (i32, i32) {
    %c0_i32 = arith.constant 0 : i32
    %c0_i32_0 = arith.constant 0 : i32
    %c0_i32_1 = arith.constant 0 : i32
    return %c0_i32, %c0_i32_0 : i32, i32
  }
  func.func @transform_2(%arg0: i32) -> (i32, i32) {
    %c0_i32 = arith.constant 0 : i32
    %c0_i32_0 = arith.constant 0 : i32
    %c0_i32_1 = arith.constant 0 : i32
    return %c0_i32, %c0_i32_0 : i32, i32
  }
  func.func @transform_3(%arg0: i32) -> (i32, i32) {
    %c0_i32 = arith.constant 0 : i32
    %c0_i32_0 = arith.constant 0 : i32
    %c0_i32_1 = arith.constant 0 : i32
    return %c0_i32, %c0_i32_0 : i32, i32
  }
  func.func @transform_4(%arg0: i32) -> (i32, i32) {
    %c0_i32 = arith.constant 0 : i32
    %c0_i32_0 = arith.constant 0 : i32
    %c0_i32_1 = arith.constant 0 : i32
    return %c0_i32, %c0_i32_0 : i32, i32
  }
  func.func @transform_5(%arg0: i32) -> (i32, i32) {
    %c0_i32 = arith.constant 0 : i32
    %c0_i32_0 = arith.constant 0 : i32
    %c0_i32_1 = arith.constant 0 : i32
    return %c0_i32, %c0_i32_0 : i32, i32
  }
  func.func @transform_6(%arg0: i32) -> (i32, i32) {
    %c0_i32 = arith.constant 0 : i32
    %c0_i32_0 = arith.constant 0 : i32
    %c0_i32_1 = arith.constant 0 : i32
    return %c0_i32, %c0_i32_0 : i32, i32
  }
  func.func @transform_7(%arg0: i32) -> (i32, i32) {
    %c0_i32 = arith.constant 0 : i32
    %c0_i32_0 = arith.constant 0 : i32
    %c0_i32_1 = arith.constant 0 : i32
    return %c0_i32, %c0_i32_0 : i32, i32
  }
  func.func @transform_8(%arg0: i32) -> (i32, i32) {
    %c0_i32 = arith.constant 0 : i32
    %c0_i32_0 = arith.constant 0 : i32
    %c0_i32_1 = arith.constant 0 : i32
    return %c0_i32, %c0_i32_0 : i32, i32
  }
  func.func @transform_9(%arg0: i32) -> (i32, i32) {
    %c0_i32 = arith.constant 0 : i32
    %c0_i32_0 = arith.constant 0 : i32
    %c0_i32_1 = arith.constant 0 : i32
    return %c0_i32, %c0_i32_0 : i32, i32
  }
  func.func @transform_10(%arg0: i32) -> (i32, i32) {
    %c0_i32 = arith.constant 0 : i32
    %c0_i32_0 = arith.constant 0 : i32
    %c0_i32_1 = arith.constant 0 : i32
    return %c0_i32, %c0_i32_0 : i32, i32
  }
  func.func @transform_11(%arg0: i32) -> (i32, i32) {
    %c0_i32 = arith.constant 0 : i32
    %c0_i32_0 = arith.constant 0 : i32
    return %arg0, %c0_i32 : i32, i32
  }
}

</mosaic_0001>

<llo_original>
// kernel: tpu_custom_call.1
$region0: #{tpu_custom_call.1}
  #allocation0 [shape = 'u32[]', space=smem, size = 0x4, offset = 0x4, fixed_abs, tag = 'smem constant byte address 0x4 - core index']
  #allocation1 [shape = 'u32[144,128]{1,0:T(1,128)}', space=vmem, size = 0x12000, scoped, tag = 'internal scratch']
  %s0 = inlined_call_operand.vmem [shape: f32[8,4], index: 0, kind: input, shape index: {}]
  %s1 = inlined_call_operand.vmem [shape: bf16[4,256], index: 1, kind: input, shape index: {}]
  %s2 = inlined_call_operand.vmem [shape: f32[1,256], index: 2, kind: input, shape index: {}]
  %s3 = inlined_call_operand.hbm [shape: bf16[2304,128], index: 3, kind: input, shape index: {}]
  %s4 = inlined_call_operand.hbm [shape: bf16[1152,128], index: 4, kind: input, shape index: {}]
  %s5 = inlined_call_operand.hbm [shape: bf16[128,128], index: 5, kind: input, shape index: {}]
  %s6 = inlined_call_operand.vmem [shape: f32[1,128], index: 6, kind: input, shape index: {}]
  %s7 = inlined_call_operand.hbm [shape: bf16[128,128], index: 7, kind: input, shape index: {}]
  %s8 = inlined_call_operand.vmem [shape: f32[1,128], index: 8, kind: input, shape index: {}]
  %s9 = inlined_call_operand.hbm [shape: bf16[1152,128], index: 9, kind: input, shape index: {}]
  %s10 = inlined_call_operand.hbm [shape: bf16[1152,128], index: 10, kind: input, shape index: {}]
  %s11 = inlined_call_operand.hbm [shape: f32[8,128], index: 11, kind: output, shape index: {}]
  %s12 = sld [smem:[#allocation0]]
  $region78: #{tpu_custom_call.1} parent=0
    _
  %s14 = ssub.s32 1, %s12
  %s15 = scalar_select 0, %s14, %s12
  $region1: #{tpu_custom_call.1} parent=0
    #allocation2 [shape = 'u8[589824]{0}', space=vmem, size = 0x90000, scoped, tag = 'input window, operand 3, single buffered']
    #allocation3 [shape = 's32[1]{0}', space=sflag, size = 0x4, scoped, tag = 'scoped memory for tpu_custom_call.1']
    #allocation4 [shape = 's32[1]{0}', space=sflag, size = 0x4, scoped, tag = 'scoped memory for tpu_custom_call.1']
    #allocation5 [shape = 'u8[294912]{0}', space=vmem, size = 0x48000, scoped, tag = 'input window, operand 4, single buffered']
    #allocation6 [shape = 's32[1]{0}', space=sflag, size = 0x4, scoped, tag = 'scoped memory for tpu_custom_call.1']
    #allocation7 [shape = 'u8[32768]{0}', space=vmem, size = 0x8000, scoped, tag = 'input window, operand 5, single buffered']
    #allocation8 [shape = 'u8[32768]{0}', space=vmem, size = 0x8000, scoped, tag = 'input window, operand 7, single buffered']
    #allocation9 [shape = 's32[1]{0}', space=sflag, size = 0x4, scoped, tag = 'scoped memory for tpu_custom_call.1']
    #allocation10 [shape = 'u8[294912]{0}', space=vmem, size = 0x48000, scoped, tag = 'input window, operand 9, single buffered']
    #allocation11 [shape = 'u8[294912]{0}', space=vmem, size = 0x48000, scoped, tag = 'input window, operand 10, single buffered']
    #allocation12 [shape = 's32[1]{0}', space=sflag, size = 0x4, scoped, tag = 'scoped memory for tpu_custom_call.1']
    #allocation13 [shape = 'u8[4096]{0}', space=vmem, size = 0x1000, scoped, tag = 'output window, operand 0, single buffered']
    %16 = vsyncpa [#allocation3], 0
    %17 = vsyncpa [#allocation6], 0
    %18 = vsyncpa [#allocation9], 0
    %19 = vsyncpa [#allocation12], 0
    %20 = vsyncpa [#allocation4], 0
    // Predicated region
    $region2: #{tpu_custom_call.1} parent=1 // pred_check
      _
    $region3: #{tpu_custom_call.1} parent=1 // pred_check_branch
      %22 = sbr.rel (0) target = $region5
    $region4: #{tpu_custom_call.1} parent=1 // pred_region
      _
    $region5: #{tpu_custom_call.1} parent=1 // pred_fallthru
      _
    // Predicated region
    $region6: #{tpu_custom_call.1} parent=1 // pred_check
      _
    $region7: #{tpu_custom_call.1} parent=1 // pred_check_branch
      %24 = sbr.rel (0) target = $region9
    $region8: #{tpu_custom_call.1} parent=1 // pred_region
      _
    $region9: #{tpu_custom_call.1} parent=1 // pred_fallthru
      _
    // Predicated region
    $region10: #{tpu_custom_call.1} parent=1 // pred_check
      _
    $region11: #{tpu_custom_call.1} parent=1 // pred_check_branch
      %26 = sbr.rel (0) target = $region13
    $region12: #{tpu_custom_call.1} parent=1 // pred_region
      _
    $region13: #{tpu_custom_call.1} parent=1 // pred_fallthru
      _
    // Predicated region
    $region14: #{tpu_custom_call.1} parent=1 // pred_check
      _
    $region15: #{tpu_custom_call.1} parent=1 // pred_check_branch
      %28 = sbr.rel (0) target = $region17
    $region16: #{tpu_custom_call.1} parent=1 // pred_region
      %s30 = ssub.s32 18432, 18432
      %31 = vsyncadd [#allocation3], %s30
      %s32 = sshll.u32 [#allocation2], 4
      %s33 = int_to_ptr.vmem [resolvable:$true] %s32
      %38 = dma.hbm_to_vmem [thread:$0]  %s3, 18432, %s33, [#allocation3], 64, 64, 4
    $region17: #{tpu_custom_call.1} parent=1 // pred_fallthru
      _
    // Predicated region
    $region18: #{tpu_custom_call.1} parent=1 // pred_check
      _
    $region19: #{tpu_custom_call.1} parent=1 // pred_check_branch
      %40 = sbr.rel (0) target = $region21
    $region20: #{tpu_custom_call.1} parent=1 // pred_region
      %s42 = ssub.s32 9216, 9216
      %43 = vsyncadd [#allocation6], %s42
      %s44 = sshll.u32 [#allocation5], 4
      %s45 = int_to_ptr.vmem [resolvable:$true] %s44
      %50 = dma.hbm_to_vmem [thread:$0]  %s4, 9216, %s45, [#allocation6], 64, 64, 4
    $region21: #{tpu_custom_call.1} parent=1 // pred_fallthru
      _
    // Predicated region
    $region22: #{tpu_custom_call.1} parent=1 // pred_check
      _
    $region23: #{tpu_custom_call.1} parent=1 // pred_check_branch
      %52 = sbr.rel (0) target = $region25
    $region24: #{tpu_custom_call.1} parent=1 // pred_region
      %s54 = ssub.s32 1024, 1024
      %55 = vsyncadd [#allocation6], %s54
      %s56 = sshll.u32 [#allocation7], 4
      %s57 = int_to_ptr.vmem [resolvable:$true] %s56
      %62 = dma.hbm_to_vmem [thread:$0]  %s5, 1024, %s57, [#allocation6], 64, 64, 4
    $region25: #{tpu_custom_call.1} parent=1 // pred_fallthru
      _
    // Predicated region
    $region26: #{tpu_custom_call.1} parent=1 // pred_check
      _
    $region27: #{tpu_custom_call.1} parent=1 // pred_check_branch
      %64 = sbr.rel (0) target = $region29
    $region28: #{tpu_custom_call.1} parent=1 // pred_region
      _
    $region29: #{tpu_custom_call.1} parent=1 // pred_fallthru
      _
    // Predicated region
    $region30: #{tpu_custom_call.1} parent=1 // pred_check
      _
    $region31: #{tpu_custom_call.1} parent=1 // pred_check_branch
      %66 = sbr.rel (0) target = $region33
    $region32: #{tpu_custom_call.1} parent=1 // pred_region
      %s68 = ssub.s32 1024, 1024
      %69 = vsyncadd [#allocation9], %s68
      %s70 = sshll.u32 [#allocation8], 4
      %s71 = int_to_ptr.vmem [resolvable:$true] %s70
      %76 = dma.hbm_to_vmem [thread:$0]  %s7, 1024, %s71, [#allocation9], 64, 64, 4
    $region33: #{tpu_custom_call.1} parent=1 // pred_fallthru
      _
    // Predicated region
    $region34: #{tpu_custom_call.1} parent=1 // pred_check
      _
    $region35: #{tpu_custom_call.1} parent=1 // pred_check_branch
      %78 = sbr.rel (0) target = $region37
    $region36: #{tpu_custom_call.1} parent=1 // pred_region
      _
    $region37: #{tpu_custom_call.1} parent=1 // pred_fallthru
      _
    // Predicated region
    $region38: #{tpu_custom_call.1} parent=1 // pred_check
      _
    $region39: #{tpu_custom_call.1} parent=1 // pred_check_branch
      %80 = sbr.rel (0) target = $region41
    $region40: #{tpu_custom_call.1} parent=1 // pred_region
      %s82 = ssub.s32 9216, 9216
      %83 = vsyncadd [#allocation9], %s82
      %s84 = sshll.u32 [#allocation10], 4
      %s85 = int_to_ptr.vmem [resolvable:$true] %s84
      %90 = dma.hbm_to_vmem [thread:$0]  %s9, 9216, %s85, [#allocation9], 64, 64, 4
    $region41: #{tpu_custom_call.1} parent=1 // pred_fallthru
      _
    // Predicated region
    $region42: #{tpu_custom_call.1} parent=1 // pred_check
      _
    $region43: #{tpu_custom_call.1} parent=1 // pred_check_branch
      %92 = sbr.rel (0) target = $region45
    $region44: #{tpu_custom_call.1} parent=1 // pred_region
      %s94 = ssub.s32 9216, 9216
      %95 = vsyncadd [#allocation12], %s94
      %s96 = sshll.u32 [#allocation11], 4
      %s97 = int_to_ptr.vmem [resolvable:$true] %s96
      %102 = dma.hbm_to_vmem [thread:$0]  %s10, 9216, %s97, [#allocation12], 64, 64, 4
    $region45: #{tpu_custom_call.1} parent=1 // pred_fallthru
      _
    // Predicated region
    $region46: #{tpu_custom_call.1} parent=1 // pred_check
      _
    $region47: #{tpu_custom_call.1} parent=1 // pred_check_branch
      %104 = sbr.rel (0) target = $region49
    $region48: #{tpu_custom_call.1} parent=1 // pred_region
      %105 = dma.done [#allocation3], 18432
    $region49: #{tpu_custom_call.1} parent=1 // pred_fallthru
      _
    // Predicated region
    $region50: #{tpu_custom_call.1} parent=1 // pred_check
      _
    $region51: #{tpu_custom_call.1} parent=1 // pred_check_branch
      %107 = sbr.rel (0) target = $region53
    $region52: #{tpu_custom_call.1} parent=1 // pred_region
      %108 = dma.done [#allocation6], 9216
    $region53: #{tpu_custom_call.1} parent=1 // pred_fallthru
      _
    // Predicated region
    $region54: #{tpu_custom_call.1} parent=1 // pred_check
      _
    $region55: #{tpu_custom_call.1} parent=1 // pred_check_branch
      %110 = sbr.rel (0) target = $region57
    $region56: #{tpu_custom_call.1} parent=1 // pred_region
      %111 = dma.done [#allocation6], 1024
    $region57: #{tpu_custom_call.1} parent=1 // pred_fallthru
      _
    // Predicated region
    $region58: #{tpu_custom_call.1} parent=1 // pred_check
      _
    $region59: #{tpu_custom_call.1} parent=1 // pred_check_branch
      %113 = sbr.rel (0) target = $region61
    $region60: #{tpu_custom_call.1} parent=1 // pred_region
      %114 = dma.done [#allocation9], 1024
    $region61: #{tpu_custom_call.1} parent=1 // pred_fallthru
      _
    // Predicated region
    $region62: #{tpu_custom_call.1} parent=1 // pred_check
      _
    $region63: #{tpu_custom_call.1} parent=1 // pred_check_branch
      %116 = sbr.rel (0) target = $region65
    $region64: #{tpu_custom_call.1} parent=1 // pred_region
      %117 = dma.done [#allocation9], 9216
    $region65: #{tpu_custom_call.1} parent=1 // pred_fallthru
      _
    // Predicated region
    $region66: #{tpu_custom_call.1} parent=1 // pred_check
      _
    $region67: #{tpu_custom_call.1} parent=1 // pred_check_branch
      %119 = sbr.rel (0) target = $region69
    $region68: #{tpu_custom_call.1} parent=1 // pred_region
      %120 = dma.done [#allocation12], 9216
    $region69: #{tpu_custom_call.1} parent=1 // pred_fallthru
      _
    %v122 = vld [vmem:[%s0] sm:$0xff]
    %v123 = vld [vmem:[%s1] sm:$0xf]
    %v124 = vpack.c.bf16 %v122, %v122
    %v125 = vld [vmem:[%s2] sm:$0x3]
    %v127 = vlaneseq
    %v128 = vshrl.u32 %v127, 7
    %v129 = vsub.s32 0, %v128
    %v130 = vrot.slane %v125, %v129
    %v131 = vlaneseq
    %v132 = vshrl.u32 %v131, 7
    %v133 = vsub.s32 1, %v132
    %v134 = vrot.slane %v125, %v133
    %v139 = vunpack.c.l.s4 1983009808
    %v140 = vunpack.c.0.s8 %v139
    %v141 = vlaneseq
    %v142 = vshrl.u32 %v141, 7
    %v143 = vsub.s32 %v140, %v142
    %v144 = vrot.slane %v123, %v143
    %v145 = vcombine.high %v144, %v144
    %vm146 = vcmask 31744
    %v148 = vsel %vm146, %v124, 0
    %vm150 = vcmask 1041408
    %v152 = vsel %vm150, %v144, 0
    %v155 = vsel %vm150, %v145, 0
    %157 = vmatprep.subr.bf16.mxu0 %v155
    %158 = vmatpush1.bf16.msra.mxu0 %v152
    %159 = vmatprep.subr.bf16.mxu0 0
    %160 = vmatpush1.bf16.msra.mxu0 0
    %161 = vmatprep.subr.bf16.mxu0 0
    %162 = vmatpush1.bf16.msra.mxu0 0
    %163 = vmatprep.subr.bf16.mxu0 0
    %164 = vmatpush1.bf16.msra.mxu0 0
    %165 = vmatprep.subr.bf16.mxu0 0
    %166 = vmatpush1.bf16.msra.mxu0 0
    %167 = vmatprep.subr.bf16.mxu0 0
    %168 = vmatpush1.bf16.msra.mxu0 0
    %169 = vmatprep.subr.bf16.mxu0 0
    %170 = vmatpush1.bf16.msra.mxu0 0
    %171 = vmatprep.subr.bf16.mxu0 0
    %172 = vmatpush1.bf16.msra.mxu0 0
    %173 = vmatprep.subr.bf16.mxu0 0
    %174 = vmatpush1.bf16.msra.mxu0 0
    %175 = vmatprep.subr.bf16.mxu0 0
    %176 = vmatpush1.bf16.msra.mxu0 0
    %177 = vmatprep.subr.bf16.mxu0 0
    %178 = vmatpush1.bf16.msra.mxu0 0
    %179 = vmatprep.subr.bf16.mxu0 0
    %180 = vmatpush1.bf16.msra.mxu0 0
    %181 = vmatprep.subr.bf16.mxu0 0
    %182 = vmatpush1.bf16.msra.mxu0 0
    %183 = vmatprep.subr.bf16.mxu0 0
    %184 = vmatpush1.bf16.msra.mxu0 0
    %185 = vmatprep.subr.bf16.mxu0 0
    %186 = vmatpush1.bf16.msra.mxu0 0
    %187 = vmatprep.subr.bf16.mxu0 0
    %188 = vmatpush1.bf16.msra.mxu0 0
    %189 = vmatprep.mubr.bf16.mxu0 0
    %190 = vmatmul.mubr.bf16.gmra.mrb[0].mxu0 %v148
    %v191 = vpop.f32.mrb[0].mxu0
    %v192 = vadd.f32 %v130, %v191
    %v193 = vpop.f32.mrb[0].mxu0
    %v194 = vadd.f32 %v134, %v193
    %v195 = vpop.f32.mrb[0].mxu0
    %v196 = vpop.f32.mrb[0].mxu0
    %197 = vdwg.mxu0
    %v198 = vxor.u32 %v192, 2147483648
    %v199 = vxor.u32 %v194, 2147483648
    %v200 = vmul.f32 %v198, 1.442695
    %v201 = vpow.pop %v200
    %v202 = vmul.f32 %v199, 1.442695
    %v203 = vpow.pop %v202
    %v204 = vadd.f32 %v201, 1.0
    %v205 = vadd.f32 %v203, 1.0
    %v206 = vrcp.pop %v204
    %v207 = vmul.f32 1.0, %v206
    %v208 = vrcp.pop %v205
    %v209 = vmul.f32 1.0, %v208
    %v210 = vmul.f32 %v192, %v207
    %v211 = vmul.f32 %v194, %v209
    %v212 = vpack.c.bf16 %v210, %v210
    %v213 = vpack.c.bf16 %v211, %v211
    %v214 = vsub.f32 %v192, -2.2
    %v215 = vsub.f32 %v194, -2.2
    %v216 = vmul.f32 %v214, 2.5
    %v217 = vmul.f32 %v215, 2.5
    %v218 = vfloor.f32 %v216
    %v219 = vfloor.f32 %v217
    %v220 = vsub.f32 %v216, %v218
    %v221 = vsub.f32 %v217, %v219
    %v222 = vmul.f32 %v220, %v220
    %v223 = vmul.f32 %v221, %v221
    %v224 = vmul.f32 %v222, %v220
    %v225 = vmul.f32 %v223, %v221
    %v226 = vmul.f32 %v224, 0.16666667
    %v227 = vmul.f32 %v225, 0.16666667
    %v228 = vsub.f32 %v222, %v220
    %v229 = vsub.f32 %v223, %v221
    %v230 = vmul.f32 %v228, 0.5
    %v231 = vmul.f32 %v229, 0.5
    %v232 = vadd.f32 %v230, 0.16666667
    %v233 = vadd.f32 %v231, 0.16666667
    %v234 = vsub.f32 %v232, %v226
    %v235 = vsub.f32 %v233, %v227
    %v236 = vsub.f32 0.6666667, %v222
    %v237 = vsub.f32 0.6666667, %v223
    %v238 = vmul.f32 %v224, 0.5
    %v239 = vmul.f32 %v225, 0.5
    %v240 = vadd.f32 %v236, %v238
    %v241 = vadd.f32 %v237, %v239
    %v242 = vsub.f32 1.0, %v234
    %v243 = vsub.f32 1.0, %v235
    %v244 = vsub.f32 %v242, %v240
    %v245 = vsub.f32 %v243, %v241
    %v246 = vsub.f32 %v244, %v226
    %v247 = vsub.f32 %v245, %v227
    %vm248 = vcmp.eq.f32.partialorder %v218, 0.0
    %vm249 = vcmp.eq.f32.partialorder %v219, 0.0
    %v250 = vsel %vm248, %v226, 0.0
    %v251 = vsel %vm249, %v227, 0.0
    %vm252 = vcmp.eq.f32.partialorder %v218, 1.0
    %vm253 = vcmp.eq.f32.partialorder %v219, 1.0
    %v254 = vsel %vm252, %v246, 0.0
    %v255 = vsel %vm253, %v247, 0.0
    %v256 = vadd.f32 %v250, %v254
    %v257 = vadd.f32 %v251, %v255
    %vm258 = vcmp.eq.f32.partialorder %v218, 2.0
    %vm259 = vcmp.eq.f32.partialorder %v219, 2.0
    %v260 = vsel %vm258, %v240, 0.0
    %v261 = vsel %vm259, %v241, 0.0
    %v262 = vadd.f32 %v256, %v260
    %v263 = vadd.f32 %v257, %v261
    %vm264 = vcmp.eq.f32.partialorder %v218, 3.0
    %vm265 = vcmp.eq.f32.partialorder %v219, 3.0
    %v266 = vsel %vm264, %v234, 0.0
    %v267 = vsel %vm265, %v235, 0.0
    %v268 = vadd.f32 %v262, %v266
    %v269 = vadd.f32 %v263, %v267
    %v270 = vsel %vm252, %v226, 0.0
    %v271 = vsel %vm253, %v227, 0.0
    %v272 = vsel %vm258, %v246, 0.0
    %v273 = vsel %vm259, %v247, 0.0
    %v274 = vadd.f32 %v270, %v272
    %v275 = vadd.f32 %v271, %v273
    %v276 = vsel %vm264, %v240, 0.0
    %v277 = vsel %vm265, %v241, 0.0
    %v278 = vadd.f32 %v274, %v276
    %v279 = vadd.f32 %v275, %v277
    %vm280 = vcmp.eq.f32.partialorder %v218, 4.0
    %vm281 = vcmp.eq.f32.partialorder %v219, 4.0
    %v282 = vsel %vm280, %v234, 0.0
    %v283 = vsel %vm281, %v235, 0.0
    %v284 = vadd.f32 %v278, %v282
    %v285 = vadd.f32 %v279, %v283
    %v286 = vsel %vm258, %v226, 0.0
    %v287 = vsel %vm259, %v227, 0.0
    %v288 = vsel %vm264, %v246, 0.0
    %v289 = vsel %vm265, %v247, 0.0
    %v290 = vadd.f32 %v286, %v288
    %v291 = vadd.f32 %v287, %v289
    %v292 = vsel %vm280, %v240, 0.0
    %v293 = vsel %vm281, %v241, 0.0
    %v294 = vadd.f32 %v290, %v292
    %v295 = vadd.f32 %v291, %v293
    %vm296 = vcmp.eq.f32.partialorder %v218, 5.0
    %vm297 = vcmp.eq.f32.partialorder %v219, 5.0
    %v298 = vsel %vm296, %v234, 0.0
    %v299 = vsel %vm297, %v235, 0.0
    %v300 = vadd.f32 %v294, %v298
    %v301 = vadd.f32 %v295, %v299
    %v302 = vsel %vm264, %v226, 0.0
    %v303 = vsel %vm265, %v227, 0.0
    %v304 = vsel %vm280, %v246, 0.0
    %v305 = vsel %vm281, %v247, 0.0
    %v306 = vadd.f32 %v302, %v304
    %v307 = vadd.f32 %v303, %v305
    %v308 = vsel %vm296, %v240, 0.0
    %v309 = vsel %vm297, %v241, 0.0
    %v310 = vadd.f32 %v306, %v308
    %v311 = vadd.f32 %v307, %v309
    %vm312 = vcmp.eq.f32.partialorder %v218, 6.0
    %vm313 = vcmp.eq.f32.partialorder %v219, 6.0
    %v314 = vsel %vm312, %v234, 0.0
    %v315 = vsel %vm313, %v235, 0.0
    %v316 = vadd.f32 %v310, %v314
    %v317 = vadd.f32 %v311, %v315
    %v318 = vsel %vm280, %v226, 0.0
    %v319 = vsel %vm281, %v227, 0.0
    %v320 = vsel %vm296, %v246, 0.0
    %v321 = vsel %vm297, %v247, 0.0
    %v322 = vadd.f32 %v318, %v320
    %v323 = vadd.f32 %v319, %v321
    %v324 = vsel %vm312, %v240, 0.0
    %v325 = vsel %vm313, %v241, 0.0
    %v326 = vadd.f32 %v322, %v324
    %v327 = vadd.f32 %v323, %v325
    %vm328 = vcmp.eq.f32.partialorder %v218, 7.0
    %vm329 = vcmp.eq.f32.partialorder %v219, 7.0
    %v330 = vsel %vm328, %v234, 0.0
    %v331 = vsel %vm329, %v235, 0.0
    %v332 = vadd.f32 %v326, %v330
    %v333 = vadd.f32 %v327, %v331
    %v334 = vsel %vm296, %v226, 0.0
    %v335 = vsel %vm297, %v227, 0.0
    %v336 = vsel %vm312, %v246, 0.0
    %v337 = vsel %vm313, %v247, 0.0
    %v338 = vadd.f32 %v334, %v336
    %v339 = vadd.f32 %v335, %v337
    %v340 = vsel %vm328, %v240, 0.0
    %v341 = vsel %vm329, %v241, 0.0
    %v342 = vadd.f32 %v338, %v340
    %v343 = vadd.f32 %v339, %v341
    %vm344 = vcmp.eq.f32.partialorder %v218, 8.0
    %vm345 = vcmp.eq.f32.partialorder %v219, 8.0
    %v346 = vsel %vm344, %v234, 0.0
    %v347 = vsel %vm345, %v235, 0.0
    %v348 = vadd.f32 %v342, %v346
    %v349 = vadd.f32 %v343, %v347
    %v350 = vsel %vm312, %v226, 0.0
    %v351 = vsel %vm313, %v227, 0.0
    %v352 = vsel %vm328, %v246, 0.0
    %v353 = vsel %vm329, %v247, 0.0
    %v354 = vadd.f32 %v350, %v352
    %v355 = vadd.f32 %v351, %v353
    %v356 = vsel %vm344, %v240, 0.0
    %v357 = vsel %vm345, %v241, 0.0
    %v358 = vadd.f32 %v354, %v356
    %v359 = vadd.f32 %v355, %v357
    %vm360 = vcmp.eq.f32.partialorder %v218, 9.0
    %vm361 = vcmp.eq.f32.partialorder %v219, 9.0
    %v362 = vsel %vm360, %v234, 0.0
    %v363 = vsel %vm361, %v235, 0.0
    %v364 = vadd.f32 %v358, %v362
    %v365 = vadd.f32 %v359, %v363
    %v366 = vsel %vm328, %v226, 0.0
    %v367 = vsel %vm329, %v227, 0.0
    %v368 = vsel %vm344, %v246, 0.0
    %v369 = vsel %vm345, %v247, 0.0
    %v370 = vadd.f32 %v366, %v368
    %v371 = vadd.f32 %v367, %v369
    %v372 = vsel %vm360, %v240, 0.0
    %v373 = vsel %vm361, %v241, 0.0
    %v374 = vadd.f32 %v370, %v372
    %v375 = vadd.f32 %v371, %v373
    %vm376 = vcmp.eq.f32.partialorder %v218, 10.0
    %vm377 = vcmp.eq.f32.partialorder %v219, 10.0
    %v378 = vsel %vm376, %v234, 0.0
    %v379 = vsel %vm377, %v235, 0.0
    %v380 = vadd.f32 %v374, %v378
    %v381 = vadd.f32 %v375, %v379
    %v382 = vpack.c.bf16 %v268, %v268
    %v383 = vpack.c.bf16 %v269, %v269
    %v384 = vpack.c.bf16 %v284, %v284
    %v385 = vpack.c.bf16 %v285, %v285
    %v386 = vpack.c.bf16 %v300, %v300
    %v387 = vpack.c.bf16 %v301, %v301
    %v388 = vpack.c.bf16 %v316, %v316
    %v389 = vpack.c.bf16 %v317, %v317
    %v390 = vpack.c.bf16 %v332, %v332
    %v391 = vpack.c.bf16 %v333, %v333
    %v392 = vpack.c.bf16 %v348, %v348
    %v393 = vpack.c.bf16 %v349, %v349
    %v394 = vpack.c.bf16 %v364, %v364
    %v395 = vpack.c.bf16 %v365, %v365
    %v396 = vpack.c.bf16 %v380, %v380
    %v397 = vpack.c.bf16 %v381, %v381
    %v398 = vld [vmem:[#allocation2] sm:$0xf]
    %v399 = vld [vmem:[#allocation2 + $0x4] sm:$0xf]
    %v400 = vld [vmem:[#allocation2 + $0x8] sm:$0xf]
    %v401 = vld [vmem:[#allocation2 + $0xc] sm:$0xf]
    %v402 = vld [vmem:[#allocation2 + $0x10] sm:$0xf]
    %v403 = vld [vmem:[#allocation2 + $0x14] sm:$0xf]
    %v404 = vld [vmem:[#allocation2 + $0x18] sm:$0xf]
    %v405 = vld [vmem:[#allocation2 + $0x1c] sm:$0xf]
    %v406 = vld [vmem:[#allocation2 + $0x20] sm:$0xf]
    %v407 = vld [vmem:[#allocation2 + $0x24] sm:$0xf]
    %v408 = vld [vmem:[#allocation2 + $0x28] sm:$0xf]
    %v409 = vld [vmem:[#allocation2 + $0x2c] sm:$0xf]
    %v410 = vld [vmem:[#allocation2 + $0x30] sm:$0xf]
    %v411 = vld [vmem:[#allocation2 + $0x34] sm:$0xf]
    %v412 = vld [vmem:[#allocation2 + $0x38] sm:$0xf]
    %v413 = vld [vmem:[#allocation2 + $0x3c] sm:$0xf]
    %v414 = vld [vmem:[#allocation2 + $0x40] sm:$0xf]
    %v415 = vld [vmem:[#allocation2 + $0x44] sm:$0xf]
    %v416 = vld [vmem:[#allocation2 + $0x48] sm:$0xf]
    %v417 = vld [vmem:[#allocation2 + $0x4c] sm:$0xf]
    %v418 = vld [vmem:[#allocation2 + $0x50] sm:$0xf]
    %v419 = vld [vmem:[#allocation2 + $0x54] sm:$0xf]
    %v420 = vld [vmem:[#allocation2 + $0x58] sm:$0xf]
    %v421 = vld [vmem:[#allocation2 + $0x5c] sm:$0xf]
    %v422 = vld [vmem:[#allocation2 + $0x60] sm:$0xf]
    %v423 = vld [vmem:[#allocation2 + $0x64] sm:$0xf]
    %v424 = vld [vmem:[#allocation2 + $0x68] sm:$0xf]
    %v425 = vld [vmem:[#allocation2 + $0x6c] sm:$0xf]
    %v426 = vld [vmem:[#allocation2 + $0x70] sm:$0xf]
    %v427 = vld [vmem:[#allocation2 + $0x74] sm:$0xf]
    %v428 = vld [vmem:[#allocation2 + $0x78] sm:$0xf]
    %v429 = vld [vmem:[#allocation2 + $0x7c] sm:$0xf]
    %v430 = vld [vmem:[#allocation2 + $0x80] sm:$0xf]
    %v431 = vld [vmem:[#allocation2 + $0x84] sm:$0xf]
    %v432 = vld [vmem:[#allocation2 + $0x88] sm:$0xf]
    %v433 = vld [vmem:[#allocation2 + $0x8c] sm:$0xf]
    %v434 = vld [vmem:[#allocation2 + $0x90] sm:$0xf]
    %v435 = vld [vmem:[#allocation2 + $0x94] sm:$0xf]
    %v436 = vld [vmem:[#allocation2 + $0x98] sm:$0xf]
    %v437 = vld [vmem:[#allocation2 + $0x9c] sm:$0xf]
    %v438 = vld [vmem:[#allocation2 + $0xa0] sm:$0xf]
    %v439 = vld [vmem:[#allocation2 + $0xa4] sm:$0xf]
    %v440 = vld [vmem:[#allocation2 + $0xa8] sm:$0xf]
    %v441 = vld [vmem:[#allocation2 + $0xac] sm:$0xf]
    %v442 = vld [vmem:[#allocation2 + $0xb0] sm:$0xf]
    %v443 = vld [vmem:[#allocation2 + $0xb4] sm:$0xf]
    %v444 = vld [vmem:[#allocation2 + $0xb8] sm:$0xf]
    %v445 = vld [vmem:[#allocation2 + $0xbc] sm:$0xf]
    %v446 = vld [vmem:[#allocation2 + $0xc0] sm:$0xf]
    %v447 = vld [vmem:[#allocation2 + $0xc4] sm:$0xf]
    %v448 = vld [vmem:[#allocation2 + $0xc8] sm:$0xf]
    %v449 = vld [vmem:[#allocation2 + $0xcc] sm:$0xf]
    %v450 = vld [vmem:[#allocation2 + $0xd0] sm:$0xf]
    %v451 = vld [vmem:[#allocation2 + $0xd4] sm:$0xf]
    %v452 = vld [vmem:[#allocation2 + $0xd8] sm:$0xf]
    %v453 = vld [vmem:[#allocation2 + $0xdc] sm:$0xf]
    %v454 = vld [vmem:[#allocation2 + $0xe0] sm:$0xf]
    %v455 = vld [vmem:[#allocation2 + $0xe4] sm:$0xf]
    %v456 = vld [vmem:[#allocation2 + $0xe8] sm:$0xf]
    %v457 = vld [vmem:[#allocation2 + $0xec] sm:$0xf]
    %v458 = vld [vmem:[#allocation2 + $0xf0] sm:$0xf]
    %v459 = vld [vmem:[#allocation2 + $0xf4] sm:$0xf]
    %v460 = vld [vmem:[#allocation2 + $0xf8] sm:$0xf]
    %v461 = vld [vmem:[#allocation2 + $0xfc] sm:$0xf]
    %v462 = vld [vmem:[#allocation2 + $0x100] sm:$0xf]
    %v463 = vld [vmem:[#allocation2 + $0x104] sm:$0xf]
    %v464 = vld [vmem:[#allocation2 + $0x108] sm:$0xf]
    %v465 = vld [vmem:[#allocation2 + $0x10c] sm:$0xf]
    %v466 = vld [vmem:[#allocation2 + $0x110] sm:$0xf]
    %v467 = vld [vmem:[#allocation2 + $0x114] sm:$0xf]
    %v468 = vld [vmem:[#allocation2 + $0x118] sm:$0xf]
    %v469 = vld [vmem:[#allocation2 + $0x11c] sm:$0xf]
    %v470 = vld [vmem:[#allocation2 + $0x120] sm:$0xf]
    %v471 = vld [vmem:[#allocation2 + $0x124] sm:$0xf]
    %v472 = vld [vmem:[#allocation2 + $0x128] sm:$0xf]
    %v473 = vld [vmem:[#allocation2 + $0x12c] sm:$0xf]
    %v474 = vld [vmem:[#allocation2 + $0x130] sm:$0xf]
    %v475 = vld [vmem:[#allocation2 + $0x134] sm:$0xf]
    %v476 = vld [vmem:[#allocation2 + $0x138] sm:$0xf]
    %v477 = vld [vmem:[#allocation2 + $0x13c] sm:$0xf]
    %v478 = vld [vmem:[#allocation2 + $0x140] sm:$0xf]
    %v479 = vld [vmem:[#allocation2 + $0x144] sm:$0xf]
    %v480 = vld [vmem:[#allocation2 + $0x148] sm:$0xf]
    %v481 = vld [vmem:[#allocation2 + $0x14c] sm:$0xf]
    %v482 = vld [vmem:[#allocation2 + $0x150] sm:$0xf]
    %v483 = vld [vmem:[#allocation2 + $0x154] sm:$0xf]
    %v484 = vld [vmem:[#allocation2 + $0x158] sm:$0xf]
    %v485 = vld [vmem:[#allocation2 + $0x15c] sm:$0xf]
    %v486 = vld [vmem:[#allocation2 + $0x160] sm:$0xf]
    %v487 = vld [vmem:[#allocation2 + $0x164] sm:$0xf]
    %v488 = vld [vmem:[#allocation2 + $0x168] sm:$0xf]
    %v489 = vld [vmem:[#allocation2 + $0x16c] sm:$0xf]
    %v490 = vld [vmem:[#allocation2 + $0x170] sm:$0xf]
    %v491 = vld [vmem:[#allocation2 + $0x174] sm:$0xf]
    %v492 = vld [vmem:[#allocation2 + $0x178] sm:$0xf]
    %v493 = vld [vmem:[#allocation2 + $0x17c] sm:$0xf]
    %v494 = vld [vmem:[#allocation2 + $0x180] sm:$0xf]
    %v495 = vld [vmem:[#allocation2 + $0x184] sm:$0xf]
    %v496 = vld [vmem:[#allocation2 + $0x188] sm:$0xf]
    %v497 = vld [vmem:[#allocation2 + $0x18c] sm:$0xf]
    %v498 = vld [vmem:[#allocation2 + $0x190] sm:$0xf]
    %v499 = vld [vmem:[#allocation2 + $0x194] sm:$0xf]
    %v500 = vld [vmem:[#allocation2 + $0x198] sm:$0xf]
    %v501 = vld [vmem:[#allocation2 + $0x19c] sm:$0xf]
    %v502 = vld [vmem:[#allocation2 + $0x1a0] sm:$0xf]
    %v503 = vld [vmem:[#allocation2 + $0x1a4] sm:$0xf]
    %v504 = vld [vmem:[#allocation2 + $0x1a8] sm:$0xf]
    %v505 = vld [vmem:[#allocation2 + $0x1ac] sm:$0xf]
    %v506 = vld [vmem:[#allocation2 + $0x1b0] sm:$0xf]
    %v507 = vld [vmem:[#allocation2 + $0x1b4] sm:$0xf]
    %v508 = vld [vmem:[#allocation2 + $0x1b8] sm:$0xf]
    %v509 = vld [vmem:[#allocation2 + $0x1bc] sm:$0xf]
    %v510 = vld [vmem:[#allocation2 + $0x1c0] sm:$0xf]
    %v511 = vld [vmem:[#allocation2 + $0x1c4] sm:$0xf]
    %v512 = vld [vmem:[#allocation2 + $0x1c8] sm:$0xf]
    %v513 = vld [vmem:[#allocation2 + $0x1cc] sm:$0xf]
    %v514 = vld [vmem:[#allocation2 + $0x1d0] sm:$0xf]
    %v515 = vld [vmem:[#allocation2 + $0x1d4] sm:$0xf]
    %v516 = vld [vmem:[#allocation2 + $0x1d8] sm:$0xf]
    %v517 = vld [vmem:[#allocation2 + $0x1dc] sm:$0xf]
    %v518 = vld [vmem:[#allocation2 + $0x1e0] sm:$0xf]
    %v519 = vld [vmem:[#allocation2 + $0x1e4] sm:$0xf]
    %v520 = vld [vmem:[#allocation2 + $0x1e8] sm:$0xf]
    %v521 = vld [vmem:[#allocation2 + $0x1ec] sm:$0xf]
    %v522 = vld [vmem:[#allocation2 + $0x1f0] sm:$0xf]
    %v523 = vld [vmem:[#allocation2 + $0x1f4] sm:$0xf]
    %v524 = vld [vmem:[#allocation2 + $0x1f8] sm:$0xf]
    %v525 = vld [vmem:[#allocation2 + $0x1fc] sm:$0xf]
    %v526 = vld [vmem:[#allocation2 + $0x200] sm:$0xf]
    %v527 = vld [vmem:[#allocation2 + $0x204] sm:$0xf]
    %v528 = vld [vmem:[#allocation2 + $0x208] sm:$0xf]
    %v529 = vld [vmem:[#allocation2 + $0x20c] sm:$0xf]
    %v530 = vld [vmem:[#allocation2 + $0x210] sm:$0xf]
    %v531 = vld [vmem:[#allocation2 + $0x214] sm:$0xf]
    %v532 = vld [vmem:[#allocation2 + $0x218] sm:$0xf]
    %v533 = vld [vmem:[#allocation2 + $0x21c] sm:$0xf]
    %v534 = vld [vmem:[#allocation2 + $0x220] sm:$0xf]
    %v535 = vld [vmem:[#allocation2 + $0x224] sm:$0xf]
    %v536 = vld [vmem:[#allocation2 + $0x228] sm:$0xf]
    %v537 = vld [vmem:[#allocation2 + $0x22c] sm:$0xf]
    %v538 = vld [vmem:[#allocation2 + $0x230] sm:$0xf]
    %v539 = vld [vmem:[#allocation2 + $0x234] sm:$0xf]
    %v540 = vld [vmem:[#allocation2 + $0x238] sm:$0xf]
    %v541 = vld [vmem:[#allocation2 + $0x23c] sm:$0xf]
    %v542 = vld [vmem:[#allocation2 + $0x240] sm:$0xf]
    %v543 = vld [vmem:[#allocation2 + $0x244] sm:$0xf]
    %v544 = vld [vmem:[#allocation2 + $0x248] sm:$0xf]
    %v545 = vld [vmem:[#allocation2 + $0x24c] sm:$0xf]
    %v546 = vld [vmem:[#allocation2 + $0x250] sm:$0xf]
    %v547 = vld [vmem:[#allocation2 + $0x254] sm:$0xf]
    %v548 = vld [vmem:[#allocation2 + $0x258] sm:$0xf]
    %v549 = vld [vmem:[#allocation2 + $0x25c] sm:$0xf]
    %v550 = vld [vmem:[#allocation2 + $0x260] sm:$0xf]
    %v551 = vld [vmem:[#allocation2 + $0x264] sm:$0xf]
    %v552 = vld [vmem:[#allocation2 + $0x268] sm:$0xf]
    %v553 = vld [vmem:[#allocation2 + $0x26c] sm:$0xf]
    %v554 = vld [vmem:[#allocation2 + $0x270] sm:$0xf]
    %v555 = vld [vmem:[#allocation2 + $0x274] sm:$0xf]
    %v556 = vld [vmem:[#allocation2 + $0x278] sm:$0xf]
    %v557 = vld [vmem:[#allocation2 + $0x27c] sm:$0xf]
    %v558 = vld [vmem:[#allocation2 + $0x280] sm:$0xf]
    %v559 = vld [vmem:[#allocation2 + $0x284] sm:$0xf]
    %v560 = vld [vmem:[#allocation2 + $0x288] sm:$0xf]
    %v561 = vld [vmem:[#allocation2 + $0x28c] sm:$0xf]
    %v562 = vld [vmem:[#allocation2 + $0x290] sm:$0xf]
    %v563 = vld [vmem:[#allocation2 + $0x294] sm:$0xf]
    %v564 = vld [vmem:[#allocation2 + $0x298] sm:$0xf]
    %v565 = vld [vmem:[#allocation2 + $0x29c] sm:$0xf]
    %v566 = vld [vmem:[#allocation2 + $0x2a0] sm:$0xf]
    %v567 = vld [vmem:[#allocation2 + $0x2a4] sm:$0xf]
    %v568 = vld [vmem:[#allocation2 + $0x2a8] sm:$0xf]
    %v569 = vld [vmem:[#allocation2 + $0x2ac] sm:$0xf]
    %v570 = vld [vmem:[#allocation2 + $0x2b0] sm:$0xf]
    %v571 = vld [vmem:[#allocation2 + $0x2b4] sm:$0xf]
    %v572 = vld [vmem:[#allocation2 + $0x2b8] sm:$0xf]
    %v573 = vld [vmem:[#allocation2 + $0x2bc] sm:$0xf]
    %v574 = vld [vmem:[#allocation2 + $0x2c0] sm:$0xf]
    %v575 = vld [vmem:[#allocation2 + $0x2c4] sm:$0xf]
    %v576 = vld [vmem:[#allocation2 + $0x2c8] sm:$0xf]
    %v577 = vld [vmem:[#allocation2 + $0x2cc] sm:$0xf]
    %v578 = vld [vmem:[#allocation2 + $0x2d0] sm:$0xf]
    %v579 = vld [vmem:[#allocation2 + $0x2d4] sm:$0xf]
    %v580 = vld [vmem:[#allocation2 + $0x2d8] sm:$0xf]
    %v581 = vld [vmem:[#allocation2 + $0x2dc] sm:$0xf]
    %v582 = vld [vmem:[#allocation2 + $0x2e0] sm:$0xf]
    %v583 = vld [vmem:[#allocation2 + $0x2e4] sm:$0xf]
    %v584 = vld [vmem:[#allocation2 + $0x2e8] sm:$0xf]
    %v585 = vld [vmem:[#allocation2 + $0x2ec] sm:$0xf]
    %v586 = vld [vmem:[#allocation2 + $0x2f0] sm:$0xf]
    %v587 = vld [vmem:[#allocation2 + $0x2f4] sm:$0xf]
    %v588 = vld [vmem:[#allocation2 + $0x2f8] sm:$0xf]
    %v589 = vld [vmem:[#allocation2 + $0x2fc] sm:$0xf]
    %v590 = vld [vmem:[#allocation2 + $0x300] sm:$0xf]
    %v591 = vld [vmem:[#allocation2 + $0x304] sm:$0xf]
    %v592 = vld [vmem:[#allocation2 + $0x308] sm:$0xf]
    %v593 = vld [vmem:[#allocation2 + $0x30c] sm:$0xf]
    %v594 = vld [vmem:[#allocation2 + $0x310] sm:$0xf]
    %v595 = vld [vmem:[#allocation2 + $0x314] sm:$0xf]
    %v596 = vld [vmem:[#allocation2 + $0x318] sm:$0xf]
    %v597 = vld [vmem:[#allocation2 + $0x31c] sm:$0xf]
    %v598 = vld [vmem:[#allocation2 + $0x320] sm:$0xf]
    %v599 = vld [vmem:[#allocation2 + $0x324] sm:$0xf]
    %v600 = vld [vmem:[#allocation2 + $0x328] sm:$0xf]
    %v601 = vld [vmem:[#allocation2 + $0x32c] sm:$0xf]
    %v602 = vld [vmem:[#allocation2 + $0x330] sm:$0xf]
    %v603 = vld [vmem:[#allocation2 + $0x334] sm:$0xf]
    %v604 = vld [vmem:[#allocation2 + $0x338] sm:$0xf]
    %v605 = vld [vmem:[#allocation2 + $0x33c] sm:$0xf]
    %v606 = vld [vmem:[#allocation2 + $0x340] sm:$0xf]
    %v607 = vld [vmem:[#allocation2 + $0x344] sm:$0xf]
    %v608 = vld [vmem:[#allocation2 + $0x348] sm:$0xf]
    %v609 = vld [vmem:[#allocation2 + $0x34c] sm:$0xf]
    %v610 = vld [vmem:[#allocation2 + $0x350] sm:$0xf]
    %v611 = vld [vmem:[#allocation2 + $0x354] sm:$0xf]
    %v612 = vld [vmem:[#allocation2 + $0x358] sm:$0xf]
    %v613 = vld [vmem:[#allocation2 + $0x35c] sm:$0xf]
    %v614 = vld [vmem:[#allocation2 + $0x360] sm:$0xf]
    %v615 = vld [vmem:[#allocation2 + $0x364] sm:$0xf]
    %v616 = vld [vmem:[#allocation2 + $0x368] sm:$0xf]
    %v617 = vld [vmem:[#allocation2 + $0x36c] sm:$0xf]
    %v618 = vld [vmem:[#allocation2 + $0x370] sm:$0xf]
    %v619 = vld [vmem:[#allocation2 + $0x374] sm:$0xf]
    %v620 = vld [vmem:[#allocation2 + $0x378] sm:$0xf]
    %v621 = vld [vmem:[#allocation2 + $0x37c] sm:$0xf]
    %v622 = vld [vmem:[#allocation2 + $0x380] sm:$0xf]
    %v623 = vld [vmem:[#allocation2 + $0x384] sm:$0xf]
    %v624 = vld [vmem:[#allocation2 + $0x388] sm:$0xf]
    %v625 = vld [vmem:[#allocation2 + $0x38c] sm:$0xf]
    %v626 = vld [vmem:[#allocation2 + $0x390] sm:$0xf]
    %v627 = vld [vmem:[#allocation2 + $0x394] sm:$0xf]
    %v628 = vld [vmem:[#allocation2 + $0x398] sm:$0xf]
    %v629 = vld [vmem:[#allocation2 + $0x39c] sm:$0xf]
    %v630 = vld [vmem:[#allocation2 + $0x3a0] sm:$0xf]
    %v631 = vld [vmem:[#allocation2 + $0x3a4] sm:$0xf]
    %v632 = vld [vmem:[#allocation2 + $0x3a8] sm:$0xf]
    %v633 = vld [vmem:[#allocation2 + $0x3ac] sm:$0xf]
    %v634 = vld [vmem:[#allocation2 + $0x3b0] sm:$0xf]
    %v635 = vld [vmem:[#allocation2 + $0x3b4] sm:$0xf]
    %v636 = vld [vmem:[#allocation2 + $0x3b8] sm:$0xf]
    %v637 = vld [vmem:[#allocation2 + $0x3bc] sm:$0xf]
    %v638 = vld [vmem:[#allocation2 + $0x3c0] sm:$0xf]
    %v639 = vld [vmem:[#allocation2 + $0x3c4] sm:$0xf]
    %v640 = vld [vmem:[#allocation2 + $0x3c8] sm:$0xf]
    %v641 = vld [vmem:[#allocation2 + $0x3cc] sm:$0xf]
    %v642 = vld [vmem:[#allocation2 + $0x3d0] sm:$0xf]
    %v643 = vld [vmem:[#allocation2 + $0x3d4] sm:$0xf]
    %v644 = vld [vmem:[#allocation2 + $0x3d8] sm:$0xf]
    %v645 = vld [vmem:[#allocation2 + $0x3dc] sm:$0xf]
    %v646 = vld [vmem:[#allocation2 + $0x3e0] sm:$0xf]
    %v647 = vld [vmem:[#allocation2 + $0x3e4] sm:$0xf]
    %v648 = vld [vmem:[#allocation2 + $0x3e8] sm:$0xf]
    %v649 = vld [vmem:[#allocation2 + $0x3ec] sm:$0xf]
    %v650 = vld [vmem:[#allocation2 + $0x3f0] sm:$0xf]
    %v651 = vld [vmem:[#allocation2 + $0x3f4] sm:$0xf]
    %v652 = vld [vmem:[#allocation2 + $0x3f8] sm:$0xf]
    %v653 = vld [vmem:[#allocation2 + $0x3fc] sm:$0xf]
    %v654 = vld [vmem:[#allocation2 + $0x400] sm:$0xf]
    %v655 = vld [vmem:[#allocation2 + $0x404] sm:$0xf]
    %v656 = vld [vmem:[#allocation2 + $0x408] sm:$0xf]
    %v657 = vld [vmem:[#allocation2 + $0x40c] sm:$0xf]
    %v658 = vld [vmem:[#allocation2 + $0x410] sm:$0xf]
    %v659 = vld [vmem:[#allocation2 + $0x414] sm:$0xf]
    %v660 = vld [vmem:[#allocation2 + $0x418] sm:$0xf]
    %v661 = vld [vmem:[#allocation2 + $0x41c] sm:$0xf]
    %v662 = vld [vmem:[#allocation2 + $0x420] sm:$0xf]
    %v663 = vld [vmem:[#allocation2 + $0x424] sm:$0xf]
    %v664 = vld [vmem:[#allocation2 + $0x428] sm:$0xf]
    %v665 = vld [vmem:[#allocation2 + $0x42c] sm:$0xf]
    %v666 = vld [vmem:[#allocation2 + $0x430] sm:$0xf]
    %v667 = vld [vmem:[#allocation2 + $0x434] sm:$0xf]
    %v668 = vld [vmem:[#allocation2 + $0x438] sm:$0xf]
    %v669 = vld [vmem:[#allocation2 + $0x43c] sm:$0xf]
    %v670 = vld [vmem:[#allocation2 + $0x440] sm:$0xf]
    %v671 = vld [vmem:[#allocation2 + $0x444] sm:$0xf]
    %v672 = vld [vmem:[#allocation2 + $0x448] sm:$0xf]
    %v673 = vld [vmem:[#allocation2 + $0x44c] sm:$0xf]
    %v674 = vld [vmem:[#allocation2 + $0x450] sm:$0xf]
    %v675 = vld [vmem:[#allocation2 + $0x454] sm:$0xf]
    %v676 = vld [vmem:[#allocation2 + $0x458] sm:$0xf]
    %v677 = vld [vmem:[#allocation2 + $0x45c] sm:$0xf]
    %v678 = vld [vmem:[#allocation2 + $0x460] sm:$0xf]
    %v679 = vld [vmem:[#allocation2 + $0x464] sm:$0xf]
    %v680 = vld [vmem:[#allocation2 + $0x468] sm:$0xf]
    %v681 = vld [vmem:[#allocation2 + $0x46c] sm:$0xf]
    %v682 = vld [vmem:[#allocation2 + $0x470] sm:$0xf]
    %v683 = vld [vmem:[#allocation2 + $0x474] sm:$0xf]
    %v684 = vld [vmem:[#allocation2 + $0x478] sm:$0xf]
    %v685 = vld [vmem:[#allocation2 + $0x47c] sm:$0xf]
    %v974 = vunpack.c.l.b16 %v398
    %v975 = vunpack.c.l.b16 %v399
    %v976 = vunpack.c.l.b16 %v400
    %v977 = vunpack.c.l.b16 %v401
    %v978 = vunpack.c.l.b16 %v402
    %v979 = vunpack.c.l.b16 %v403
    %v980 = vunpack.c.l.b16 %v404
    %v981 = vunpack.c.l.b16 %v405
    %v982 = vunpack.c.l.b16 %v406
    %v983 = vunpack.c.l.b16 %v407
    %v984 = vunpack.c.l.b16 %v408
    %v985 = vunpack.c.l.b16 %v409
    %v986 = vunpack.c.l.b16 %v410
    %v987 = vunpack.c.l.b16 %v411
    %v988 = vunpack.c.l.b16 %v412
    %v989 = vunpack.c.l.b16 %v413
    %v990 = vunpack.c.l.b16 %v414
    %v991 = vunpack.c.l.b16 %v415
    %v992 = vunpack.c.l.b16 %v416
    %v993 = vunpack.c.l.b16 %v417
    %v994 = vunpack.c.l.b16 %v418
    %v995 = vunpack.c.l.b16 %v419
    %v996 = vunpack.c.l.b16 %v420
    %v997 = vunpack.c.l.b16 %v421
    %v998 = vunpack.c.l.b16 %v422
    %v999 = vunpack.c.l.b16 %v423
    %v1000 = vunpack.c.l.b16 %v424
    %v1001 = vunpack.c.l.b16 %v425
    %v1002 = vunpack.c.l.b16 %v426
    %v1003 = vunpack.c.l.b16 %v427
    %v1004 = vunpack.c.l.b16 %v428
    %v1005 = vunpack.c.l.b16 %v429
    %v1006 = vunpack.c.l.b16 %v430
    %v1007 = vunpack.c.l.b16 %v431
    %v1008 = vunpack.c.l.b16 %v432
    %v1009 = vunpack.c.l.b16 %v433
    %v1010 = vunpack.c.l.b16 %v434
    %v1011 = vunpack.c.l.b16 %v435
    %v1012 = vunpack.c.l.b16 %v436
    %v1013 = vunpack.c.l.b16 %v437
    %v1014 = vunpack.c.l.b16 %v438
    %v1015 = vunpack.c.l.b16 %v439
    %v1016 = vunpack.c.l.b16 %v440
    %v1017 = vunpack.c.l.b16 %v441
    %v1018 = vunpack.c.l.b16 %v442
    %v1019 = vunpack.c.l.b16 %v443
    %v1020 = vunpack.c.l.b16 %v444
    %v1021 = vunpack.c.l.b16 %v445
    %v1022 = vunpack.c.l.b16 %v446
    %v1023 = vunpack.c.l.b16 %v447
    %v1024 = vunpack.c.l.b16 %v448
    %v1025 = vunpack.c.l.b16 %v449
    %v1026 = vunpack.c.l.b16 %v450
    %v1027 = vunpack.c.l.b16 %v451
    %v1028 = vunpack.c.l.b16 %v452
    %v1029 = vunpack.c.l.b16 %v453
    %v1030 = vunpack.c.l.b16 %v454
    %v1031 = vunpack.c.l.b16 %v455
    %v1032 = vunpack.c.l.b16 %v456
    %v1033 = vunpack.c.l.b16 %v457
    %v1034 = vunpack.c.l.b16 %v458
    %v1035 = vunpack.c.l.b16 %v459
    %v1036 = vunpack.c.l.b16 %v460
    %v1037 = vunpack.c.l.b16 %v461
    %v1038 = vunpack.c.l.b16 %v462
    %v1039 = vunpack.c.l.b16 %v463
    %v1040 = vunpack.c.l.b16 %v464
    %v1041 = vunpack.c.l.b16 %v465
    %v1042 = vunpack.c.l.b16 %v466
    %v1043 = vunpack.c.l.b16 %v467
    %v1044 = vunpack.c.l.b16 %v468
    %v1045 = vunpack.c.l.b16 %v469
    %v1046 = vunpack.c.l.b16 %v470
    %v1047 = vunpack.c.l.b16 %v471
    %v1048 = vunpack.c.l.b16 %v472
    %v1049 = vunpack.c.l.b16 %v473
    %v1050 = vunpack.c.l.b16 %v474
    %v1051 = vunpack.c.l.b16 %v475
    %v1052 = vunpack.c.l.b16 %v476
    %v1053 = vunpack.c.l.b16 %v477
    %v1054 = vunpack.c.l.b16 %v478
    %v1055 = vunpack.c.l.b16 %v479
    %v1056 = vunpack.c.l.b16 %v480
    %v1057 = vunpack.c.l.b16 %v481
    %v1058 = vunpack.c.l.b16 %v482
    %v1059 = vunpack.c.l.b16 %v483
    %v1060 = vunpack.c.l.b16 %v484
    %v1061 = vunpack.c.l.b16 %v485
    %v1062 = vunpack.c.l.b16 %v486
    %v1063 = vunpack.c.l.b16 %v487
    %v1064 = vunpack.c.l.b16 %v488
    %v1065 = vunpack.c.l.b16 %v489
    %v1066 = vunpack.c.l.b16 %v490
    %v1067 = vunpack.c.l.b16 %v491
    %v1068 = vunpack.c.l.b16 %v492
    %v1069 = vunpack.c.l.b16 %v493
    %v1070 = vunpack.c.l.b16 %v494
    %v1071 = vunpack.c.l.b16 %v495
    %v1072 = vunpack.c.l.b16 %v496
    %v1073 = vunpack.c.l.b16 %v497
    %v1074 = vunpack.c.l.b16 %v498
    %v1075 = vunpack.c.l.b16 %v499
    %v1076 = vunpack.c.l.b16 %v500
    %v1077 = vunpack.c.l.b16 %v501
    %v1078 = vunpack.c.l.b16 %v502
    %v1079 = vunpack.c.l.b16 %v503
    %v1080 = vunpack.c.l.b16 %v504
    %v1081 = vunpack.c.l.b16 %v505
    %v1082 = vunpack.c.l.b16 %v506
    %v1083 = vunpack.c.l.b16 %v507
    %v1084 = vunpack.c.l.b16 %v508
    %v1085 = vunpack.c.l.b16 %v509
    %v1086 = vunpack.c.l.b16 %v510
    %v1087 = vunpack.c.l.b16 %v511
    %v1088 = vunpack.c.l.b16 %v512
    %v1089 = vunpack.c.l.b16 %v513
    %v1090 = vunpack.c.l.b16 %v514
    %v1091 = vunpack.c.l.b16 %v515
    %v1092 = vunpack.c.l.b16 %v516
    %v1093 = vunpack.c.l.b16 %v517
    %v1094 = vunpack.c.l.b16 %v518
    %v1095 = vunpack.c.l.b16 %v519
    %v1096 = vunpack.c.l.b16 %v520
    %v1097 = vunpack.c.l.b16 %v521
    %v1098 = vunpack.c.l.b16 %v522
    %v1099 = vunpack.c.l.b16 %v523
    %v1100 = vunpack.c.l.b16 %v524
    %v1101 = vunpack.c.l.b16 %v525
    %v1102 = vunpack.c.l.b16 %v526
    %v1103 = vunpack.c.l.b16 %v527
    %v1104 = vunpack.c.l.b16 %v528
    %v1105 = vunpack.c.l.b16 %v529
    %v1106 = vunpack.c.l.b16 %v530
    %v1107 = vunpack.c.l.b16 %v531
    %v1108 = vunpack.c.l.b16 %v532
    %v1109 = vunpack.c.l.b16 %v533
    %v1110 = vunpack.c.l.b16 %v534
    %v1111 = vunpack.c.l.b16 %v535
    %v1112 = vunpack.c.l.b16 %v536
    %v1113 = vunpack.c.l.b16 %v537
    %v1114 = vunpack.c.l.b16 %v538
    %v1115 = vunpack.c.l.b16 %v539
    %v1116 = vunpack.c.l.b16 %v540
    %v1117 = vunpack.c.l.b16 %v541
    %v1118 = vunpack.c.l.b16 %v542
    %v1119 = vunpack.c.l.b16 %v543
    %v1120 = vunpack.c.l.b16 %v544
    %v1121 = vunpack.c.l.b16 %v545
    %v1122 = vunpack.c.l.b16 %v546
    %v1123 = vunpack.c.l.b16 %v547
    %v1124 = vunpack.c.l.b16 %v548
    %v1125 = vunpack.c.l.b16 %v549
    %v1126 = vunpack.c.l.b16 %v550
    %v1127 = vunpack.c.l.b16 %v551
    %v1128 = vunpack.c.l.b16 %v552
    %v1129 = vunpack.c.l.b16 %v553
    %v1130 = vunpack.c.l.b16 %v554
    %v1131 = vunpack.c.l.b16 %v555
    %v1132 = vunpack.c.l.b16 %v556
    %v1133 = vunpack.c.l.b16 %v557
    %v1134 = vunpack.c.l.b16 %v558
    %v1135 = vunpack.c.l.b16 %v559
    %v1136 = vunpack.c.l.b16 %v560
    %v1137 = vunpack.c.l.b16 %v561
    %v1138 = vunpack.c.l.b16 %v562
    %v1139 = vunpack.c.l.b16 %v563
    %v1140 = vunpack.c.l.b16 %v564
    %v1141 = vunpack.c.l.b16 %v565
    %v1142 = vunpack.c.l.b16 %v566
    %v1143 = vunpack.c.l.b16 %v567
    %v1144 = vunpack.c.l.b16 %v568
    %v1145 = vunpack.c.l.b16 %v569
    %v1146 = vunpack.c.l.b16 %v570
    %v1147 = vunpack.c.l.b16 %v571
    %v1148 = vunpack.c.l.b16 %v572
    %v1149 = vunpack.c.l.b16 %v573
    %v1150 = vunpack.c.l.b16 %v574
    %v1151 = vunpack.c.l.b16 %v575
    %v1152 = vunpack.c.l.b16 %v576
    %v1153 = vunpack.c.l.b16 %v577
    %v1154 = vunpack.c.l.b16 %v578
    %v1155 = vunpack.c.l.b16 %v579
    %v1156 = vunpack.c.l.b16 %v580
    %v1157 = vunpack.c.l.b16 %v581
    %v1158 = vunpack.c.l.b16 %v582
    %v1159 = vunpack.c.l.b16 %v583
    %v1160 = vunpack.c.l.b16 %v584
    %v1161 = vunpack.c.l.b16 %v585
    %v1162 = vunpack.c.l.b16 %v586
    %v1163 = vunpack.c.l.b16 %v587
    %v1164 = vunpack.c.l.b16 %v588
    %v1165 = vunpack.c.l.b16 %v589
    %v1166 = vunpack.c.l.b16 %v590
    %v1167 = vunpack.c.l.b16 %v591
    %v1168 = vunpack.c.l.b16 %v592
    %v1169 = vunpack.c.l.b16 %v593
    %v1170 = vunpack.c.l.b16 %v594
    %v1171 = vunpack.c.l.b16 %v595
    %v1172 = vunpack.c.l.b16 %v596
    %v1173 = vunpack.c.l.b16 %v597
    %v1174 = vunpack.c.l.b16 %v598
    %v1175 = vunpack.c.l.b16 %v599
    %v1176 = vunpack.c.l.b16 %v600
    %v1177 = vunpack.c.l.b16 %v601
    %v1178 = vunpack.c.l.b16 %v602
    %v1179 = vunpack.c.l.b16 %v603
    %v1180 = vunpack.c.l.b16 %v604
    %v1181 = vunpack.c.l.b16 %v605
    %v1182 = vunpack.c.l.b16 %v606
    %v1183 = vunpack.c.l.b16 %v607
    %v1184 = vunpack.c.l.b16 %v608
    %v1185 = vunpack.c.l.b16 %v609
    %v1186 = vunpack.c.l.b16 %v610
    %v1187 = vunpack.c.l.b16 %v611
    %v1188 = vunpack.c.l.b16 %v612
    %v1189 = vunpack.c.l.b16 %v613
    %v1190 = vunpack.c.l.b16 %v614
    %v1191 = vunpack.c.l.b16 %v615
    %v1192 = vunpack.c.l.b16 %v616
    %v1193 = vunpack.c.l.b16 %v617
    %v1194 = vunpack.c.l.b16 %v618
    %v1195 = vunpack.c.l.b16 %v619
    %v1196 = vunpack.c.l.b16 %v620
    %v1197 = vunpack.c.l.b16 %v621
    %v1198 = vunpack.c.l.b16 %v622
    %v1199 = vunpack.c.l.b16 %v623
    %v1200 = vunpack.c.l.b16 %v624
    %v1201 = vunpack.c.l.b16 %v625
    %v1202 = vunpack.c.l.b16 %v626
    %v1203 = vunpack.c.l.b16 %v627
    %v1204 = vunpack.c.l.b16 %v628
    %v1205 = vunpack.c.l.b16 %v629
    %v1206 = vunpack.c.l.b16 %v630
    %v1207 = vunpack.c.l.b16 %v631
    %v1208 = vunpack.c.l.b16 %v632
    %v1209 = vunpack.c.l.b16 %v633
    %v1210 = vunpack.c.l.b16 %v634
    %v1211 = vunpack.c.l.b16 %v635
    %v1212 = vunpack.c.l.b16 %v636
    %v1213 = vunpack.c.l.b16 %v637
    %v1214 = vunpack.c.l.b16 %v638
    %v1215 = vunpack.c.l.b16 %v639
    %v1216 = vunpack.c.l.b16 %v640
    %v1217 = vunpack.c.l.b16 %v641
    %v1218 = vunpack.c.l.b16 %v642
    %v1219 = vunpack.c.l.b16 %v643
    %v1220 = vunpack.c.l.b16 %v644
    %v1221 = vunpack.c.l.b16 %v645
    %v1222 = vunpack.c.l.b16 %v646
    %v1223 = vunpack.c.l.b16 %v647
    %v1224 = vunpack.c.l.b16 %v648
    %v1225 = vunpack.c.l.b16 %v649
    %v1226 = vunpack.c.l.b16 %v650
    %v1227 = vunpack.c.l.b16 %v651
    %v1228 = vunpack.c.l.b16 %v652
    %v1229 = vunpack.c.l.b16 %v653
    %v1230 = vunpack.c.l.b16 %v654
    %v1231 = vunpack.c.l.b16 %v655
    %v1232 = vunpack.c.l.b16 %v656
    %v1233 = vunpack.c.l.b16 %v657
    %v1234 = vunpack.c.l.b16 %v658
    %v1235 = vunpack.c.l.b16 %v659
    %v1236 = vunpack.c.l.b16 %v660
    %v1237 = vunpack.c.l.b16 %v661
    %v1238 = vunpack.c.l.b16 %v662
    %v1239 = vunpack.c.l.b16 %v663
    %v1240 = vunpack.c.l.b16 %v664
    %v1241 = vunpack.c.l.b16 %v665
    %v1242 = vunpack.c.l.b16 %v666
    %v1243 = vunpack.c.l.b16 %v667
    %v1244 = vunpack.c.l.b16 %v668
    %v1245 = vunpack.c.l.b16 %v669
    %v1246 = vunpack.c.l.b16 %v670
    %v1247 = vunpack.c.l.b16 %v671
    %v1248 = vunpack.c.l.b16 %v672
    %v1249 = vunpack.c.l.b16 %v673
    %v1250 = vunpack.c.l.b16 %v674
    %v1251 = vunpack.c.l.b16 %v675
    %v1252 = vunpack.c.l.b16 %v676
    %v1253 = vunpack.c.l.b16 %v677
    %v1254 = vunpack.c.l.b16 %v678
    %v1255 = vunpack.c.l.b16 %v679
    %v1256 = vunpack.c.l.b16 %v680
    %v1257 = vunpack.c.l.b16 %v681
    %v1258 = vunpack.c.l.b16 %v682
    %v1259 = vunpack.c.l.b16 %v683
    %v1260 = vunpack.c.l.b16 %v684
    %v1261 = vunpack.c.l.b16 %v685
    %v1262 = vpack.c.b16 %v975, %v974
    %v1263 = vpack.c.b16 %v977, %v976
    %v1264 = vpack.c.b16 %v979, %v978
    %v1265 = vpack.c.b16 %v981, %v980
    %v1266 = vpack.c.b16 %v983, %v982
    %v1267 = vpack.c.b16 %v985, %v984
    %v1268 = vpack.c.b16 %v987, %v986
    %v1269 = vpack.c.b16 %v989, %v988
    %v1270 = vpack.c.b16 %v991, %v990
    %v1271 = vpack.c.b16 %v993, %v992
    %v1272 = vpack.c.b16 %v995, %v994
    %v1273 = vpack.c.b16 %v997, %v996
    %v1274 = vpack.c.b16 %v999, %v998
    %v1275 = vpack.c.b16 %v1001, %v1000
    %v1276 = vpack.c.b16 %v1003, %v1002
    %v1277 = vpack.c.b16 %v1005, %v1004
    %v1278 = vpack.c.b16 %v1007, %v1006
    %v1279 = vpack.c.b16 %v1009, %v1008
    %v1280 = vpack.c.b16 %v1011, %v1010
    %v1281 = vpack.c.b16 %v1013, %v1012
    %v1282 = vpack.c.b16 %v1015, %v1014
    %v1283 = vpack.c.b16 %v1017, %v1016
    %v1284 = vpack.c.b16 %v1019, %v1018
    %v1285 = vpack.c.b16 %v1021, %v1020
    %v1286 = vpack.c.b16 %v1023, %v1022
    %v1287 = vpack.c.b16 %v1025, %v1024
    %v1288 = vpack.c.b16 %v1027, %v1026
    %v1289 = vpack.c.b16 %v1029, %v1028
    %v1290 = vpack.c.b16 %v1031, %v1030
    %v1291 = vpack.c.b16 %v1033, %v1032
    %v1292 = vpack.c.b16 %v1035, %v1034
    %v1293 = vpack.c.b16 %v1037, %v1036
    %v1294 = vpack.c.b16 %v1039, %v1038
    %v1295 = vpack.c.b16 %v1041, %v1040
    %v1296 = vpack.c.b16 %v1043, %v1042
    %v1297 = vpack.c.b16 %v1045, %v1044
    %v1298 = vpack.c.b16 %v1047, %v1046
    %v1299 = vpack.c.b16 %v1049, %v1048
    %v1300 = vpack.c.b16 %v1051, %v1050
    %v1301 = vpack.c.b16 %v1053, %v1052
    %v1302 = vpack.c.b16 %v1055, %v1054
    %v1303 = vpack.c.b16 %v1057, %v1056
    %v1304 = vpack.c.b16 %v1059, %v1058
    %v1305 = vpack.c.b16 %v1061, %v1060
    %v1306 = vpack.c.b16 %v1063, %v1062
    %v1307 = vpack.c.b16 %v1065, %v1064
    %v1308 = vpack.c.b16 %v1067, %v1066
    %v1309 = vpack.c.b16 %v1069, %v1068
    %v1310 = vpack.c.b16 %v1071, %v1070
    %v1311 = vpack.c.b16 %v1073, %v1072
    %v1312 = vpack.c.b16 %v1075, %v1074
    %v1313 = vpack.c.b16 %v1077, %v1076
    %v1314 = vpack.c.b16 %v1079, %v1078
    %v1315 = vpack.c.b16 %v1081, %v1080
    %v1316 = vpack.c.b16 %v1083, %v1082
    %v1317 = vpack.c.b16 %v1085, %v1084
    %v1318 = vpack.c.b16 %v1087, %v1086
    %v1319 = vpack.c.b16 %v1089, %v1088
    %v1320 = vpack.c.b16 %v1091, %v1090
    %v1321 = vpack.c.b16 %v1093, %v1092
    %v1322 = vpack.c.b16 %v1095, %v1094
    %v1323 = vpack.c.b16 %v1097, %v1096
    %v1324 = vpack.c.b16 %v1099, %v1098
    %v1325 = vpack.c.b16 %v1101, %v1100
    %v1326 = vpack.c.b16 %v1103, %v1102
    %v1327 = vpack.c.b16 %v1105, %v1104
    %v1328 = vpack.c.b16 %v1107, %v1106
    %v1329 = vpack.c.b16 %v1109, %v1108
    %v1330 = vpack.c.b16 %v1111, %v1110
    %v1331 = vpack.c.b16 %v1113, %v1112
    %v1332 = vpack.c.b16 %v1115, %v1114
    %v1333 = vpack.c.b16 %v1117, %v1116
    %v1334 = vpack.c.b16 %v1119, %v1118
    %v1335 = vpack.c.b16 %v1121, %v1120
    %v1336 = vpack.c.b16 %v1123, %v1122
    %v1337 = vpack.c.b16 %v1125, %v1124
    %v1338 = vpack.c.b16 %v1127, %v1126
    %v1339 = vpack.c.b16 %v1129, %v1128
    %v1340 = vpack.c.b16 %v1131, %v1130
    %v1341 = vpack.c.b16 %v1133, %v1132
    %v1342 = vpack.c.b16 %v1135, %v1134
    %v1343 = vpack.c.b16 %v1137, %v1136
    %v1344 = vpack.c.b16 %v1139, %v1138
    %v1345 = vpack.c.b16 %v1141, %v1140
    %v1346 = vpack.c.b16 %v1143, %v1142
    %v1347 = vpack.c.b16 %v1145, %v1144
    %v1348 = vpack.c.b16 %v1147, %v1146
    %v1349 = vpack.c.b16 %v1149, %v1148
    %v1350 = vpack.c.b16 %v1151, %v1150
    %v1351 = vpack.c.b16 %v1153, %v1152
    %v1352 = vpack.c.b16 %v1155, %v1154
    %v1353 = vpack.c.b16 %v1157, %v1156
    %v1354 = vpack.c.b16 %v1159, %v1158
    %v1355 = vpack.c.b16 %v1161, %v1160
    %v1356 = vpack.c.b16 %v1163, %v1162
    %v1357 = vpack.c.b16 %v1165, %v1164
    %v1358 = vpack.c.b16 %v1167, %v1166
    %v1359 = vpack.c.b16 %v1169, %v1168
    %v1360 = vpack.c.b16 %v1171, %v1170
    %v1361 = vpack.c.b16 %v1173, %v1172
    %v1362 = vpack.c.b16 %v1175, %v1174
    %v1363 = vpack.c.b16 %v1177, %v1176
    %v1364 = vpack.c.b16 %v1179, %v1178
    %v1365 = vpack.c.b16 %v1181, %v1180
    %v1366 = vpack.c.b16 %v1183, %v1182
    %v1367 = vpack.c.b16 %v1185, %v1184
    %v1368 = vpack.c.b16 %v1187, %v1186
    %v1369 = vpack.c.b16 %v1189, %v1188
    %v1370 = vpack.c.b16 %v1191, %v1190
    %v1371 = vpack.c.b16 %v1193, %v1192
    %v1372 = vpack.c.b16 %v1195, %v1194
    %v1373 = vpack.c.b16 %v1197, %v1196
    %v1374 = vpack.c.b16 %v1199, %v1198
    %v1375 = vpack.c.b16 %v1201, %v1200
    %v1376 = vpack.c.b16 %v1203, %v1202
    %v1377 = vpack.c.b16 %v1205, %v1204
    %v1378 = vpack.c.b16 %v1207, %v1206
    %v1379 = vpack.c.b16 %v1209, %v1208
    %v1380 = vpack.c.b16 %v1211, %v1210
    %v1381 = vpack.c.b16 %v1213, %v1212
    %v1382 = vpack.c.b16 %v1215, %v1214
    %v1383 = vpack.c.b16 %v1217, %v1216
    %v1384 = vpack.c.b16 %v1219, %v1218
    %v1385 = vpack.c.b16 %v1221, %v1220
    %v1386 = vpack.c.b16 %v1223, %v1222
    %v1387 = vpack.c.b16 %v1225, %v1224
    %v1388 = vpack.c.b16 %v1227, %v1226
    %v1389 = vpack.c.b16 %v1229, %v1228
    %v1390 = vpack.c.b16 %v1231, %v1230
    %v1391 = vpack.c.b16 %v1233, %v1232
    %v1392 = vpack.c.b16 %v1235, %v1234
    %v1393 = vpack.c.b16 %v1237, %v1236
    %v1394 = vpack.c.b16 %v1239, %v1238
    %v1395 = vpack.c.b16 %v1241, %v1240
    %v1396 = vpack.c.b16 %v1243, %v1242
    %v1397 = vpack.c.b16 %v1245, %v1244
    %v1398 = vpack.c.b16 %v1247, %v1246
    %v1399 = vpack.c.b16 %v1249, %v1248
    %v1400 = vpack.c.b16 %v1251, %v1250
    %v1401 = vpack.c.b16 %v1253, %v1252
    %v1402 = vpack.c.b16 %v1255, %v1254
    %v1403 = vpack.c.b16 %v1257, %v1256
    %v1404 = vpack.c.b16 %v1259, %v1258
    %v1405 = vpack.c.b16 %v1261, %v1260
    %1550 = vmatprep.subr.bf16.mxu0 0
    %1551 = vmatpush1.bf16.msra.mxu0 %v1262
    %1552 = vmatprep.subr.bf16.mxu0 0
    %1553 = vmatpush1.bf16.msra.mxu0 %v1263
    %1554 = vmatprep.subr.bf16.mxu0 0
    %1555 = vmatpush1.bf16.msra.mxu0 %v1264
    %1556 = vmatprep.subr.bf16.mxu0 0
    %1557 = vmatpush1.bf16.msra.mxu0 %v1265
    %1558 = vmatprep.subr.bf16.mxu0 0
    %1559 = vmatpush1.bf16.msra.mxu0 %v1266
    %1560 = vmatprep.subr.bf16.mxu0 0
    %1561 = vmatpush1.bf16.msra.mxu0 %v1267
    %1562 = vmatprep.subr.bf16.mxu0 0
    %1563 = vmatpush1.bf16.msra.mxu0 %v1268
    %1564 = vmatprep.subr.bf16.mxu0 0
    %1565 = vmatpush1.bf16.msra.mxu0 %v1269
    %1566 = vmatprep.subr.bf16.mxu0 0
    %1567 = vmatpush1.bf16.msra.mxu0 %v1270
    %1568 = vmatprep.subr.bf16.mxu0 0
    %1569 = vmatpush1.bf16.msra.mxu0 %v1271
    %1570 = vmatprep.subr.bf16.mxu0 0
    %1571 = vmatpush1.bf16.msra.mxu0 %v1272
    %1572 = vmatprep.subr.bf16.mxu0 0
    %1573 = vmatpush1.bf16.msra.mxu0 %v1273
    %1574 = vmatprep.subr.bf16.mxu0 0
    %1575 = vmatpush1.bf16.msra.mxu0 %v1274
    %1576 = vmatprep.subr.bf16.mxu0 0
    %1577 = vmatpush1.bf16.msra.mxu0 %v1275
    %1578 = vmatprep.subr.bf16.mxu0 0
    %1579 = vmatpush1.bf16.msra.mxu0 %v1276
    %1580 = vmatprep.subr.bf16.mxu0 0
    %1581 = vmatpush1.bf16.msra.mxu0 %v1277
    %1582 = vmatprep.mubr.bf16.mxu0 %v213
    %1583 = vmatmul.mubr.bf16.gmra.mrb[0].mxu0 %v212
    %v1584 = vpop.f32.mrb[0].mxu0
    %v1585 = vadd.f32 0.0, %v1584
    %v1586 = vpop.f32.mrb[0].mxu0
    %v1587 = vpop.f32.mrb[0].mxu0
    %v1588 = vpop.f32.mrb[0].mxu0
    %1589 = vdwg.mxu0
    %1590 = vmatprep.subr.bf16.mxu0 0
    %1591 = vmatpush1.bf16.msra.mxu0 %v1278
    %1592 = vmatprep.subr.bf16.mxu0 0
    %1593 = vmatpush1.bf16.msra.mxu0 %v1279
    %1594 = vmatprep.subr.bf16.mxu0 0
    %1595 = vmatpush1.bf16.msra.mxu0 %v1280
    %1596 = vmatprep.subr.bf16.mxu0 0
    %1597 = vmatpush1.bf16.msra.mxu0 %v1281
    %1598 = vmatprep.subr.bf16.mxu0 0
    %1599 = vmatpush1.bf16.msra.mxu0 %v1282
    %1600 = vmatprep.subr.bf16.mxu0 0
    %1601 = vmatpush1.bf16.msra.mxu0 %v1283
    %1602 = vmatprep.subr.bf16.mxu0 0
    %1603 = vmatpush1.bf16.msra.mxu0 %v1284
    %1604 = vmatprep.subr.bf16.mxu0 0
    %1605 = vmatpush1.bf16.msra.mxu0 %v1285
    %1606 = vmatprep.subr.bf16.mxu0 0
    %1607 = vmatpush1.bf16.msra.mxu0 %v1286
    %1608 = vmatprep.subr.bf16.mxu0 0
    %1609 = vmatpush1.bf16.msra.mxu0 %v1287
    %1610 = vmatprep.subr.bf16.mxu0 0
    %1611 = vmatpush1.bf16.msra.mxu0 %v1288
    %1612 = vmatprep.subr.bf16.mxu0 0
    %1613 = vmatpush1.bf16.msra.mxu0 %v1289
    %1614 = vmatprep.subr.bf16.mxu0 0
    %1615 = vmatpush1.bf16.msra.mxu0 %v1290
    %1616 = vmatprep.subr.bf16.mxu0 0
    %1617 = vmatpush1.bf16.msra.mxu0 %v1291
    %1618 = vmatprep.subr.bf16.mxu0 0
    %1619 = vmatpush1.bf16.msra.mxu0 %v1292
    %1620 = vmatprep.subr.bf16.mxu0 0
    %1621 = vmatpush1.bf16.msra.mxu0 %v1293
    %1622 = vmatprep.mubr.bf16.mxu0 %v383
    %1623 = vmatmul.mubr.bf16.gmra.mrb[0].mxu0 %v382
    %v1624 = vpop.f32.mrb[0].mxu0
    %v1625 = vadd.f32 %v1585, %v1624
    %v1626 = vpop.f32.mrb[0].mxu0
    %v1627 = vpop.f32.mrb[0].mxu0
    %v1628 = vpop.f32.mrb[0].mxu0
    %1629 = vdwg.mxu0
    %1630 = vmatprep.subr.bf16.mxu0 0
    %1631 = vmatpush1.bf16.msra.mxu0 %v1294
    %1632 = vmatprep.subr.bf16.mxu0 0
    %1633 = vmatpush1.bf16.msra.mxu0 %v1295
    %1634 = vmatprep.subr.bf16.mxu0 0
    %1635 = vmatpush1.bf16.msra.mxu0 %v1296
    %1636 = vmatprep.subr.bf16.mxu0 0
    %1637 = vmatpush1.bf16.msra.mxu0 %v1297
    %1638 = vmatprep.subr.bf16.mxu0 0
    %1639 = vmatpush1.bf16.msra.mxu0 %v1298
    %1640 = vmatprep.subr.bf16.mxu0 0
    %1641 = vmatpush1.bf16.msra.mxu0 %v1299
    %1642 = vmatprep.subr.bf16.mxu0 0
    %1643 = vmatpush1.bf16.msra.mxu0 %v1300
    %1644 = vmatprep.subr.bf16.mxu0 0
    %1645 = vmatpush1.bf16.msra.mxu0 %v1301
    %1646 = vmatprep.subr.bf16.mxu0 0
    %1647 = vmatpush1.bf16.msra.mxu0 %v1302
    %1648 = vmatprep.subr.bf16.mxu0 0
    %1649 = vmatpush1.bf16.msra.mxu0 %v1303
    %1650 = vmatprep.subr.bf16.mxu0 0
    %1651 = vmatpush1.bf16.msra.mxu0 %v1304
    %1652 = vmatprep.subr.bf16.mxu0 0
    %1653 = vmatpush1.bf16.msra.mxu0 %v1305
    %1654 = vmatprep.subr.bf16.mxu0 0
    %1655 = vmatpush1.bf16.msra.mxu0 %v1306
    %1656 = vmatprep.subr.bf16.mxu0 0
    %1657 = vmatpush1.bf16.msra.mxu0 %v1307
    %1658 = vmatprep.subr.bf16.mxu0 0
    %1659 = vmatpush1.bf16.msra.mxu0 %v1308
    %1660 = vmatprep.subr.bf16.mxu0 0
    %1661 = vmatpush1.bf16.msra.mxu0 %v1309
    %1662 = vmatprep.mubr.bf16.mxu0 %v385
    %1663 = vmatmul.mubr.bf16.gmra.mrb[0].mxu0 %v384
    %v1664 = vpop.f32.mrb[0].mxu0
    %v1665 = vadd.f32 %v1625, %v1664
    %v1666 = vpop.f32.mrb[0].mxu0
    %v1667 = vpop.f32.mrb[0].mxu0
    %v1668 = vpop.f32.mrb[0].mxu0
    %1669 = vdwg.mxu0
    %1670 = vmatprep.subr.bf16.mxu0 0
    %1671 = vmatpush1.bf16.msra.mxu0 %v1310
    %1672 = vmatprep.subr.bf16.mxu0 0
    %1673 = vmatpush1.bf16.msra.mxu0 %v1311
    %1674 = vmatprep.subr.bf16.mxu0 0
    %1675 = vmatpush1.bf16.msra.mxu0 %v1312
    %1676 = vmatprep.subr.bf16.mxu0 0
    %1677 = vmatpush1.bf16.msra.mxu0 %v1313
    %1678 = vmatprep.subr.bf16.mxu0 0
    %1679 = vmatpush1.bf16.msra.mxu0 %v1314
    %1680 = vmatprep.subr.bf16.mxu0 0
    %1681 = vmatpush1.bf16.msra.mxu0 %v1315
    %1682 = vmatprep.subr.bf16.mxu0 0
    %1683 = vmatpush1.bf16.msra.mxu0 %v1316
    %1684 = vmatprep.subr.bf16.mxu0 0
    %1685 = vmatpush1.bf16.msra.mxu0 %v1317
    %1686 = vmatprep.subr.bf16.mxu0 0
    %1687 = vmatpush1.bf16.msra.mxu0 %v1318
    %1688 = vmatprep.subr.bf16.mxu0 0
    %1689 = vmatpush1.bf16.msra.mxu0 %v1319
    %1690 = vmatprep.subr.bf16.mxu0 0
    %1691 = vmatpush1.bf16.msra.mxu0 %v1320
    %1692 = vmatprep.subr.bf16.mxu0 0
    %1693 = vmatpush1.bf16.msra.mxu0 %v1321
    %1694 = vmatprep.subr.bf16.mxu0 0
    %1695 = vmatpush1.bf16.msra.mxu0 %v1322
    %1696 = vmatprep.subr.bf16.mxu0 0
    %1697 = vmatpush1.bf16.msra.mxu0 %v1323
    %1698 = vmatprep.subr.bf16.mxu0 0
    %1699 = vmatpush1.bf16.msra.mxu0 %v1324
    %1700 = vmatprep.subr.bf16.mxu0 0
    %1701 = vmatpush1.bf16.msra.mxu0 %v1325
    %1702 = vmatprep.mubr.bf16.mxu0 %v387
    %1703 = vmatmul.mubr.bf16.gmra.mrb[0].mxu0 %v386
    %v1704 = vpop.f32.mrb[0].mxu0
    %v1705 = vadd.f32 %v1665, %v1704
    %v1706 = vpop.f32.mrb[0].mxu0
    %v1707 = vpop.f32.mrb[0].mxu0
    %v1708 = vpop.f32.mrb[0].mxu0
    %1709 = vdwg.mxu0
    %1710 = vmatprep.subr.bf16.mxu0 0
    %1711 = vmatpush1.bf16.msra.mxu0 %v1326
    %1712 = vmatprep.subr.bf16.mxu0 0
    %1713 = vmatpush1.bf16.msra.mxu0 %v1327
    %1714 = vmatprep.subr.bf16.mxu0 0
    %1715 = vmatpush1.bf16.msra.mxu0 %v1328
    %1716 = vmatprep.subr.bf16.mxu0 0
    %1717 = vmatpush1.bf16.msra.mxu0 %v1329
    %1718 = vmatprep.subr.bf16.mxu0 0
    %1719 = vmatpush1.bf16.msra.mxu0 %v1330
    %1720 = vmatprep.subr.bf16.mxu0 0
    %1721 = vmatpush1.bf16.msra.mxu0 %v1331
    %1722 = vmatprep.subr.bf16.mxu0 0
    %1723 = vmatpush1.bf16.msra.mxu0 %v1332
    %1724 = vmatprep.subr.bf16.mxu0 0
    %1725 = vmatpush1.bf16.msra.mxu0 %v1333
    %1726 = vmatprep.subr.bf16.mxu0 0
    %1727 = vmatpush1.bf16.msra.mxu0 %v1334
    %1728 = vmatprep.subr.bf16.mxu0 0
    %1729 = vmatpush1.bf16.msra.mxu0 %v1335
    %1730 = vmatprep.subr.bf16.mxu0 0
    %1731 = vmatpush1.bf16.msra.mxu0 %v1336
    %1732 = vmatprep.subr.bf16.mxu0 0
    %1733 = vmatpush1.bf16.msra.mxu0 %v1337
    %1734 = vmatprep.subr.bf16.mxu0 0
    %1735 = vmatpush1.bf16.msra.mxu0 %v1338
    %1736 = vmatprep.subr.bf16.mxu0 0
    %1737 = vmatpush1.bf16.msra.mxu0 %v1339
    %1738 = vmatprep.subr.bf16.mxu0 0
    %1739 = vmatpush1.bf16.msra.mxu0 %v1340
    %1740 = vmatprep.subr.bf16.mxu0 0
    %1741 = vmatpush1.bf16.msra.mxu0 %v1341
    %1742 = vmatprep.mubr.bf16.mxu0 %v389
    %1743 = vmatmul.mubr.bf16.gmra.mrb[0].mxu0 %v388
    %v1744 = vpop.f32.mrb[0].mxu0
    %v1745 = vadd.f32 %v1705, %v1744
    %v1746 = vpop.f32.mrb[0].mxu0
    %v1747 = vpop.f32.mrb[0].mxu0
    %v1748 = vpop.f32.mrb[0].mxu0
    %1749 = vdwg.mxu0
    %1750 = vmatprep.subr.bf16.mxu0 0
    %1751 = vmatpush1.bf16.msra.mxu0 %v1342
    %1752 = vmatprep.subr.bf16.mxu0 0
    %1753 = vmatpush1.bf16.msra.mxu0 %v1343
    %1754 = vmatprep.subr.bf16.mxu0 0
    %1755 = vmatpush1.bf16.msra.mxu0 %v1344
    %1756 = vmatprep.subr.bf16.mxu0 0
    %1757 = vmatpush1.bf16.msra.mxu0 %v1345
    %1758 = vmatprep.subr.bf16.mxu0 0
    %1759 = vmatpush1.bf16.msra.mxu0 %v1346
    %1760 = vmatprep.subr.bf16.mxu0 0
    %1761 = vmatpush1.bf16.msra.mxu0 %v1347
    %1762 = vmatprep.subr.bf16.mxu0 0
    %1763 = vmatpush1.bf16.msra.mxu0 %v1348
    %1764 = vmatprep.subr.bf16.mxu0 0
    %1765 = vmatpush1.bf16.msra.mxu0 %v1349
    %1766 = vmatprep.subr.bf16.mxu0 0
    %1767 = vmatpush1.bf16.msra.mxu0 %v1350
    %1768 = vmatprep.subr.bf16.mxu0 0
    %1769 = vmatpush1.bf16.msra.mxu0 %v1351
    %1770 = vmatprep.subr.bf16.mxu0 0
    %1771 = vmatpush1.bf16.msra.mxu0 %v1352
    %1772 = vmatprep.subr.bf16.mxu0 0
    %1773 = vmatpush1.bf16.msra.mxu0 %v1353
    %1774 = vmatprep.subr.bf16.mxu0 0
    %1775 = vmatpush1.bf16.msra.mxu0 %v1354
    %1776 = vmatprep.subr.bf16.mxu0 0
    %1777 = vmatpush1.bf16.msra.mxu0 %v1355
    %1778 = vmatprep.subr.bf16.mxu0 0
    %1779 = vmatpush1.bf16.msra.mxu0 %v1356
    %1780 = vmatprep.subr.bf16.mxu0 0
    %1781 = vmatpush1.bf16.msra.mxu0 %v1357
    %1782 = vmatprep.mubr.bf16.mxu0 %v391
    %1783 = vmatmul.mubr.bf16.gmra.mrb[0].mxu0 %v390
    %v1784 = vpop.f32.mrb[0].mxu0
    %v1785 = vadd.f32 %v1745, %v1784
    %v1786 = vpop.f32.mrb[0].mxu0
    %v1787 = vpop.f32.mrb[0].mxu0
    %v1788 = vpop.f32.mrb[0].mxu0
    %1789 = vdwg.mxu0
    %1790 = vmatprep.subr.bf16.mxu0 0
    %1791 = vmatpush1.bf16.msra.mxu0 %v1358
    %1792 = vmatprep.subr.bf16.mxu0 0
    %1793 = vmatpush1.bf16.msra.mxu0 %v1359
    %1794 = vmatprep.subr.bf16.mxu0 0
    %1795 = vmatpush1.bf16.msra.mxu0 %v1360
    %1796 = vmatprep.subr.bf16.mxu0 0
    %1797 = vmatpush1.bf16.msra.mxu0 %v1361
    %1798 = vmatprep.subr.bf16.mxu0 0
    %1799 = vmatpush1.bf16.msra.mxu0 %v1362
    %1800 = vmatprep.subr.bf16.mxu0 0
    %1801 = vmatpush1.bf16.msra.mxu0 %v1363
    %1802 = vmatprep.subr.bf16.mxu0 0
    %1803 = vmatpush1.bf16.msra.mxu0 %v1364
    %1804 = vmatprep.subr.bf16.mxu0 0
    %1805 = vmatpush1.bf16.msra.mxu0 %v1365
    %1806 = vmatprep.subr.bf16.mxu0 0
    %1807 = vmatpush1.bf16.msra.mxu0 %v1366
    %1808 = vmatprep.subr.bf16.mxu0 0
    %1809 = vmatpush1.bf16.msra.mxu0 %v1367
    %1810 = vmatprep.subr.bf16.mxu0 0
    %1811 = vmatpush1.bf16.msra.mxu0 %v1368
    %1812 = vmatprep.subr.bf16.mxu0 0
    %1813 = vmatpush1.bf16.msra.mxu0 %v1369
    %1814 = vmatprep.subr.bf16.mxu0 0
    %1815 = vmatpush1.bf16.msra.mxu0 %v1370
    %1816 = vmatprep.subr.bf16.mxu0 0
    %1817 = vmatpush1.bf16.msra.mxu0 %v1371
    %1818 = vmatprep.subr.bf16.mxu0 0
    %1819 = vmatpush1.bf16.msra.mxu0 %v1372
    %1820 = vmatprep.subr.bf16.mxu0 0
    %1821 = vmatpush1.bf16.msra.mxu0 %v1373
    %1822 = vmatprep.mubr.bf16.mxu0 %v393
    %1823 = vmatmul.mubr.bf16.gmra.mrb[0].mxu0 %v392
    %v1824 = vpop.f32.mrb[0].mxu0
    %v1825 = vadd.f32 %v1785, %v1824
    %v1826 = vpop.f32.mrb[0].mxu0
    %v1827 = vpop.f32.mrb[0].mxu0
    %v1828 = vpop.f32.mrb[0].mxu0
    %1829 = vdwg.mxu0
    %1830 = vmatprep.subr.bf16.mxu0 0
    %1831 = vmatpush1.bf16.msra.mxu0 %v1374
    %1832 = vmatprep.subr.bf16.mxu0 0
    %1833 = vmatpush1.bf16.msra.mxu0 %v1375
    %1834 = vmatprep.subr.bf16.mxu0 0
    %1835 = vmatpush1.bf16.msra.mxu0 %v1376
    %1836 = vmatprep.subr.bf16.mxu0 0
    %1837 = vmatpush1.bf16.msra.mxu0 %v1377
    %1838 = vmatprep.subr.bf16.mxu0 0
    %1839 = vmatpush1.bf16.msra.mxu0 %v1378
    %1840 = vmatprep.subr.bf16.mxu0 0
    %1841 = vmatpush1.bf16.msra.mxu0 %v1379
    %1842 = vmatprep.subr.bf16.mxu0 0
    %1843 = vmatpush1.bf16.msra.mxu0 %v1380
    %1844 = vmatprep.subr.bf16.mxu0 0
    %1845 = vmatpush1.bf16.msra.mxu0 %v1381
    %1846 = vmatprep.subr.bf16.mxu0 0
    %1847 = vmatpush1.bf16.msra.mxu0 %v1382
    %1848 = vmatprep.subr.bf16.mxu0 0
    %1849 = vmatpush1.bf16.msra.mxu0 %v1383
    %1850 = vmatprep.subr.bf16.mxu0 0
    %1851 = vmatpush1.bf16.msra.mxu0 %v1384
    %1852 = vmatprep.subr.bf16.mxu0 0
    %1853 = vmatpush1.bf16.msra.mxu0 %v1385
    %1854 = vmatprep.subr.bf16.mxu0 0
    %1855 = vmatpush1.bf16.msra.mxu0 %v1386
    %1856 = vmatprep.subr.bf16.mxu0 0
    %1857 = vmatpush1.bf16.msra.mxu0 %v1387
    %1858 = vmatprep.subr.bf16.mxu0 0
    %1859 = vmatpush1.bf16.msra.mxu0 %v1388
    %1860 = vmatprep.subr.bf16.mxu0 0
    %1861 = vmatpush1.bf16.msra.mxu0 %v1389
    %1862 = vmatprep.mubr.bf16.mxu0 %v395
    %1863 = vmatmul.mubr.bf16.gmra.mrb[0].mxu0 %v394
    %v1864 = vpop.f32.mrb[0].mxu0
    %v1865 = vadd.f32 %v1825, %v1864
    %v1866 = vpop.f32.mrb[0].mxu0
    %v1867 = vpop.f32.mrb[0].mxu0
    %v1868 = vpop.f32.mrb[0].mxu0
    %1869 = vdwg.mxu0
    %1870 = vmatprep.subr.bf16.mxu0 0
    %1871 = vmatpush1.bf16.msra.mxu0 %v1390
    %1872 = vmatprep.subr.bf16.mxu0 0
    %1873 = vmatpush1.bf16.msra.mxu0 %v1391
    %1874 = vmatprep.subr.bf16.mxu0 0
    %1875 = vmatpush1.bf16.msra.mxu0 %v1392
    %1876 = vmatprep.subr.bf16.mxu0 0
    %1877 = vmatpush1.bf16.msra.mxu0 %v1393
    %1878 = vmatprep.subr.bf16.mxu0 0
    %1879 = vmatpush1.bf16.msra.mxu0 %v1394
    %1880 = vmatprep.subr.bf16.mxu0 0
    %1881 = vmatpush1.bf16.msra.mxu0 %v1395
    %1882 = vmatprep.subr.bf16.mxu0 0
    %1883 = vmatpush1.bf16.msra.mxu0 %v1396
    %1884 = vmatprep.subr.bf16.mxu0 0
    %1885 = vmatpush1.bf16.msra.mxu0 %v1397
    %1886 = vmatprep.subr.bf16.mxu0 0
    %1887 = vmatpush1.bf16.msra.mxu0 %v1398
    %1888 = vmatprep.subr.bf16.mxu0 0
    %1889 = vmatpush1.bf16.msra.mxu0 %v1399
    %1890 = vmatprep.subr.bf16.mxu0 0
    %1891 = vmatpush1.bf16.msra.mxu0 %v1400
    %1892 = vmatprep.subr.bf16.mxu0 0
    %1893 = vmatpush1.bf16.msra.mxu0 %v1401
    %1894 = vmatprep.subr.bf16.mxu0 0
    %1895 = vmatpush1.bf16.msra.mxu0 %v1402
    %1896 = vmatprep.subr.bf16.mxu0 0
    %1897 = vmatpush1.bf16.msra.mxu0 %v1403
    %1898 = vmatprep.subr.bf16.mxu0 0
    %1899 = vmatpush1.bf16.msra.mxu0 %v1404
    %1900 = vmatprep.subr.bf16.mxu0 0
    %1901 = vmatpush1.bf16.msra.mxu0 %v1405
    %1902 = vmatprep.mubr.bf16.mxu0 %v397
    %1903 = vmatmul.mubr.bf16.gmra.mrb[0].mxu0 %v396
    %v1904 = vpop.f32.mrb[0].mxu0
    %v1905 = vadd.f32 %v1865, %v1904
    %v1906 = vpop.f32.mrb[0].mxu0
    %v1907 = vpop.f32.mrb[0].mxu0
    %v1908 = vpop.f32.mrb[0].mxu0
    %1909 = vdwg.mxu0
    %v1910 = vxor.u32 %v1905, 2147483648
    %v1911 = vmul.f32 %v1910, 1.442695
    %v1912 = vpow.pop %v1911
    %v1913 = vadd.f32 %v1912, 1.0
    %v1914 = vrcp.pop %v1913
    %v1915 = vmul.f32 1.0, %v1914
    %v1916 = vmul.f32 %v1905, %v1915
    %v1917 = vpack.c.bf16 %v1916, %v1916
    %v1918 = vsub.f32 %v1905, -2.2
    %v1919 = vmul.f32 %v1918, 2.5
    %v1920 = vfloor.f32 %v1919
    %v1921 = vsub.f32 %v1919, %v1920
    %v1922 = vmul.f32 %v1921, %v1921
    %v1923 = vmul.f32 %v1922, %v1921
    %v1924 = vmul.f32 %v1923, 0.16666667
    %v1925 = vsub.f32 %v1922, %v1921
    %v1926 = vmul.f32 %v1925, 0.5
    %v1927 = vadd.f32 %v1926, 0.16666667
    %v1928 = vsub.f32 %v1927, %v1924
    %v1929 = vsub.f32 0.6666667, %v1922
    %v1930 = vmul.f32 %v1923, 0.5
    %v1931 = vadd.f32 %v1929, %v1930
    %v1932 = vsub.f32 1.0, %v1928
    %v1933 = vsub.f32 %v1932, %v1931
    %v1934 = vsub.f32 %v1933, %v1924
    %vm1935 = vcmp.eq.f32.partialorder %v1920, 0.0
    %v1936 = vsel %vm1935, %v1924, 0.0
    %vm1937 = vcmp.eq.f32.partialorder %v1920, 1.0
    %v1938 = vsel %vm1937, %v1934, 0.0
    %v1939 = vadd.f32 %v1936, %v1938
    %vm1940 = vcmp.eq.f32.partialorder %v1920, 2.0
    %v1941 = vsel %vm1940, %v1931, 0.0
    %v1942 = vadd.f32 %v1939, %v1941
    %vm1943 = vcmp.eq.f32.partialorder %v1920, 3.0
    %v1944 = vsel %vm1943, %v1928, 0.0
    %v1945 = vadd.f32 %v1942, %v1944
    %v1946 = vsel %vm1937, %v1924, 0.0
    %v1947 = vsel %vm1940, %v1934, 0.0
    %v1948 = vadd.f32 %v1946, %v1947
    %v1949 = vsel %vm1943, %v1931, 0.0
    %v1950 = vadd.f32 %v1948, %v1949
    %vm1951 = vcmp.eq.f32.partialorder %v1920, 4.0
    %v1952 = vsel %vm1951, %v1928, 0.0
    %v1953 = vadd.f32 %v1950, %v1952
    %v1954 = vsel %vm1940, %v1924, 0.0
    %v1955 = vsel %vm1943, %v1934, 0.0
    %v1956 = vadd.f32 %v1954, %v1955
    %v1957 = vsel %vm1951, %v1931, 0.0
    %v1958 = vadd.f32 %v1956, %v1957
    %vm1959 = vcmp.eq.f32.partialorder %v1920, 5.0
    %v1960 = vsel %vm1959, %v1928, 0.0
    %v1961 = vadd.f32 %v1958, %v1960
    %v1962 = vsel %vm1943, %v1924, 0.0
    %v1963 = vsel %vm1951, %v1934, 0.0
    %v1964 = vadd.f32 %v1962, %v1963
    %v1965 = vsel %vm1959, %v1931, 0.0
    %v1966 = vadd.f32 %v1964, %v1965
    %vm1967 = vcmp.eq.f32.partialorder %v1920, 6.0
    %v1968 = vsel %vm1967, %v1928, 0.0
    %v1969 = vadd.f32 %v1966, %v1968
    %v1970 = vsel %vm1951, %v1924, 0.0
    %v1971 = vsel %vm1959, %v1934, 0.0
    %v1972 = vadd.f32 %v1970, %v1971
    %v1973 = vsel %vm1967, %v1931, 0.0
    %v1974 = vadd.f32 %v1972, %v1973
    %vm1975 = vcmp.eq.f32.partialorder %v1920, 7.0
    %v1976 = vsel %vm1975, %v1928, 0.0
    %v1977 = vadd.f32 %v1974, %v1976
    %v1978 = vsel %vm1959, %v1924, 0.0
    %v1979 = vsel %vm1967, %v1934, 0.0
    %v1980 = vadd.f32 %v1978, %v1979
    %v1981 = vsel %vm1975, %v1931, 0.0
    %v1982 = vadd.f32 %v1980, %v1981
    %vm1983 = vcmp.eq.f32.partialorder %v1920, 8.0
    %v1984 = vsel %vm1983, %v1928, 0.0
    %v1985 = vadd.f32 %v1982, %v1984
    %v1986 = vsel %vm1967, %v1924, 0.0
    %v1987 = vsel %vm1975, %v1934, 0.0
    %v1988 = vadd.f32 %v1986, %v1987
    %v1989 = vsel %vm1983, %v1931, 0.0
    %v1990 = vadd.f32 %v1988, %v1989
    %vm1991 = vcmp.eq.f32.partialorder %v1920, 9.0
    %v1992 = vsel %vm1991, %v1928, 0.0
    %v1993 = vadd.f32 %v1990, %v1992
    %v1994 = vsel %vm1975, %v1924, 0.0
    %v1995 = vsel %vm1983, %v1934, 0.0
    %v1996 = vadd.f32 %v1994, %v1995
    %v1997 = vsel %vm1991, %v1931, 0.0
    %v1998 = vadd.f32 %v1996, %v1997
    %vm1999 = vcmp.eq.f32.partialorder %v1920, 10.0
    %v2000 = vsel %vm1999, %v1928, 0.0
    %v2001 = vadd.f32 %v1998, %v2000
    %v2002 = vpack.c.bf16 %v1945, %v1945
    %v2003 = vpack.c.bf16 %v1953, %v1953
    %v2004 = vpack.c.bf16 %v1961, %v1961
    %v2005 = vpack.c.bf16 %v1969, %v1969
    %v2006 = vpack.c.bf16 %v1977, %v1977
    %v2007 = vpack.c.bf16 %v1985, %v1985
    %v2008 = vpack.c.bf16 %v1993, %v1993
    %v2009 = vpack.c.bf16 %v2001, %v2001
    %v2010 = vld [vmem:[#allocation5] sm:$0xf]
    %v2011 = vld [vmem:[#allocation5 + $0x4] sm:$0xf]
    %v2012 = vld [vmem:[#allocation5 + $0x8] sm:$0xf]
    %v2013 = vld [vmem:[#allocation5 + $0xc] sm:$0xf]
    %v2014 = vld [vmem:[#allocation5 + $0x10] sm:$0xf]
    %v2015 = vld [vmem:[#allocation5 + $0x14] sm:$0xf]
    %v2016 = vld [vmem:[#allocation5 + $0x18] sm:$0xf]
    %v2017 = vld [vmem:[#allocation5 + $0x1c] sm:$0xf]
    %v2018 = vld [vmem:[#allocation5 + $0x20] sm:$0xf]
    %v2019 = vld [vmem:[#allocation5 + $0x24] sm:$0xf]
    %v2020 = vld [vmem:[#allocation5 + $0x28] sm:$0xf]
    %v2021 = vld [vmem:[#allocation5 + $0x2c] sm:$0xf]
    %v2022 = vld [vmem:[#allocation5 + $0x30] sm:$0xf]
    %v2023 = vld [vmem:[#allocation5 + $0x34] sm:$0xf]
    %v2024 = vld [vmem:[#allocation5 + $0x38] sm:$0xf]
    %v2025 = vld [vmem:[#allocation5 + $0x3c] sm:$0xf]
    %v2026 = vld [vmem:[#allocation5 + $0x40] sm:$0xf]
    %v2027 = vld [vmem:[#allocation5 + $0x44] sm:$0xf]
    %v2028 = vld [vmem:[#allocation5 + $0x48] sm:$0xf]
    %v2029 = vld [vmem:[#allocation5 + $0x4c] sm:$0xf]
    %v2030 = vld [vmem:[#allocation5 + $0x50] sm:$0xf]
    %v2031 = vld [vmem:[#allocation5 + $0x54] sm:$0xf]
    %v2032 = vld [vmem:[#allocation5 + $0x58] sm:$0xf]
    %v2033 = vld [vmem:[#allocation5 + $0x5c] sm:$0xf]
    %v2034 = vld [vmem:[#allocation5 + $0x60] sm:$0xf]
    %v2035 = vld [vmem:[#allocation5 + $0x64] sm:$0xf]
    %v2036 = vld [vmem:[#allocation5 + $0x68] sm:$0xf]
    %v2037 = vld [vmem:[#allocation5 + $0x6c] sm:$0xf]
    %v2038 = vld [vmem:[#allocation5 + $0x70] sm:$0xf]
    %v2039 = vld [vmem:[#allocation5 + $0x74] sm:$0xf]
    %v2040 = vld [vmem:[#allocation5 + $0x78] sm:$0xf]
    %v2041 = vld [vmem:[#allocation5 + $0x7c] sm:$0xf]
    %v2042 = vld [vmem:[#allocation5 + $0x80] sm:$0xf]
    %v2043 = vld [vmem:[#allocation5 + $0x84] sm:$0xf]
    %v2044 = vld [vmem:[#allocation5 + $0x88] sm:$0xf]
    %v2045 = vld [vmem:[#allocation5 + $0x8c] sm:$0xf]
    %v2046 = vld [vmem:[#allocation5 + $0x90] sm:$0xf]
    %v2047 = vld [vmem:[#allocation5 + $0x94] sm:$0xf]
    %v2048 = vld [vmem:[#allocation5 + $0x98] sm:$0xf]
    %v2049 = vld [vmem:[#allocation5 + $0x9c] sm:$0xf]
    %v2050 = vld [vmem:[#allocation5 + $0xa0] sm:$0xf]
    %v2051 = vld [vmem:[#allocation5 + $0xa4] sm:$0xf]
    %v2052 = vld [vmem:[#allocation5 + $0xa8] sm:$0xf]
    %v2053 = vld [vmem:[#allocation5 + $0xac] sm:$0xf]
    %v2054 = vld [vmem:[#allocation5 + $0xb0] sm:$0xf]
    %v2055 = vld [vmem:[#allocation5 + $0xb4] sm:$0xf]
    %v2056 = vld [vmem:[#allocation5 + $0xb8] sm:$0xf]
    %v2057 = vld [vmem:[#allocation5 + $0xbc] sm:$0xf]
    %v2058 = vld [vmem:[#allocation5 + $0xc0] sm:$0xf]
    %v2059 = vld [vmem:[#allocation5 + $0xc4] sm:$0xf]
    %v2060 = vld [vmem:[#allocation5 + $0xc8] sm:$0xf]
    %v2061 = vld [vmem:[#allocation5 + $0xcc] sm:$0xf]
    %v2062 = vld [vmem:[#allocation5 + $0xd0] sm:$0xf]
    %v2063 = vld [vmem:[#allocation5 + $0xd4] sm:$0xf]
    %v2064 = vld [vmem:[#allocation5 + $0xd8] sm:$0xf]
    %v2065 = vld [vmem:[#allocation5 + $0xdc] sm:$0xf]
    %v2066 = vld [vmem:[#allocation5 + $0xe0] sm:$0xf]
    %v2067 = vld [vmem:[#allocation5 + $0xe4] sm:$0xf]
    %v2068 = vld [vmem:[#allocation5 + $0xe8] sm:$0xf]
    %v2069 = vld [vmem:[#allocation5 + $0xec] sm:$0xf]
    %v2070 = vld [vmem:[#allocation5 + $0xf0] sm:$0xf]
    %v2071 = vld [vmem:[#allocation5 + $0xf4] sm:$0xf]
    %v2072 = vld [vmem:[#allocation5 + $0xf8] sm:$0xf]
    %v2073 = vld [vmem:[#allocation5 + $0xfc] sm:$0xf]
    %v2074 = vld [vmem:[#allocation5 + $0x100] sm:$0xf]
    %v2075 = vld [vmem:[#allocation5 + $0x104] sm:$0xf]
    %v2076 = vld [vmem:[#allocation5 + $0x108] sm:$0xf]
    %v2077 = vld [vmem:[#allocation5 + $0x10c] sm:$0xf]
    %v2078 = vld [vmem:[#allocation5 + $0x110] sm:$0xf]
    %v2079 = vld [vmem:[#allocation5 + $0x114] sm:$0xf]
    %v2080 = vld [vmem:[#allocation5 + $0x118] sm:$0xf]
    %v2081 = vld [vmem:[#allocation5 + $0x11c] sm:$0xf]
    %v2082 = vld [vmem:[#allocation5 + $0x120] sm:$0xf]
    %v2083 = vld [vmem:[#allocation5 + $0x124] sm:$0xf]
    %v2084 = vld [vmem:[#allocation5 + $0x128] sm:$0xf]
    %v2085 = vld [vmem:[#allocation5 + $0x12c] sm:$0xf]
    %v2086 = vld [vmem:[#allocation5 + $0x130] sm:$0xf]
    %v2087 = vld [vmem:[#allocation5 + $0x134] sm:$0xf]
    %v2088 = vld [vmem:[#allocation5 + $0x138] sm:$0xf]
    %v2089 = vld [vmem:[#allocation5 + $0x13c] sm:$0xf]
    %v2090 = vld [vmem:[#allocation5 + $0x140] sm:$0xf]
    %v2091 = vld [vmem:[#allocation5 + $0x144] sm:$0xf]
    %v2092 = vld [vmem:[#allocation5 + $0x148] sm:$0xf]
    %v2093 = vld [vmem:[#allocation5 + $0x14c] sm:$0xf]
    %v2094 = vld [vmem:[#allocation5 + $0x150] sm:$0xf]
    %v2095 = vld [vmem:[#allocation5 + $0x154] sm:$0xf]
    %v2096 = vld [vmem:[#allocation5 + $0x158] sm:$0xf]
    %v2097 = vld [vmem:[#allocation5 + $0x15c] sm:$0xf]
    %v2098 = vld [vmem:[#allocation5 + $0x160] sm:$0xf]
    %v2099 = vld [vmem:[#allocation5 + $0x164] sm:$0xf]
    %v2100 = vld [vmem:[#allocation5 + $0x168] sm:$0xf]
    %v2101 = vld [vmem:[#allocation5 + $0x16c] sm:$0xf]
    %v2102 = vld [vmem:[#allocation5 + $0x170] sm:$0xf]
    %v2103 = vld [vmem:[#allocation5 + $0x174] sm:$0xf]
    %v2104 = vld [vmem:[#allocation5 + $0x178] sm:$0xf]
    %v2105 = vld [vmem:[#allocation5 + $0x17c] sm:$0xf]
    %v2106 = vld [vmem:[#allocation5 + $0x180] sm:$0xf]
    %v2107 = vld [vmem:[#allocation5 + $0x184] sm:$0xf]
    %v2108 = vld [vmem:[#allocation5 + $0x188] sm:$0xf]
    %v2109 = vld [vmem:[#allocation5 + $0x18c] sm:$0xf]
    %v2110 = vld [vmem:[#allocation5 + $0x190] sm:$0xf]
    %v2111 = vld [vmem:[#allocation5 + $0x194] sm:$0xf]
    %v2112 = vld [vmem:[#allocation5 + $0x198] sm:$0xf]
    %v2113 = vld [vmem:[#allocation5 + $0x19c] sm:$0xf]
    %v2114 = vld [vmem:[#allocation5 + $0x1a0] sm:$0xf]
    %v2115 = vld [vmem:[#allocation5 + $0x1a4] sm:$0xf]
    %v2116 = vld [vmem:[#allocation5 + $0x1a8] sm:$0xf]
    %v2117 = vld [vmem:[#allocation5 + $0x1ac] sm:$0xf]
    %v2118 = vld [vmem:[#allocation5 + $0x1b0] sm:$0xf]
    %v2119 = vld [vmem:[#allocation5 + $0x1b4] sm:$0xf]
    %v2120 = vld [vmem:[#allocation5 + $0x1b8] sm:$0xf]
    %v2121 = vld [vmem:[#allocation5 + $0x1bc] sm:$0xf]
    %v2122 = vld [vmem:[#allocation5 + $0x1c0] sm:$0xf]
    %v2123 = vld [vmem:[#allocation5 + $0x1c4] sm:$0xf]
    %v2124 = vld [vmem:[#allocation5 + $0x1c8] sm:$0xf]
    %v2125 = vld [vmem:[#allocation5 + $0x1cc] sm:$0xf]
    %v2126 = vld [vmem:[#allocation5 + $0x1d0] sm:$0xf]
    %v2127 = vld [vmem:[#allocation5 + $0x1d4] sm:$0xf]
    %v2128 = vld [vmem:[#allocation5 + $0x1d8] sm:$0xf]
    %v2129 = vld [vmem:[#allocation5 + $0x1dc] sm:$0xf]
    %v2130 = vld [vmem:[#allocation5 + $0x1e0] sm:$0xf]
    %v2131 = vld [vmem:[#allocation5 + $0x1e4] sm:$0xf]
    %v2132 = vld [vmem:[#allocation5 + $0x1e8] sm:$0xf]
    %v2133 = vld [vmem:[#allocation5 + $0x1ec] sm:$0xf]
    %v2134 = vld [vmem:[#allocation5 + $0x1f0] sm:$0xf]
    %v2135 = vld [vmem:[#allocation5 + $0x1f4] sm:$0xf]
    %v2136 = vld [vmem:[#allocation5 + $0x1f8] sm:$0xf]
    %v2137 = vld [vmem:[#allocation5 + $0x1fc] sm:$0xf]
    %v2138 = vld [vmem:[#allocation5 + $0x200] sm:$0xf]
    %v2139 = vld [vmem:[#allocation5 + $0x204] sm:$0xf]
    %v2140 = vld [vmem:[#allocation5 + $0x208] sm:$0xf]
    %v2141 = vld [vmem:[#allocation5 + $0x20c] sm:$0xf]
    %v2142 = vld [vmem:[#allocation5 + $0x210] sm:$0xf]
    %v2143 = vld [vmem:[#allocation5 + $0x214] sm:$0xf]
    %v2144 = vld [vmem:[#allocation5 + $0x218] sm:$0xf]
    %v2145 = vld [vmem:[#allocation5 + $0x21c] sm:$0xf]
    %v2146 = vld [vmem:[#allocation5 + $0x220] sm:$0xf]
    %v2147 = vld [vmem:[#allocation5 + $0x224] sm:$0xf]
    %v2148 = vld [vmem:[#allocation5 + $0x228] sm:$0xf]
    %v2149 = vld [vmem:[#allocation5 + $0x22c] sm:$0xf]
    %v2150 = vld [vmem:[#allocation5 + $0x230] sm:$0xf]
    %v2151 = vld [vmem:[#allocation5 + $0x234] sm:$0xf]
    %v2152 = vld [vmem:[#allocation5 + $0x238] sm:$0xf]
    %v2153 = vld [vmem:[#allocation5 + $0x23c] sm:$0xf]
    %v2298 = vunpack.c.l.b16 %v2010
    %v2299 = vunpack.c.l.b16 %v2011
    %v2300 = vunpack.c.l.b16 %v2012
    %v2301 = vunpack.c.l.b16 %v2013
    %v2302 = vunpack.c.l.b16 %v2014
    %v2303 = vunpack.c.l.b16 %v2015
    %v2304 = vunpack.c.l.b16 %v2016
    %v2305 = vunpack.c.l.b16 %v2017
    %v2306 = vunpack.c.l.b16 %v2018
    %v2307 = vunpack.c.l.b16 %v2019
    %v2308 = vunpack.c.l.b16 %v2020
    %v2309 = vunpack.c.l.b16 %v2021
    %v2310 = vunpack.c.l.b16 %v2022
    %v2311 = vunpack.c.l.b16 %v2023
    %v2312 = vunpack.c.l.b16 %v2024
    %v2313 = vunpack.c.l.b16 %v2025
    %v2314 = vunpack.c.l.b16 %v2026
    %v2315 = vunpack.c.l.b16 %v2027
    %v2316 = vunpack.c.l.b16 %v2028
    %v2317 = vunpack.c.l.b16 %v2029
    %v2318 = vunpack.c.l.b16 %v2030
    %v2319 = vunpack.c.l.b16 %v2031
    %v2320 = vunpack.c.l.b16 %v2032
    %v2321 = vunpack.c.l.b16 %v2033
    %v2322 = vunpack.c.l.b16 %v2034
    %v2323 = vunpack.c.l.b16 %v2035
    %v2324 = vunpack.c.l.b16 %v2036
    %v2325 = vunpack.c.l.b16 %v2037
    %v2326 = vunpack.c.l.b16 %v2038
    %v2327 = vunpack.c.l.b16 %v2039
    %v2328 = vunpack.c.l.b16 %v2040
    %v2329 = vunpack.c.l.b16 %v2041
    %v2330 = vunpack.c.l.b16 %v2042
    %v2331 = vunpack.c.l.b16 %v2043
    %v2332 = vunpack.c.l.b16 %v2044
    %v2333 = vunpack.c.l.b16 %v2045
    %v2334 = vunpack.c.l.b16 %v2046
    %v2335 = vunpack.c.l.b16 %v2047
    %v2336 = vunpack.c.l.b16 %v2048
    %v2337 = vunpack.c.l.b16 %v2049
    %v2338 = vunpack.c.l.b16 %v2050
    %v2339 = vunpack.c.l.b16 %v2051
    %v2340 = vunpack.c.l.b16 %v2052
    %v2341 = vunpack.c.l.b16 %v2053
    %v2342 = vunpack.c.l.b16 %v2054
    %v2343 = vunpack.c.l.b16 %v2055
    %v2344 = vunpack.c.l.b16 %v2056
    %v2345 = vunpack.c.l.b16 %v2057
    %v2346 = vunpack.c.l.b16 %v2058
    %v2347 = vunpack.c.l.b16 %v2059
    %v2348 = vunpack.c.l.b16 %v2060
    %v2349 = vunpack.c.l.b16 %v2061
    %v2350 = vunpack.c.l.b16 %v2062
    %v2351 = vunpack.c.l.b16 %v2063
    %v2352 = vunpack.c.l.b16 %v2064
    %v2353 = vunpack.c.l.b16 %v2065
    %v2354 = vunpack.c.l.b16 %v2066
    %v2355 = vunpack.c.l.b16 %v2067
    %v2356 = vunpack.c.l.b16 %v2068
    %v2357 = vunpack.c.l.b16 %v2069
    %v2358 = vunpack.c.l.b16 %v2070
    %v2359 = vunpack.c.l.b16 %v2071
    %v2360 = vunpack.c.l.b16 %v2072
    %v2361 = vunpack.c.l.b16 %v2073
    %v2362 = vunpack.c.l.b16 %v2074
    %v2363 = vunpack.c.l.b16 %v2075
    %v2364 = vunpack.c.l.b16 %v2076
    %v2365 = vunpack.c.l.b16 %v2077
    %v2366 = vunpack.c.l.b16 %v2078
    %v2367 = vunpack.c.l.b16 %v2079
    %v2368 = vunpack.c.l.b16 %v2080
    %v2369 = vunpack.c.l.b16 %v2081
    %v2370 = vunpack.c.l.b16 %v2082
    %v2371 = vunpack.c.l.b16 %v2083
    %v2372 = vunpack.c.l.b16 %v2084
    %v2373 = vunpack.c.l.b16 %v2085
    %v2374 = vunpack.c.l.b16 %v2086
    %v2375 = vunpack.c.l.b16 %v2087
    %v2376 = vunpack.c.l.b16 %v2088
    %v2377 = vunpack.c.l.b16 %v2089
    %v2378 = vunpack.c.l.b16 %v2090
    %v2379 = vunpack.c.l.b16 %v2091
    %v2380 = vunpack.c.l.b16 %v2092
    %v2381 = vunpack.c.l.b16 %v2093
    %v2382 = vunpack.c.l.b16 %v2094
    %v2383 = vunpack.c.l.b16 %v2095
    %v2384 = vunpack.c.l.b16 %v2096
    %v2385 = vunpack.c.l.b16 %v2097
    %v2386 = vunpack.c.l.b16 %v2098
    %v2387 = vunpack.c.l.b16 %v2099
    %v2388 = vunpack.c.l.b16 %v2100
    %v2389 = vunpack.c.l.b16 %v2101
    %v2390 = vunpack.c.l.b16 %v2102
    %v2391 = vunpack.c.l.b16 %v2103
    %v2392 = vunpack.c.l.b16 %v2104
    %v2393 = vunpack.c.l.b16 %v2105
    %v2394 = vunpack.c.l.b16 %v2106
    %v2395 = vunpack.c.l.b16 %v2107
    %v2396 = vunpack.c.l.b16 %v2108
    %v2397 = vunpack.c.l.b16 %v2109
    %v2398 = vunpack.c.l.b16 %v2110
    %v2399 = vunpack.c.l.b16 %v2111
    %v2400 = vunpack.c.l.b16 %v2112
    %v2401 = vunpack.c.l.b16 %v2113
    %v2402 = vunpack.c.l.b16 %v2114
    %v2403 = vunpack.c.l.b16 %v2115
    %v2404 = vunpack.c.l.b16 %v2116
    %v2405 = vunpack.c.l.b16 %v2117
    %v2406 = vunpack.c.l.b16 %v2118
    %v2407 = vunpack.c.l.b16 %v2119
    %v2408 = vunpack.c.l.b16 %v2120
    %v2409 = vunpack.c.l.b16 %v2121
    %v2410 = vunpack.c.l.b16 %v2122
    %v2411 = vunpack.c.l.b16 %v2123
    %v2412 = vunpack.c.l.b16 %v2124
    %v2413 = vunpack.c.l.b16 %v2125
    %v2414 = vunpack.c.l.b16 %v2126
    %v2415 = vunpack.c.l.b16 %v2127
    %v2416 = vunpack.c.l.b16 %v2128
    %v2417 = vunpack.c.l.b16 %v2129
    %v2418 = vunpack.c.l.b16 %v2130
    %v2419 = vunpack.c.l.b16 %v2131
    %v2420 = vunpack.c.l.b16 %v2132
    %v2421 = vunpack.c.l.b16 %v2133
    %v2422 = vunpack.c.l.b16 %v2134
    %v2423 = vunpack.c.l.b16 %v2135
    %v2424 = vunpack.c.l.b16 %v2136
    %v2425 = vunpack.c.l.b16 %v2137
    %v2426 = vunpack.c.l.b16 %v2138
    %v2427 = vunpack.c.l.b16 %v2139
    %v2428 = vunpack.c.l.b16 %v2140
    %v2429 = vunpack.c.l.b16 %v2141
    %v2430 = vunpack.c.l.b16 %v2142
    %v2431 = vunpack.c.l.b16 %v2143
    %v2432 = vunpack.c.l.b16 %v2144
    %v2433 = vunpack.c.l.b16 %v2145
    %v2434 = vunpack.c.l.b16 %v2146
    %v2435 = vunpack.c.l.b16 %v2147
    %v2436 = vunpack.c.l.b16 %v2148
    %v2437 = vunpack.c.l.b16 %v2149
    %v2438 = vunpack.c.l.b16 %v2150
    %v2439 = vunpack.c.l.b16 %v2151
    %v2440 = vunpack.c.l.b16 %v2152
    %v2441 = vunpack.c.l.b16 %v2153
    %v2442 = vpack.c.b16 %v2299, %v2298
    %v2443 = vpack.c.b16 %v2301, %v2300
    %v2444 = vpack.c.b16 %v2303, %v2302
    %v2445 = vpack.c.b16 %v2305, %v2304
    %v2446 = vpack.c.b16 %v2307, %v2306
    %v2447 = vpack.c.b16 %v2309, %v2308
    %v2448 = vpack.c.b16 %v2311, %v2310
    %v2449 = vpack.c.b16 %v2313, %v2312
    %v2450 = vpack.c.b16 %v2315, %v2314
    %v2451 = vpack.c.b16 %v2317, %v2316
    %v2452 = vpack.c.b16 %v2319, %v2318
    %v2453 = vpack.c.b16 %v2321, %v2320
    %v2454 = vpack.c.b16 %v2323, %v2322
    %v2455 = vpack.c.b16 %v2325, %v2324
    %v2456 = vpack.c.b16 %v2327, %v2326
    %v2457 = vpack.c.b16 %v2329, %v2328
    %v2458 = vpack.c.b16 %v2331, %v2330
    %v2459 = vpack.c.b16 %v2333, %v2332
    %v2460 = vpack.c.b16 %v2335, %v2334
    %v2461 = vpack.c.b16 %v2337, %v2336
    %v2462 = vpack.c.b16 %v2339, %v2338
    %v2463 = vpack.c.b16 %v2341, %v2340
    %v2464 = vpack.c.b16 %v2343, %v2342
    %v2465 = vpack.c.b16 %v2345, %v2344
    %v2466 = vpack.c.b16 %v2347, %v2346
    %v2467 = vpack.c.b16 %v2349, %v2348
    %v2468 = vpack.c.b16 %v2351, %v2350
    %v2469 = vpack.c.b16 %v2353, %v2352
    %v2470 = vpack.c.b16 %v2355, %v2354
    %v2471 = vpack.c.b16 %v2357, %v2356
    %v2472 = vpack.c.b16 %v2359, %v2358
    %v2473 = vpack.c.b16 %v2361, %v2360
    %v2474 = vpack.c.b16 %v2363, %v2362
    %v2475 = vpack.c.b16 %v2365, %v2364
    %v2476 = vpack.c.b16 %v2367, %v2366
    %v2477 = vpack.c.b16 %v2369, %v2368
    %v2478 = vpack.c.b16 %v2371, %v2370
    %v2479 = vpack.c.b16 %v2373, %v2372
    %v2480 = vpack.c.b16 %v2375, %v2374
    %v2481 = vpack.c.b16 %v2377, %v2376
    %v2482 = vpack.c.b16 %v2379, %v2378
    %v2483 = vpack.c.b16 %v2381, %v2380
    %v2484 = vpack.c.b16 %v2383, %v2382
    %v2485 = vpack.c.b16 %v2385, %v2384
    %v2486 = vpack.c.b16 %v2387, %v2386
    %v2487 = vpack.c.b16 %v2389, %v2388
    %v2488 = vpack.c.b16 %v2391, %v2390
    %v2489 = vpack.c.b16 %v2393, %v2392
    %v2490 = vpack.c.b16 %v2395, %v2394
    %v2491 = vpack.c.b16 %v2397, %v2396
    %v2492 = vpack.c.b16 %v2399, %v2398
    %v2493 = vpack.c.b16 %v2401, %v2400
    %v2494 = vpack.c.b16 %v2403, %v2402
    %v2495 = vpack.c.b16 %v2405, %v2404
    %v2496 = vpack.c.b16 %v2407, %v2406
    %v2497 = vpack.c.b16 %v2409, %v2408
    %v2498 = vpack.c.b16 %v2411, %v2410
    %v2499 = vpack.c.b16 %v2413, %v2412
    %v2500 = vpack.c.b16 %v2415, %v2414
    %v2501 = vpack.c.b16 %v2417, %v2416
    %v2502 = vpack.c.b16 %v2419, %v2418
    %v2503 = vpack.c.b16 %v2421, %v2420
    %v2504 = vpack.c.b16 %v2423, %v2422
    %v2505 = vpack.c.b16 %v2425, %v2424
    %v2506 = vpack.c.b16 %v2427, %v2426
    %v2507 = vpack.c.b16 %v2429, %v2428
    %v2508 = vpack.c.b16 %v2431, %v2430
    %v2509 = vpack.c.b16 %v2433, %v2432
    %v2510 = vpack.c.b16 %v2435, %v2434
    %v2511 = vpack.c.b16 %v2437, %v2436
    %v2512 = vpack.c.b16 %v2439, %v2438
    %v2513 = vpack.c.b16 %v2441, %v2440
    %2586 = vmatprep.subr.bf16.mxu0 0
    %2587 = vmatpush1.bf16.msra.mxu0 %v2442
    %2588 = vmatprep.subr.bf16.mxu0 0
    %2589 = vmatpush1.bf16.msra.mxu0 %v2443
    %2590 = vmatprep.subr.bf16.mxu0 0
    %2591 = vmatpush1.bf16.msra.mxu0 %v2444
    %2592 = vmatprep.subr.bf16.mxu0 0
    %2593 = vmatpush1.bf16.msra.mxu0 %v2445
    %2594 = vmatprep.subr.bf16.mxu0 0
    %2595 = vmatpush1.bf16.msra.mxu0 %v2446
    %2596 = vmatprep.subr.bf16.mxu0 0
    %2597 = vmatpush1.bf16.msra.mxu0 %v2447
    %2598 = vmatprep.subr.bf16.mxu0 0
    %2599 = vmatpush1.bf16.msra.mxu0 %v2448
    %2600 = vmatprep.subr.bf16.mxu0 0
    %2601 = vmatpush1.bf16.msra.mxu0 %v2449
    %2602 = vmatprep.subr.bf16.mxu0 0
    %2603 = vmatpush1.bf16.msra.mxu0 %v2450
    %2604 = vmatprep.subr.bf16.mxu0 0
    %2605 = vmatpush1.bf16.msra.mxu0 %v2451
    %2606 = vmatprep.subr.bf16.mxu0 0
    %2607 = vmatpush1.bf16.msra.mxu0 %v2452
    %2608 = vmatprep.subr.bf16.mxu0 0
    %2609 = vmatpush1.bf16.msra.mxu0 %v2453
    %2610 = vmatprep.subr.bf16.mxu0 0
    %2611 = vmatpush1.bf16.msra.mxu0 %v2454
    %2612 = vmatprep.subr.bf16.mxu0 0
    %2613 = vmatpush1.bf16.msra.mxu0 %v2455
    %2614 = vmatprep.subr.bf16.mxu0 0
    %2615 = vmatpush1.bf16.msra.mxu0 %v2456
    %2616 = vmatprep.subr.bf16.mxu0 0
    %2617 = vmatpush1.bf16.msra.mxu0 %v2457
    %2618 = vmatprep.mubr.bf16.mxu0 %v2002
    %2619 = vmatmul.mubr.bf16.gmra.mrb[0].mxu0 %v1917
    %v2620 = vpop.f32.mrb[0].mxu0
    %v2621 = vadd.f32 0.0, %v2620
    %v2622 = vpop.f32.mrb[0].mxu0
    %v2623 = vpop.f32.mrb[0].mxu0
    %v2624 = vpop.f32.mrb[0].mxu0
    %2625 = vdwg.mxu0
    %2626 = vmatprep.subr.bf16.mxu0 0
    %2627 = vmatpush1.bf16.msra.mxu0 %v2458
    %2628 = vmatprep.subr.bf16.mxu0 0
    %2629 = vmatpush1.bf16.msra.mxu0 %v2459
    %2630 = vmatprep.subr.bf16.mxu0 0
    %2631 = vmatpush1.bf16.msra.mxu0 %v2460
    %2632 = vmatprep.subr.bf16.mxu0 0
    %2633 = vmatpush1.bf16.msra.mxu0 %v2461
    %2634 = vmatprep.subr.bf16.mxu0 0
    %2635 = vmatpush1.bf16.msra.mxu0 %v2462
    %2636 = vmatprep.subr.bf16.mxu0 0
    %2637 = vmatpush1.bf16.msra.mxu0 %v2463
    %2638 = vmatprep.subr.bf16.mxu0 0
    %2639 = vmatpush1.bf16.msra.mxu0 %v2464
    %2640 = vmatprep.subr.bf16.mxu0 0
    %2641 = vmatpush1.bf16.msra.mxu0 %v2465
    %2642 = vmatprep.subr.bf16.mxu0 0
    %2643 = vmatpush1.bf16.msra.mxu0 %v2466
    %2644 = vmatprep.subr.bf16.mxu0 0
    %2645 = vmatpush1.bf16.msra.mxu0 %v2467
    %2646 = vmatprep.subr.bf16.mxu0 0
    %2647 = vmatpush1.bf16.msra.mxu0 %v2468
    %2648 = vmatprep.subr.bf16.mxu0 0
    %2649 = vmatpush1.bf16.msra.mxu0 %v2469
    %2650 = vmatprep.subr.bf16.mxu0 0
    %2651 = vmatpush1.bf16.msra.mxu0 %v2470
    %2652 = vmatprep.subr.bf16.mxu0 0
    %2653 = vmatpush1.bf16.msra.mxu0 %v2471
    %2654 = vmatprep.subr.bf16.mxu0 0
    %2655 = vmatpush1.bf16.msra.mxu0 %v2472
    %2656 = vmatprep.subr.bf16.mxu0 0
    %2657 = vmatpush1.bf16.msra.mxu0 %v2473
    %2658 = vmatprep.mubr.bf16.mxu0 %v2004
    %2659 = vmatmul.mubr.bf16.gmra.mrb[0].mxu0 %v2003
    %v2660 = vpop.f32.mrb[0].mxu0
    %v2661 = vadd.f32 %v2621, %v2660
    %v2662 = vpop.f32.mrb[0].mxu0
    %v2663 = vpop.f32.mrb[0].mxu0
    %v2664 = vpop.f32.mrb[0].mxu0
    %2665 = vdwg.mxu0
    %2666 = vmatprep.subr.bf16.mxu0 0
    %2667 = vmatpush1.bf16.msra.mxu0 %v2474
    %2668 = vmatprep.subr.bf16.mxu0 0
    %2669 = vmatpush1.bf16.msra.mxu0 %v2475
    %2670 = vmatprep.subr.bf16.mxu0 0
    %2671 = vmatpush1.bf16.msra.mxu0 %v2476
    %2672 = vmatprep.subr.bf16.mxu0 0
    %2673 = vmatpush1.bf16.msra.mxu0 %v2477
    %2674 = vmatprep.subr.bf16.mxu0 0
    %2675 = vmatpush1.bf16.msra.mxu0 %v2478
    %2676 = vmatprep.subr.bf16.mxu0 0
    %2677 = vmatpush1.bf16.msra.mxu0 %v2479
    %2678 = vmatprep.subr.bf16.mxu0 0
    %2679 = vmatpush1.bf16.msra.mxu0 %v2480
    %2680 = vmatprep.subr.bf16.mxu0 0
    %2681 = vmatpush1.bf16.msra.mxu0 %v2481
    %2682 = vmatprep.subr.bf16.mxu0 0
    %2683 = vmatpush1.bf16.msra.mxu0 %v2482
    %2684 = vmatprep.subr.bf16.mxu0 0
    %2685 = vmatpush1.bf16.msra.mxu0 %v2483
    %2686 = vmatprep.subr.bf16.mxu0 0
    %2687 = vmatpush1.bf16.msra.mxu0 %v2484
    %2688 = vmatprep.subr.bf16.mxu0 0
    %2689 = vmatpush1.bf16.msra.mxu0 %v2485
    %2690 = vmatprep.subr.bf16.mxu0 0
    %2691 = vmatpush1.bf16.msra.mxu0 %v2486
    %2692 = vmatprep.subr.bf16.mxu0 0
    %2693 = vmatpush1.bf16.msra.mxu0 %v2487
    %2694 = vmatprep.subr.bf16.mxu0 0
    %2695 = vmatpush1.bf16.msra.mxu0 %v2488
    %2696 = vmatprep.subr.bf16.mxu0 0
    %2697 = vmatpush1.bf16.msra.mxu0 %v2489
    %2698 = vmatprep.mubr.bf16.mxu0 %v2006
    %2699 = vmatmul.mubr.bf16.gmra.mrb[0].mxu0 %v2005
    %v2700 = vpop.f32.mrb[0].mxu0
    %v2701 = vadd.f32 %v2661, %v2700
    %v2702 = vpop.f32.mrb[0].mxu0
    %v2703 = vpop.f32.mrb[0].mxu0
    %v2704 = vpop.f32.mrb[0].mxu0
    %2705 = vdwg.mxu0
    %2706 = vmatprep.subr.bf16.mxu0 0
    %2707 = vmatpush1.bf16.msra.mxu0 %v2490
    %2708 = vmatprep.subr.bf16.mxu0 0
    %2709 = vmatpush1.bf16.msra.mxu0 %v2491
    %2710 = vmatprep.subr.bf16.mxu0 0
    %2711 = vmatpush1.bf16.msra.mxu0 %v2492
    %2712 = vmatprep.subr.bf16.mxu0 0
    %2713 = vmatpush1.bf16.msra.mxu0 %v2493
    %2714 = vmatprep.subr.bf16.mxu0 0
    %2715 = vmatpush1.bf16.msra.mxu0 %v2494
    %2716 = vmatprep.subr.bf16.mxu0 0
    %2717 = vmatpush1.bf16.msra.mxu0 %v2495
    %2718 = vmatprep.subr.bf16.mxu0 0
    %2719 = vmatpush1.bf16.msra.mxu0 %v2496
    %2720 = vmatprep.subr.bf16.mxu0 0
    %2721 = vmatpush1.bf16.msra.mxu0 %v2497
    %2722 = vmatprep.subr.bf16.mxu0 0
    %2723 = vmatpush1.bf16.msra.mxu0 %v2498
    %2724 = vmatprep.subr.bf16.mxu0 0
    %2725 = vmatpush1.bf16.msra.mxu0 %v2499
    %2726 = vmatprep.subr.bf16.mxu0 0
    %2727 = vmatpush1.bf16.msra.mxu0 %v2500
    %2728 = vmatprep.subr.bf16.mxu0 0
    %2729 = vmatpush1.bf16.msra.mxu0 %v2501
    %2730 = vmatprep.subr.bf16.mxu0 0
    %2731 = vmatpush1.bf16.msra.mxu0 %v2502
    %2732 = vmatprep.subr.bf16.mxu0 0
    %2733 = vmatpush1.bf16.msra.mxu0 %v2503
    %2734 = vmatprep.subr.bf16.mxu0 0
    %2735 = vmatpush1.bf16.msra.mxu0 %v2504
    %2736 = vmatprep.subr.bf16.mxu0 0
    %2737 = vmatpush1.bf16.msra.mxu0 %v2505
    %2738 = vmatprep.mubr.bf16.mxu0 %v2008
    %2739 = vmatmul.mubr.bf16.gmra.mrb[0].mxu0 %v2007
    %v2740 = vpop.f32.mrb[0].mxu0
    %v2741 = vadd.f32 %v2701, %v2740
    %v2742 = vpop.f32.mrb[0].mxu0
    %v2743 = vpop.f32.mrb[0].mxu0
    %v2744 = vpop.f32.mrb[0].mxu0
    %2745 = vdwg.mxu0
    %2746 = vmatprep.subr.bf16.mxu0 0
    %2747 = vmatpush1.bf16.msra.mxu0 %v2506
    %2748 = vmatprep.subr.bf16.mxu0 0
    %2749 = vmatpush1.bf16.msra.mxu0 %v2507
    %2750 = vmatprep.subr.bf16.mxu0 0
    %2751 = vmatpush1.bf16.msra.mxu0 %v2508
    %2752 = vmatprep.subr.bf16.mxu0 0
    %2753 = vmatpush1.bf16.msra.mxu0 %v2509
    %2754 = vmatprep.subr.bf16.mxu0 0
    %2755 = vmatpush1.bf16.msra.mxu0 %v2510
    %2756 = vmatprep.subr.bf16.mxu0 0
    %2757 = vmatpush1.bf16.msra.mxu0 %v2511
    %2758 = vmatprep.subr.bf16.mxu0 0
    %2759 = vmatpush1.bf16.msra.mxu0 %v2512
    %2760 = vmatprep.subr.bf16.mxu0 0
    %2761 = vmatpush1.bf16.msra.mxu0 %v2513
    %2762 = vmatprep.subr.bf16.mxu0 0
    %2763 = vmatpush1.bf16.msra.mxu0 0
    %2764 = vmatprep.subr.bf16.mxu0 0
    %2765 = vmatpush1.bf16.msra.mxu0 0
    %2766 = vmatprep.subr.bf16.mxu0 0
    %2767 = vmatpush1.bf16.msra.mxu0 0
    %2768 = vmatprep.subr.bf16.mxu0 0
    %2769 = vmatpush1.bf16.msra.mxu0 0
    %2770 = vmatprep.subr.bf16.mxu0 0
    %2771 = vmatpush1.bf16.msra.mxu0 0
    %2772 = vmatprep.subr.bf16.mxu0 0
    %2773 = vmatpush1.bf16.msra.mxu0 0
    %2774 = vmatprep.subr.bf16.mxu0 0
    %2775 = vmatpush1.bf16.msra.mxu0 0
    %2776 = vmatprep.subr.bf16.mxu0 0
    %2777 = vmatpush1.bf16.msra.mxu0 0
    %2778 = vmatprep.mubr.bf16.mxu0 0
    %2779 = vmatmul.mubr.bf16.gmra.mrb[0].mxu0 %v2009
    %v2780 = vpop.f32.mrb[0].mxu0
    %v2781 = vadd.f32 %v2741, %v2780
    %v2782 = vpop.f32.mrb[0].mxu0
    %v2783 = vpop.f32.mrb[0].mxu0
    %v2784 = vpop.f32.mrb[0].mxu0
    %2785 = vdwg.mxu0
    %v2786 = vmax.f32 %v2781, 0.0
    %v2787 = vld [vmem:[#allocation7] sm:$0xf]
    %v2788 = vld [vmem:[#allocation7 + $0x4] sm:$0xf]
    %v2789 = vld [vmem:[#allocation7 + $0x8] sm:$0xf]
    %v2790 = vld [vmem:[#allocation7 + $0xc] sm:$0xf]
    %v2791 = vld [vmem:[#allocation7 + $0x10] sm:$0xf]
    %v2792 = vld [vmem:[#allocation7 + $0x14] sm:$0xf]
    %v2793 = vld [vmem:[#allocation7 + $0x18] sm:$0xf]
    %v2794 = vld [vmem:[#allocation7 + $0x1c] sm:$0xf]
    %v2795 = vld [vmem:[#allocation7 + $0x20] sm:$0xf]
    %v2796 = vld [vmem:[#allocation7 + $0x24] sm:$0xf]
    %v2797 = vld [vmem:[#allocation7 + $0x28] sm:$0xf]
    %v2798 = vld [vmem:[#allocation7 + $0x2c] sm:$0xf]
    %v2799 = vld [vmem:[#allocation7 + $0x30] sm:$0xf]
    %v2800 = vld [vmem:[#allocation7 + $0x34] sm:$0xf]
    %v2801 = vld [vmem:[#allocation7 + $0x38] sm:$0xf]
    %v2802 = vld [vmem:[#allocation7 + $0x3c] sm:$0xf]
    %v2803 = vpack.c.bf16 %v2786, %v2786
    %v2804 = vld [vmem:[%s6] sm:$0x1]
    %v2806 = vlaneseq
    %v2807 = vshrl.u32 %v2806, 7
    %v2808 = vsub.s32 0, %v2807
    %v2809 = vrot.slane %v2804, %v2808
    %v2827 = vunpack.c.l.b16 %v2787
    %v2828 = vunpack.c.l.b16 %v2788
    %v2829 = vunpack.c.l.b16 %v2789
    %v2830 = vunpack.c.l.b16 %v2790
    %v2831 = vunpack.c.l.b16 %v2791
    %v2832 = vunpack.c.l.b16 %v2792
    %v2833 = vunpack.c.l.b16 %v2793
    %v2834 = vunpack.c.l.b16 %v2794
    %v2835 = vunpack.c.l.b16 %v2795
    %v2836 = vunpack.c.l.b16 %v2796
    %v2837 = vunpack.c.l.b16 %v2797
    %v2838 = vunpack.c.l.b16 %v2798
    %v2839 = vunpack.c.l.b16 %v2799
    %v2840 = vunpack.c.l.b16 %v2800
    %v2841 = vunpack.c.l.b16 %v2801
    %v2842 = vunpack.c.l.b16 %v2802
    %v2843 = vpack.c.b16 %v2828, %v2827
    %v2844 = vpack.c.b16 %v2830, %v2829
    %v2845 = vpack.c.b16 %v2832, %v2831
    %v2846 = vpack.c.b16 %v2834, %v2833
    %v2847 = vpack.c.b16 %v2836, %v2835
    %v2848 = vpack.c.b16 %v2838, %v2837
    %v2849 = vpack.c.b16 %v2840, %v2839
    %v2850 = vpack.c.b16 %v2842, %v2841
    %2859 = vmatprep.subr.bf16.mxu0 0
    %2860 = vmatpush1.bf16.msra.mxu0 %v2843
    %2861 = vmatprep.subr.bf16.mxu0 0
    %2862 = vmatpush1.bf16.msra.mxu0 %v2844
    %2863 = vmatprep.subr.bf16.mxu0 0
    %2864 = vmatpush1.bf16.msra.mxu0 %v2845
    %2865 = vmatprep.subr.bf16.mxu0 0
    %2866 = vmatpush1.bf16.msra.mxu0 %v2846
    %2867 = vmatprep.subr.bf16.mxu0 0
    %2868 = vmatpush1.bf16.msra.mxu0 %v2847
    %2869 = vmatprep.subr.bf16.mxu0 0
    %2870 = vmatpush1.bf16.msra.mxu0 %v2848
    %2871 = vmatprep.subr.bf16.mxu0 0
    %2872 = vmatpush1.bf16.msra.mxu0 %v2849
    %2873 = vmatprep.subr.bf16.mxu0 0
    %2874 = vmatpush1.bf16.msra.mxu0 %v2850
    %2875 = vmatprep.subr.bf16.mxu0 0
    %2876 = vmatpush1.bf16.msra.mxu0 0
    %2877 = vmatprep.subr.bf16.mxu0 0
    %2878 = vmatpush1.bf16.msra.mxu0 0
    %2879 = vmatprep.subr.bf16.mxu0 0
    %2880 = vmatpush1.bf16.msra.mxu0 0
    %2881 = vmatprep.subr.bf16.mxu0 0
    %2882 = vmatpush1.bf16.msra.mxu0 0
    %2883 = vmatprep.subr.bf16.mxu0 0
    %2884 = vmatpush1.bf16.msra.mxu0 0
    %2885 = vmatprep.subr.bf16.mxu0 0
    %2886 = vmatpush1.bf16.msra.mxu0 0
    %2887 = vmatprep.subr.bf16.mxu0 0
    %2888 = vmatpush1.bf16.msra.mxu0 0
    %2889 = vmatprep.subr.bf16.mxu0 0
    %2890 = vmatpush1.bf16.msra.mxu0 0
    %2891 = vmatprep.mubr.bf16.mxu0 0
    %2892 = vmatmul.mubr.bf16.gmra.mrb[0].mxu0 %v2803
    %v2893 = vpop.f32.mrb[0].mxu0
    %v2894 = vadd.f32 %v2809, %v2893
    %v2895 = vpop.f32.mrb[0].mxu0
    %v2896 = vpop.f32.mrb[0].mxu0
    %v2897 = vpop.f32.mrb[0].mxu0
    %2898 = vdwg.mxu0
    %v2899 = vmax.f32 %v2894, 0.0
    %v2900 = vld [vmem:[#allocation8] sm:$0xf]
    %v2901 = vld [vmem:[#allocation8 + $0x4] sm:$0xf]
    %v2902 = vld [vmem:[#allocation8 + $0x8] sm:$0xf]
    %v2903 = vld [vmem:[#allocation8 + $0xc] sm:$0xf]
    %v2904 = vld [vmem:[#allocation8 + $0x10] sm:$0xf]
    %v2905 = vld [vmem:[#allocation8 + $0x14] sm:$0xf]
    %v2906 = vld [vmem:[#allocation8 + $0x18] sm:$0xf]
    %v2907 = vld [vmem:[#allocation8 + $0x1c] sm:$0xf]
    %v2908 = vld [vmem:[#allocation8 + $0x20] sm:$0xf]
    %v2909 = vld [vmem:[#allocation8 + $0x24] sm:$0xf]
    %v2910 = vld [vmem:[#allocation8 + $0x28] sm:$0xf]
    %v2911 = vld [vmem:[#allocation8 + $0x2c] sm:$0xf]
    %v2912 = vld [vmem:[#allocation8 + $0x30] sm:$0xf]
    %v2913 = vld [vmem:[#allocation8 + $0x34] sm:$0xf]
    %v2914 = vld [vmem:[#allocation8 + $0x38] sm:$0xf]
    %v2915 = vld [vmem:[#allocation8 + $0x3c] sm:$0xf]
    %v2916 = vpack.c.bf16 %v2899, %v2899
    %v2917 = vld [vmem:[%s8] sm:$0x1]
    %v2919 = vlaneseq
    %v2920 = vshrl.u32 %v2919, 7
    %v2921 = vsub.s32 0, %v2920
    %v2922 = vrot.slane %v2917, %v2921
    %v2940 = vunpack.c.l.b16 %v2900
    %v2941 = vunpack.c.l.b16 %v2901
    %v2942 = vunpack.c.l.b16 %v2902
    %v2943 = vunpack.c.l.b16 %v2903
    %v2944 = vunpack.c.l.b16 %v2904
    %v2945 = vunpack.c.l.b16 %v2905
    %v2946 = vunpack.c.l.b16 %v2906
    %v2947 = vunpack.c.l.b16 %v2907
    %v2948 = vunpack.c.l.b16 %v2908
    %v2949 = vunpack.c.l.b16 %v2909
    %v2950 = vunpack.c.l.b16 %v2910
    %v2951 = vunpack.c.l.b16 %v2911
    %v2952 = vunpack.c.l.b16 %v2912
    %v2953 = vunpack.c.l.b16 %v2913
    %v2954 = vunpack.c.l.b16 %v2914
    %v2955 = vunpack.c.l.b16 %v2915
    %v2956 = vpack.c.b16 %v2941, %v2940
    %v2957 = vpack.c.b16 %v2943, %v2942
    %v2958 = vpack.c.b16 %v2945, %v2944
    %v2959 = vpack.c.b16 %v2947, %v2946
    %v2960 = vpack.c.b16 %v2949, %v2948
    %v2961 = vpack.c.b16 %v2951, %v2950
    %v2962 = vpack.c.b16 %v2953, %v2952
    %v2963 = vpack.c.b16 %v2955, %v2954
    %2972 = vmatprep.subr.bf16.mxu0 0
    %2973 = vmatpush1.bf16.msra.mxu0 %v2956
    %2974 = vmatprep.subr.bf16.mxu0 0
    %2975 = vmatpush1.bf16.msra.mxu0 %v2957
    %2976 = vmatprep.subr.bf16.mxu0 0
    %2977 = vmatpush1.bf16.msra.mxu0 %v2958
    %2978 = vmatprep.subr.bf16.mxu0 0
    %2979 = vmatpush1.bf16.msra.mxu0 %v2959
    %2980 = vmatprep.subr.bf16.mxu0 0
    %2981 = vmatpush1.bf16.msra.mxu0 %v2960
    %2982 = vmatprep.subr.bf16.mxu0 0
    %2983 = vmatpush1.bf16.msra.mxu0 %v2961
    %2984 = vmatprep.subr.bf16.mxu0 0
    %2985 = vmatpush1.bf16.msra.mxu0 %v2962
    %2986 = vmatprep.subr.bf16.mxu0 0
    %2987 = vmatpush1.bf16.msra.mxu0 %v2963
    %2988 = vmatprep.subr.bf16.mxu0 0
    %2989 = vmatpush1.bf16.msra.mxu0 0
    %2990 = vmatprep.subr.bf16.mxu0 0
    %2991 = vmatpush1.bf16.msra.mxu0 0
    %2992 = vmatprep.subr.bf16.mxu0 0
    %2993 = vmatpush1.bf16.msra.mxu0 0
    %2994 = vmatprep.subr.bf16.mxu0 0
    %2995 = vmatpush1.bf16.msra.mxu0 0
    %2996 = vmatprep.subr.bf16.mxu0 0
    %2997 = vmatpush1.bf16.msra.mxu0 0
    %2998 = vmatprep.subr.bf16.mxu0 0
    %2999 = vmatpush1.bf16.msra.mxu0 0
    %3000 = vmatprep.subr.bf16.mxu0 0
    %3001 = vmatpush1.bf16.msra.mxu0 0
    %3002 = vmatprep.subr.bf16.mxu0 0
    %3003 = vmatpush1.bf16.msra.mxu0 0
    %3004 = vmatprep.mubr.bf16.mxu0 0
    %3005 = vmatmul.mubr.bf16.gmra.mrb[0].mxu0 %v2916
    %v3006 = vpop.f32.mrb[0].mxu0
    %v3007 = vadd.f32 %v2922, %v3006
    %v3008 = vpop.f32.mrb[0].mxu0
    %v3009 = vpop.f32.mrb[0].mxu0
    %v3010 = vpop.f32.mrb[0].mxu0
    %3011 = vdwg.mxu0
    %v3012 = vxor.u32 %v3007, 2147483648
    %v3013 = vmul.f32 %v3012, 1.442695
    %v3014 = vpow.pop %v3013
    %v3015 = vadd.f32 %v3014, 1.0
    %v3016 = vrcp.pop %v3015
    %v3017 = vmul.f32 1.0, %v3016
    %v3018 = vmul.f32 %v3007, %v3017
    %v3019 = vpack.c.bf16 %v3018, %v3018
    %v3020 = vsub.f32 %v3007, -2.2
    %v3021 = vmul.f32 %v3020, 2.5
    %v3022 = vfloor.f32 %v3021
    %v3023 = vsub.f32 %v3021, %v3022
    %v3024 = vmul.f32 %v3023, %v3023
    %v3025 = vmul.f32 %v3024, %v3023
    %v3026 = vmul.f32 %v3025, 0.16666667
    %v3027 = vsub.f32 %v3024, %v3023
    %v3028 = vmul.f32 %v3027, 0.5
    %v3029 = vadd.f32 %v3028, 0.16666667
    %v3030 = vsub.f32 %v3029, %v3026
    %v3031 = vsub.f32 0.6666667, %v3024
    %v3032 = vmul.f32 %v3025, 0.5
    %v3033 = vadd.f32 %v3031, %v3032
    %v3034 = vsub.f32 1.0, %v3030
    %v3035 = vsub.f32 %v3034, %v3033
    %v3036 = vsub.f32 %v3035, %v3026
    %vm3037 = vcmp.eq.f32.partialorder %v3022, 0.0
    %v3038 = vsel %vm3037, %v3026, 0.0
    %vm3039 = vcmp.eq.f32.partialorder %v3022, 1.0
    %v3040 = vsel %vm3039, %v3036, 0.0
    %v3041 = vadd.f32 %v3038, %v3040
    %vm3042 = vcmp.eq.f32.partialorder %v3022, 2.0
    %v3043 = vsel %vm3042, %v3033, 0.0
    %v3044 = vadd.f32 %v3041, %v3043
    %vm3045 = vcmp.eq.f32.partialorder %v3022, 3.0
    %v3046 = vsel %vm3045, %v3030, 0.0
    %v3047 = vadd.f32 %v3044, %v3046
    %v3048 = vsel %vm3039, %v3026, 0.0
    %v3049 = vsel %vm3042, %v3036, 0.0
    %v3050 = vadd.f32 %v3048, %v3049
    %v3051 = vsel %vm3045, %v3033, 0.0
    %v3052 = vadd.f32 %v3050, %v3051
    %vm3053 = vcmp.eq.f32.partialorder %v3022, 4.0
    %v3054 = vsel %vm3053, %v3030, 0.0
    %v3055 = vadd.f32 %v3052, %v3054
    %v3056 = vsel %vm3042, %v3026, 0.0
    %v3057 = vsel %vm3045, %v3036, 0.0
    %v3058 = vadd.f32 %v3056, %v3057
    %v3059 = vsel %vm3053, %v3033, 0.0
    %v3060 = vadd.f32 %v3058, %v3059
    %vm3061 = vcmp.eq.f32.partialorder %v3022, 5.0
    %v3062 = vsel %vm3061, %v3030, 0.0
    %v3063 = vadd.f32 %v3060, %v3062
    %v3064 = vsel %vm3045, %v3026, 0.0
    %v3065 = vsel %vm3053, %v3036, 0.0
    %v3066 = vadd.f32 %v3064, %v3065
    %v3067 = vsel %vm3061, %v3033, 0.0
    %v3068 = vadd.f32 %v3066, %v3067
    %vm3069 = vcmp.eq.f32.partialorder %v3022, 6.0
    %v3070 = vsel %vm3069, %v3030, 0.0
    %v3071 = vadd.f32 %v3068, %v3070
    %v3072 = vsel %vm3053, %v3026, 0.0
    %v3073 = vsel %vm3061, %v3036, 0.0
    %v3074 = vadd.f32 %v3072, %v3073
    %v3075 = vsel %vm3069, %v3033, 0.0
    %v3076 = vadd.f32 %v3074, %v3075
    %vm3077 = vcmp.eq.f32.partialorder %v3022, 7.0
    %v3078 = vsel %vm3077, %v3030, 0.0
    %v3079 = vadd.f32 %v3076, %v3078
    %v3080 = vsel %vm3061, %v3026, 0.0
    %v3081 = vsel %vm3069, %v3036, 0.0
    %v3082 = vadd.f32 %v3080, %v3081
    %v3083 = vsel %vm3077, %v3033, 0.0
    %v3084 = vadd.f32 %v3082, %v3083
    %vm3085 = vcmp.eq.f32.partialorder %v3022, 8.0
    %v3086 = vsel %vm3085, %v3030, 0.0
    %v3087 = vadd.f32 %v3084, %v3086
    %v3088 = vsel %vm3069, %v3026, 0.0
    %v3089 = vsel %vm3077, %v3036, 0.0
    %v3090 = vadd.f32 %v3088, %v3089
    %v3091 = vsel %vm3085, %v3033, 0.0
    %v3092 = vadd.f32 %v3090, %v3091
    %vm3093 = vcmp.eq.f32.partialorder %v3022, 9.0
    %v3094 = vsel %vm3093, %v3030, 0.0
    %v3095 = vadd.f32 %v3092, %v3094
    %v3096 = vsel %vm3077, %v3026, 0.0
    %v3097 = vsel %vm3085, %v3036, 0.0
    %v3098 = vadd.f32 %v3096, %v3097
    %v3099 = vsel %vm3093, %v3033, 0.0
    %v3100 = vadd.f32 %v3098, %v3099
    %vm3101 = vcmp.eq.f32.partialorder %v3022, 10.0
    %v3102 = vsel %vm3101, %v3030, 0.0
    %v3103 = vadd.f32 %v3100, %v3102
    %v3104 = vpack.c.bf16 %v3047, %v3047
    %v3105 = vpack.c.bf16 %v3055, %v3055
    %v3106 = vpack.c.bf16 %v3063, %v3063
    %v3107 = vpack.c.bf16 %v3071, %v3071
    %v3108 = vpack.c.bf16 %v3079, %v3079
    %v3109 = vpack.c.bf16 %v3087, %v3087
    %v3110 = vpack.c.bf16 %v3095, %v3095
    %v3111 = vpack.c.bf16 %v3103, %v3103
    %v3112 = vld [vmem:[#allocation10] sm:$0xf]
    %v3113 = vld [vmem:[#allocation10 + $0x4] sm:$0xf]
    %v3114 = vld [vmem:[#allocation10 + $0x8] sm:$0xf]
    %v3115 = vld [vmem:[#allocation10 + $0xc] sm:$0xf]
    %v3116 = vld [vmem:[#allocation10 + $0x10] sm:$0xf]
    %v3117 = vld [vmem:[#allocation10 + $0x14] sm:$0xf]
    %v3118 = vld [vmem:[#allocation10 + $0x18] sm:$0xf]
    %v3119 = vld [vmem:[#allocation10 + $0x1c] sm:$0xf]
    %v3120 = vld [vmem:[#allocation10 + $0x20] sm:$0xf]
    %v3121 = vld [vmem:[#allocation10 + $0x24] sm:$0xf]
    %v3122 = vld [vmem:[#allocation10 + $0x28] sm:$0xf]
    %v3123 = vld [vmem:[#allocation10 + $0x2c] sm:$0xf]
    %v3124 = vld [vmem:[#allocation10 + $0x30] sm:$0xf]
    %v3125 = vld [vmem:[#allocation10 + $0x34] sm:$0xf]
    %v3126 = vld [vmem:[#allocation10 + $0x38] sm:$0xf]
    %v3127 = vld [vmem:[#allocation10 + $0x3c] sm:$0xf]
    %v3128 = vld [vmem:[#allocation10 + $0x40] sm:$0xf]
    %v3129 = vld [vmem:[#allocation10 + $0x44] sm:$0xf]
    %v3130 = vld [vmem:[#allocation10 + $0x48] sm:$0xf]
    %v3131 = vld [vmem:[#allocation10 + $0x4c] sm:$0xf]
    %v3132 = vld [vmem:[#allocation10 + $0x50] sm:$0xf]
    %v3133 = vld [vmem:[#allocation10 + $0x54] sm:$0xf]
    %v3134 = vld [vmem:[#allocation10 + $0x58] sm:$0xf]
    %v3135 = vld [vmem:[#allocation10 + $0x5c] sm:$0xf]
    %v3136 = vld [vmem:[#allocation10 + $0x60] sm:$0xf]
    %v3137 = vld [vmem:[#allocation10 + $0x64] sm:$0xf]
    %v3138 = vld [vmem:[#allocation10 + $0x68] sm:$0xf]
    %v3139 = vld [vmem:[#allocation10 + $0x6c] sm:$0xf]
    %v3140 = vld [vmem:[#allocation10 + $0x70] sm:$0xf]
    %v3141 = vld [vmem:[#allocation10 + $0x74] sm:$0xf]
    %v3142 = vld [vmem:[#allocation10 + $0x78] sm:$0xf]
    %v3143 = vld [vmem:[#allocation10 + $0x7c] sm:$0xf]
    %v3144 = vld [vmem:[#allocation10 + $0x80] sm:$0xf]
    %v3145 = vld [vmem:[#allocation10 + $0x84] sm:$0xf]
    %v3146 = vld [vmem:[#allocation10 + $0x88] sm:$0xf]
    %v3147 = vld [vmem:[#allocation10 + $0x8c] sm:$0xf]
    %v3148 = vld [vmem:[#allocation10 + $0x90] sm:$0xf]
    %v3149 = vld [vmem:[#allocation10 + $0x94] sm:$0xf]
    %v3150 = vld [vmem:[#allocation10 + $0x98] sm:$0xf]
    %v3151 = vld [vmem:[#allocation10 + $0x9c] sm:$0xf]
    %v3152 = vld [vmem:[#allocation10 + $0xa0] sm:$0xf]
    %v3153 = vld [vmem:[#allocation10 + $0xa4] sm:$0xf]
    %v3154 = vld [vmem:[#allocation10 + $0xa8] sm:$0xf]
    %v3155 = vld [vmem:[#allocation10 + $0xac] sm:$0xf]
    %v3156 = vld [vmem:[#allocation10 + $0xb0] sm:$0xf]
    %v3157 = vld [vmem:[#allocation10 + $0xb4] sm:$0xf]
    %v3158 = vld [vmem:[#allocation10 + $0xb8] sm:$0xf]
    %v3159 = vld [vmem:[#allocation10 + $0xbc] sm:$0xf]
    %v3160 = vld [vmem:[#allocation10 + $0xc0] sm:$0xf]
    %v3161 = vld [vmem:[#allocation10 + $0xc4] sm:$0xf]
    %v3162 = vld [vmem:[#allocation10 + $0xc8] sm:$0xf]
    %v3163 = vld [vmem:[#allocation10 + $0xcc] sm:$0xf]
    %v3164 = vld [vmem:[#allocation10 + $0xd0] sm:$0xf]
    %v3165 = vld [vmem:[#allocation10 + $0xd4] sm:$0xf]
    %v3166 = vld [vmem:[#allocation10 + $0xd8] sm:$0xf]
    %v3167 = vld [vmem:[#allocation10 + $0xdc] sm:$0xf]
    %v3168 = vld [vmem:[#allocation10 + $0xe0] sm:$0xf]
    %v3169 = vld [vmem:[#allocation10 + $0xe4] sm:$0xf]
    %v3170 = vld [vmem:[#allocation10 + $0xe8] sm:$0xf]
    %v3171 = vld [vmem:[#allocation10 + $0xec] sm:$0xf]
    %v3172 = vld [vmem:[#allocation10 + $0xf0] sm:$0xf]
    %v3173 = vld [vmem:[#allocation10 + $0xf4] sm:$0xf]
    %v3174 = vld [vmem:[#allocation10 + $0xf8] sm:$0xf]
    %v3175 = vld [vmem:[#allocation10 + $0xfc] sm:$0xf]
    %v3176 = vld [vmem:[#allocation10 + $0x100] sm:$0xf]
    %v3177 = vld [vmem:[#allocation10 + $0x104] sm:$0xf]
    %v3178 = vld [vmem:[#allocation10 + $0x108] sm:$0xf]
    %v3179 = vld [vmem:[#allocation10 + $0x10c] sm:$0xf]
    %v3180 = vld [vmem:[#allocation10 + $0x110] sm:$0xf]
    %v3181 = vld [vmem:[#allocation10 + $0x114] sm:$0xf]
    %v3182 = vld [vmem:[#allocation10 + $0x118] sm:$0xf]
    %v3183 = vld [vmem:[#allocation10 + $0x11c] sm:$0xf]
    %v3184 = vld [vmem:[#allocation10 + $0x120] sm:$0xf]
    %v3185 = vld [vmem:[#allocation10 + $0x124] sm:$0xf]
    %v3186 = vld [vmem:[#allocation10 + $0x128] sm:$0xf]
    %v3187 = vld [vmem:[#allocation10 + $0x12c] sm:$0xf]
    %v3188 = vld [vmem:[#allocation10 + $0x130] sm:$0xf]
    %v3189 = vld [vmem:[#allocation10 + $0x134] sm:$0xf]
    %v3190 = vld [vmem:[#allocation10 + $0x138] sm:$0xf]
    %v3191 = vld [vmem:[#allocation10 + $0x13c] sm:$0xf]
    %v3192 = vld [vmem:[#allocation10 + $0x140] sm:$0xf]
    %v3193 = vld [vmem:[#allocation10 + $0x144] sm:$0xf]
    %v3194 = vld [vmem:[#allocation10 + $0x148] sm:$0xf]
    %v3195 = vld [vmem:[#allocation10 + $0x14c] sm:$0xf]
    %v3196 = vld [vmem:[#allocation10 + $0x150] sm:$0xf]
    %v3197 = vld [vmem:[#allocation10 + $0x154] sm:$0xf]
    %v3198 = vld [vmem:[#allocation10 + $0x158] sm:$0xf]
    %v3199 = vld [vmem:[#allocation10 + $0x15c] sm:$0xf]
    %v3200 = vld [vmem:[#allocation10 + $0x160] sm:$0xf]
    %v3201 = vld [vmem:[#allocation10 + $0x164] sm:$0xf]
    %v3202 = vld [vmem:[#allocation10 + $0x168] sm:$0xf]
    %v3203 = vld [vmem:[#allocation10 + $0x16c] sm:$0xf]
    %v3204 = vld [vmem:[#allocation10 + $0x170] sm:$0xf]
    %v3205 = vld [vmem:[#allocation10 + $0x174] sm:$0xf]
    %v3206 = vld [vmem:[#allocation10 + $0x178] sm:$0xf]
    %v3207 = vld [vmem:[#allocation10 + $0x17c] sm:$0xf]
    %v3208 = vld [vmem:[#allocation10 + $0x180] sm:$0xf]
    %v3209 = vld [vmem:[#allocation10 + $0x184] sm:$0xf]
    %v3210 = vld [vmem:[#allocation10 + $0x188] sm:$0xf]
    %v3211 = vld [vmem:[#allocation10 + $0x18c] sm:$0xf]
    %v3212 = vld [vmem:[#allocation10 + $0x190] sm:$0xf]
    %v3213 = vld [vmem:[#allocation10 + $0x194] sm:$0xf]
    %v3214 = vld [vmem:[#allocation10 + $0x198] sm:$0xf]
    %v3215 = vld [vmem:[#allocation10 + $0x19c] sm:$0xf]
    %v3216 = vld [vmem:[#allocation10 + $0x1a0] sm:$0xf]
    %v3217 = vld [vmem:[#allocation10 + $0x1a4] sm:$0xf]
    %v3218 = vld [vmem:[#allocation10 + $0x1a8] sm:$0xf]
    %v3219 = vld [vmem:[#allocation10 + $0x1ac] sm:$0xf]
    %v3220 = vld [vmem:[#allocation10 + $0x1b0] sm:$0xf]
    %v3221 = vld [vmem:[#allocation10 + $0x1b4] sm:$0xf]
    %v3222 = vld [vmem:[#allocation10 + $0x1b8] sm:$0xf]
    %v3223 = vld [vmem:[#allocation10 + $0x1bc] sm:$0xf]
    %v3224 = vld [vmem:[#allocation10 + $0x1c0] sm:$0xf]
    %v3225 = vld [vmem:[#allocation10 + $0x1c4] sm:$0xf]
    %v3226 = vld [vmem:[#allocation10 + $0x1c8] sm:$0xf]
    %v3227 = vld [vmem:[#allocation10 + $0x1cc] sm:$0xf]
    %v3228 = vld [vmem:[#allocation10 + $0x1d0] sm:$0xf]
    %v3229 = vld [vmem:[#allocation10 + $0x1d4] sm:$0xf]
    %v3230 = vld [vmem:[#allocation10 + $0x1d8] sm:$0xf]
    %v3231 = vld [vmem:[#allocation10 + $0x1dc] sm:$0xf]
    %v3232 = vld [vmem:[#allocation10 + $0x1e0] sm:$0xf]
    %v3233 = vld [vmem:[#allocation10 + $0x1e4] sm:$0xf]
    %v3234 = vld [vmem:[#allocation10 + $0x1e8] sm:$0xf]
    %v3235 = vld [vmem:[#allocation10 + $0x1ec] sm:$0xf]
    %v3236 = vld [vmem:[#allocation10 + $0x1f0] sm:$0xf]
    %v3237 = vld [vmem:[#allocation10 + $0x1f4] sm:$0xf]
    %v3238 = vld [vmem:[#allocation10 + $0x1f8] sm:$0xf]
    %v3239 = vld [vmem:[#allocation10 + $0x1fc] sm:$0xf]
    %v3240 = vld [vmem:[#allocation10 + $0x200] sm:$0xf]
    %v3241 = vld [vmem:[#allocation10 + $0x204] sm:$0xf]
    %v3242 = vld [vmem:[#allocation10 + $0x208] sm:$0xf]
    %v3243 = vld [vmem:[#allocation10 + $0x20c] sm:$0xf]
    %v3244 = vld [vmem:[#allocation10 + $0x210] sm:$0xf]
    %v3245 = vld [vmem:[#allocation10 + $0x214] sm:$0xf]
    %v3246 = vld [vmem:[#allocation10 + $0x218] sm:$0xf]
    %v3247 = vld [vmem:[#allocation10 + $0x21c] sm:$0xf]
    %v3248 = vld [vmem:[#allocation10 + $0x220] sm:$0xf]
    %v3249 = vld [vmem:[#allocation10 + $0x224] sm:$0xf]
    %v3250 = vld [vmem:[#allocation10 + $0x228] sm:$0xf]
    %v3251 = vld [vmem:[#allocation10 + $0x22c] sm:$0xf]
    %v3252 = vld [vmem:[#allocation10 + $0x230] sm:$0xf]
    %v3253 = vld [vmem:[#allocation10 + $0x234] sm:$0xf]
    %v3254 = vld [vmem:[#allocation10 + $0x238] sm:$0xf]
    %v3255 = vld [vmem:[#allocation10 + $0x23c] sm:$0xf]
    %v3400 = vunpack.c.l.b16 %v3112
    %v3401 = vunpack.c.l.b16 %v3113
    %v3402 = vunpack.c.l.b16 %v3114
    %v3403 = vunpack.c.l.b16 %v3115
    %v3404 = vunpack.c.l.b16 %v3116
    %v3405 = vunpack.c.l.b16 %v3117
    %v3406 = vunpack.c.l.b16 %v3118
    %v3407 = vunpack.c.l.b16 %v3119
    %v3408 = vunpack.c.l.b16 %v3120
    %v3409 = vunpack.c.l.b16 %v3121
    %v3410 = vunpack.c.l.b16 %v3122
    %v3411 = vunpack.c.l.b16 %v3123
    %v3412 = vunpack.c.l.b16 %v3124
    %v3413 = vunpack.c.l.b16 %v3125
    %v3414 = vunpack.c.l.b16 %v3126
    %v3415 = vunpack.c.l.b16 %v3127
    %v3416 = vunpack.c.l.b16 %v3128
    %v3417 = vunpack.c.l.b16 %v3129
    %v3418 = vunpack.c.l.b16 %v3130
    %v3419 = vunpack.c.l.b16 %v3131
    %v3420 = vunpack.c.l.b16 %v3132
    %v3421 = vunpack.c.l.b16 %v3133
    %v3422 = vunpack.c.l.b16 %v3134
    %v3423 = vunpack.c.l.b16 %v3135
    %v3424 = vunpack.c.l.b16 %v3136
    %v3425 = vunpack.c.l.b16 %v3137
    %v3426 = vunpack.c.l.b16 %v3138
    %v3427 = vunpack.c.l.b16 %v3139
    %v3428 = vunpack.c.l.b16 %v3140
    %v3429 = vunpack.c.l.b16 %v3141
    %v3430 = vunpack.c.l.b16 %v3142
    %v3431 = vunpack.c.l.b16 %v3143
    %v3432 = vunpack.c.l.b16 %v3144
    %v3433 = vunpack.c.l.b16 %v3145
    %v3434 = vunpack.c.l.b16 %v3146
    %v3435 = vunpack.c.l.b16 %v3147
    %v3436 = vunpack.c.l.b16 %v3148
    %v3437 = vunpack.c.l.b16 %v3149
    %v3438 = vunpack.c.l.b16 %v3150
    %v3439 = vunpack.c.l.b16 %v3151
    %v3440 = vunpack.c.l.b16 %v3152
    %v3441 = vunpack.c.l.b16 %v3153
    %v3442 = vunpack.c.l.b16 %v3154
    %v3443 = vunpack.c.l.b16 %v3155
    %v3444 = vunpack.c.l.b16 %v3156
    %v3445 = vunpack.c.l.b16 %v3157
    %v3446 = vunpack.c.l.b16 %v3158
    %v3447 = vunpack.c.l.b16 %v3159
    %v3448 = vunpack.c.l.b16 %v3160
    %v3449 = vunpack.c.l.b16 %v3161
    %v3450 = vunpack.c.l.b16 %v3162
    %v3451 = vunpack.c.l.b16 %v3163
    %v3452 = vunpack.c.l.b16 %v3164
    %v3453 = vunpack.c.l.b16 %v3165
    %v3454 = vunpack.c.l.b16 %v3166
    %v3455 = vunpack.c.l.b16 %v3167
    %v3456 = vunpack.c.l.b16 %v3168
    %v3457 = vunpack.c.l.b16 %v3169
    %v3458 = vunpack.c.l.b16 %v3170
    %v3459 = vunpack.c.l.b16 %v3171
    %v3460 = vunpack.c.l.b16 %v3172
    %v3461 = vunpack.c.l.b16 %v3173
    %v3462 = vunpack.c.l.b16 %v3174
    %v3463 = vunpack.c.l.b16 %v3175
    %v3464 = vunpack.c.l.b16 %v3176
    %v3465 = vunpack.c.l.b16 %v3177
    %v3466 = vunpack.c.l.b16 %v3178
    %v3467 = vunpack.c.l.b16 %v3179
    %v3468 = vunpack.c.l.b16 %v3180
    %v3469 = vunpack.c.l.b16 %v3181
    %v3470 = vunpack.c.l.b16 %v3182
    %v3471 = vunpack.c.l.b16 %v3183
    %v3472 = vunpack.c.l.b16 %v3184
    %v3473 = vunpack.c.l.b16 %v3185
    %v3474 = vunpack.c.l.b16 %v3186
    %v3475 = vunpack.c.l.b16 %v3187
    %v3476 = vunpack.c.l.b16 %v3188
    %v3477 = vunpack.c.l.b16 %v3189
    %v3478 = vunpack.c.l.b16 %v3190
    %v3479 = vunpack.c.l.b16 %v3191
    %v3480 = vunpack.c.l.b16 %v3192
    %v3481 = vunpack.c.l.b16 %v3193
    %v3482 = vunpack.c.l.b16 %v3194
    %v3483 = vunpack.c.l.b16 %v3195
    %v3484 = vunpack.c.l.b16 %v3196
    %v3485 = vunpack.c.l.b16 %v3197
    %v3486 = vunpack.c.l.b16 %v3198
    %v3487 = vunpack.c.l.b16 %v3199
    %v3488 = vunpack.c.l.b16 %v3200
    %v3489 = vunpack.c.l.b16 %v3201
    %v3490 = vunpack.c.l.b16 %v3202
    %v3491 = vunpack.c.l.b16 %v3203
    %v3492 = vunpack.c.l.b16 %v3204
    %v3493 = vunpack.c.l.b16 %v3205
    %v3494 = vunpack.c.l.b16 %v3206
    %v3495 = vunpack.c.l.b16 %v3207
    %v3496 = vunpack.c.l.b16 %v3208
    %v3497 = vunpack.c.l.b16 %v3209
    %v3498 = vunpack.c.l.b16 %v3210
    %v3499 = vunpack.c.l.b16 %v3211
    %v3500 = vunpack.c.l.b16 %v3212
    %v3501 = vunpack.c.l.b16 %v3213
    %v3502 = vunpack.c.l.b16 %v3214
    %v3503 = vunpack.c.l.b16 %v3215
    %v3504 = vunpack.c.l.b16 %v3216
    %v3505 = vunpack.c.l.b16 %v3217
    %v3506 = vunpack.c.l.b16 %v3218
    %v3507 = vunpack.c.l.b16 %v3219
    %v3508 = vunpack.c.l.b16 %v3220
    %v3509 = vunpack.c.l.b16 %v3221
    %v3510 = vunpack.c.l.b16 %v3222
    %v3511 = vunpack.c.l.b16 %v3223
    %v3512 = vunpack.c.l.b16 %v3224
    %v3513 = vunpack.c.l.b16 %v3225
    %v3514 = vunpack.c.l.b16 %v3226
    %v3515 = vunpack.c.l.b16 %v3227
    %v3516 = vunpack.c.l.b16 %v3228
    %v3517 = vunpack.c.l.b16 %v3229
    %v3518 = vunpack.c.l.b16 %v3230
    %v3519 = vunpack.c.l.b16 %v3231
    %v3520 = vunpack.c.l.b16 %v3232
    %v3521 = vunpack.c.l.b16 %v3233
    %v3522 = vunpack.c.l.b16 %v3234
    %v3523 = vunpack.c.l.b16 %v3235
    %v3524 = vunpack.c.l.b16 %v3236
    %v3525 = vunpack.c.l.b16 %v3237
    %v3526 = vunpack.c.l.b16 %v3238
    %v3527 = vunpack.c.l.b16 %v3239
    %v3528 = vunpack.c.l.b16 %v3240
    %v3529 = vunpack.c.l.b16 %v3241
    %v3530 = vunpack.c.l.b16 %v3242
    %v3531 = vunpack.c.l.b16 %v3243
    %v3532 = vunpack.c.l.b16 %v3244
    %v3533 = vunpack.c.l.b16 %v3245
    %v3534 = vunpack.c.l.b16 %v3246
    %v3535 = vunpack.c.l.b16 %v3247
    %v3536 = vunpack.c.l.b16 %v3248
    %v3537 = vunpack.c.l.b16 %v3249
    %v3538 = vunpack.c.l.b16 %v3250
    %v3539 = vunpack.c.l.b16 %v3251
    %v3540 = vunpack.c.l.b16 %v3252
    %v3541 = vunpack.c.l.b16 %v3253
    %v3542 = vunpack.c.l.b16 %v3254
    %v3543 = vunpack.c.l.b16 %v3255
    %v3544 = vpack.c.b16 %v3401, %v3400
    %v3545 = vpack.c.b16 %v3403, %v3402
    %v3546 = vpack.c.b16 %v3405, %v3404
    %v3547 = vpack.c.b16 %v3407, %v3406
    %v3548 = vpack.c.b16 %v3409, %v3408
    %v3549 = vpack.c.b16 %v3411, %v3410
    %v3550 = vpack.c.b16 %v3413, %v3412
    %v3551 = vpack.c.b16 %v3415, %v3414
    %v3552 = vpack.c.b16 %v3417, %v3416
    %v3553 = vpack.c.b16 %v3419, %v3418
    %v3554 = vpack.c.b16 %v3421, %v3420
    %v3555 = vpack.c.b16 %v3423, %v3422
    %v3556 = vpack.c.b16 %v3425, %v3424
    %v3557 = vpack.c.b16 %v3427, %v3426
    %v3558 = vpack.c.b16 %v3429, %v3428
    %v3559 = vpack.c.b16 %v3431, %v3430
    %v3560 = vpack.c.b16 %v3433, %v3432
    %v3561 = vpack.c.b16 %v3435, %v3434
    %v3562 = vpack.c.b16 %v3437, %v3436
    %v3563 = vpack.c.b16 %v3439, %v3438
    %v3564 = vpack.c.b16 %v3441, %v3440
    %v3565 = vpack.c.b16 %v3443, %v3442
    %v3566 = vpack.c.b16 %v3445, %v3444
    %v3567 = vpack.c.b16 %v3447, %v3446
    %v3568 = vpack.c.b16 %v3449, %v3448
    %v3569 = vpack.c.b16 %v3451, %v3450
    %v3570 = vpack.c.b16 %v3453, %v3452
    %v3571 = vpack.c.b16 %v3455, %v3454
    %v3572 = vpack.c.b16 %v3457, %v3456
    %v3573 = vpack.c.b16 %v3459, %v3458
    %v3574 = vpack.c.b16 %v3461, %v3460
    %v3575 = vpack.c.b16 %v3463, %v3462
    %v3576 = vpack.c.b16 %v3465, %v3464
    %v3577 = vpack.c.b16 %v3467, %v3466
    %v3578 = vpack.c.b16 %v3469, %v3468
    %v3579 = vpack.c.b16 %v3471, %v3470
    %v3580 = vpack.c.b16 %v3473, %v3472
    %v3581 = vpack.c.b16 %v3475, %v3474
    %v3582 = vpack.c.b16 %v3477, %v3476
    %v3583 = vpack.c.b16 %v3479, %v3478
    %v3584 = vpack.c.b16 %v3481, %v3480
    %v3585 = vpack.c.b16 %v3483, %v3482
    %v3586 = vpack.c.b16 %v3485, %v3484
    %v3587 = vpack.c.b16 %v3487, %v3486
    %v3588 = vpack.c.b16 %v3489, %v3488
    %v3589 = vpack.c.b16 %v3491, %v3490
    %v3590 = vpack.c.b16 %v3493, %v3492
    %v3591 = vpack.c.b16 %v3495, %v3494
    %v3592 = vpack.c.b16 %v3497, %v3496
    %v3593 = vpack.c.b16 %v3499, %v3498
    %v3594 = vpack.c.b16 %v3501, %v3500
    %v3595 = vpack.c.b16 %v3503, %v3502
    %v3596 = vpack.c.b16 %v3505, %v3504
    %v3597 = vpack.c.b16 %v3507, %v3506
    %v3598 = vpack.c.b16 %v3509, %v3508
    %v3599 = vpack.c.b16 %v3511, %v3510
    %v3600 = vpack.c.b16 %v3513, %v3512
    %v3601 = vpack.c.b16 %v3515, %v3514
    %v3602 = vpack.c.b16 %v3517, %v3516
    %v3603 = vpack.c.b16 %v3519, %v3518
    %v3604 = vpack.c.b16 %v3521, %v3520
    %v3605 = vpack.c.b16 %v3523, %v3522
    %v3606 = vpack.c.b16 %v3525, %v3524
    %v3607 = vpack.c.b16 %v3527, %v3526
    %v3608 = vpack.c.b16 %v3529, %v3528
    %v3609 = vpack.c.b16 %v3531, %v3530
    %v3610 = vpack.c.b16 %v3533, %v3532
    %v3611 = vpack.c.b16 %v3535, %v3534
    %v3612 = vpack.c.b16 %v3537, %v3536
    %v3613 = vpack.c.b16 %v3539, %v3538
    %v3614 = vpack.c.b16 %v3541, %v3540
    %v3615 = vpack.c.b16 %v3543, %v3542
    %3688 = vmatprep.subr.bf16.mxu0 0
    %3689 = vmatpush1.bf16.msra.mxu0 %v3544
    %3690 = vmatprep.subr.bf16.mxu0 0
    %3691 = vmatpush1.bf16.msra.mxu0 %v3545
    %3692 = vmatprep.subr.bf16.mxu0 0
    %3693 = vmatpush1.bf16.msra.mxu0 %v3546
    %3694 = vmatprep.subr.bf16.mxu0 0
    %3695 = vmatpush1.bf16.msra.mxu0 %v3547
    %3696 = vmatprep.subr.bf16.mxu0 0
    %3697 = vmatpush1.bf16.msra.mxu0 %v3548
    %3698 = vmatprep.subr.bf16.mxu0 0
    %3699 = vmatpush1.bf16.msra.mxu0 %v3549
    %3700 = vmatprep.subr.bf16.mxu0 0
    %3701 = vmatpush1.bf16.msra.mxu0 %v3550
    %3702 = vmatprep.subr.bf16.mxu0 0
    %3703 = vmatpush1.bf16.msra.mxu0 %v3551
    %3704 = vmatprep.subr.bf16.mxu0 0
    %3705 = vmatpush1.bf16.msra.mxu0 %v3552
    %3706 = vmatprep.subr.bf16.mxu0 0
    %3707 = vmatpush1.bf16.msra.mxu0 %v3553
    %3708 = vmatprep.subr.bf16.mxu0 0
    %3709 = vmatpush1.bf16.msra.mxu0 %v3554
    %3710 = vmatprep.subr.bf16.mxu0 0
    %3711 = vmatpush1.bf16.msra.mxu0 %v3555
    %3712 = vmatprep.subr.bf16.mxu0 0
    %3713 = vmatpush1.bf16.msra.mxu0 %v3556
    %3714 = vmatprep.subr.bf16.mxu0 0
    %3715 = vmatpush1.bf16.msra.mxu0 %v3557
    %3716 = vmatprep.subr.bf16.mxu0 0
    %3717 = vmatpush1.bf16.msra.mxu0 %v3558
    %3718 = vmatprep.subr.bf16.mxu0 0
    %3719 = vmatpush1.bf16.msra.mxu0 %v3559
    %3720 = vmatprep.mubr.bf16.mxu0 %v3104
    %3721 = vmatmul.mubr.bf16.gmra.mrb[0].mxu0 %v3019
    %v3722 = vpop.f32.mrb[0].mxu0
    %v3723 = vadd.f32 0.0, %v3722
    %v3724 = vpop.f32.mrb[0].mxu0
    %v3725 = vpop.f32.mrb[0].mxu0
    %v3726 = vpop.f32.mrb[0].mxu0
    %3727 = vdwg.mxu0
    %3728 = vmatprep.subr.bf16.mxu0 0
    %3729 = vmatpush1.bf16.msra.mxu0 %v3560
    %3730 = vmatprep.subr.bf16.mxu0 0
    %3731 = vmatpush1.bf16.msra.mxu0 %v3561
    %3732 = vmatprep.subr.bf16.mxu0 0
    %3733 = vmatpush1.bf16.msra.mxu0 %v3562
    %3734 = vmatprep.subr.bf16.mxu0 0
    %3735 = vmatpush1.bf16.msra.mxu0 %v3563
    %3736 = vmatprep.subr.bf16.mxu0 0
    %3737 = vmatpush1.bf16.msra.mxu0 %v3564
    %3738 = vmatprep.subr.bf16.mxu0 0
    %3739 = vmatpush1.bf16.msra.mxu0 %v3565
    %3740 = vmatprep.subr.bf16.mxu0 0
    %3741 = vmatpush1.bf16.msra.mxu0 %v3566
    %3742 = vmatprep.subr.bf16.mxu0 0
    %3743 = vmatpush1.bf16.msra.mxu0 %v3567
    %3744 = vmatprep.subr.bf16.mxu0 0
    %3745 = vmatpush1.bf16.msra.mxu0 %v3568
    %3746 = vmatprep.subr.bf16.mxu0 0
    %3747 = vmatpush1.bf16.msra.mxu0 %v3569
    %3748 = vmatprep.subr.bf16.mxu0 0
    %3749 = vmatpush1.bf16.msra.mxu0 %v3570
    %3750 = vmatprep.subr.bf16.mxu0 0
    %3751 = vmatpush1.bf16.msra.mxu0 %v3571
    %3752 = vmatprep.subr.bf16.mxu0 0
    %3753 = vmatpush1.bf16.msra.mxu0 %v3572
    %3754 = vmatprep.subr.bf16.mxu0 0
    %3755 = vmatpush1.bf16.msra.mxu0 %v3573
    %3756 = vmatprep.subr.bf16.mxu0 0
    %3757 = vmatpush1.bf16.msra.mxu0 %v3574
    %3758 = vmatprep.subr.bf16.mxu0 0
    %3759 = vmatpush1.bf16.msra.mxu0 %v3575
    %3760 = vmatprep.mubr.bf16.mxu0 %v3106
    %3761 = vmatmul.mubr.bf16.gmra.mrb[0].mxu0 %v3105
    %v3762 = vpop.f32.mrb[0].mxu0
    %v3763 = vadd.f32 %v3723, %v3762
    %v3764 = vpop.f32.mrb[0].mxu0
    %v3765 = vpop.f32.mrb[0].mxu0
    %v3766 = vpop.f32.mrb[0].mxu0
    %3767 = vdwg.mxu0
    %3768 = vmatprep.subr.bf16.mxu0 0
    %3769 = vmatpush1.bf16.msra.mxu0 %v3576
    %3770 = vmatprep.subr.bf16.mxu0 0
    %3771 = vmatpush1.bf16.msra.mxu0 %v3577
    %3772 = vmatprep.subr.bf16.mxu0 0
    %3773 = vmatpush1.bf16.msra.mxu0 %v3578
    %3774 = vmatprep.subr.bf16.mxu0 0
    %3775 = vmatpush1.bf16.msra.mxu0 %v3579
    %3776 = vmatprep.subr.bf16.mxu0 0
    %3777 = vmatpush1.bf16.msra.mxu0 %v3580
    %3778 = vmatprep.subr.bf16.mxu0 0
    %3779 = vmatpush1.bf16.msra.mxu0 %v3581
    %3780 = vmatprep.subr.bf16.mxu0 0
    %3781 = vmatpush1.bf16.msra.mxu0 %v3582
    %3782 = vmatprep.subr.bf16.mxu0 0
    %3783 = vmatpush1.bf16.msra.mxu0 %v3583
    %3784 = vmatprep.subr.bf16.mxu0 0
    %3785 = vmatpush1.bf16.msra.mxu0 %v3584
    %3786 = vmatprep.subr.bf16.mxu0 0
    %3787 = vmatpush1.bf16.msra.mxu0 %v3585
    %3788 = vmatprep.subr.bf16.mxu0 0
    %3789 = vmatpush1.bf16.msra.mxu0 %v3586
    %3790 = vmatprep.subr.bf16.mxu0 0
    %3791 = vmatpush1.bf16.msra.mxu0 %v3587
    %3792 = vmatprep.subr.bf16.mxu0 0
    %3793 = vmatpush1.bf16.msra.mxu0 %v3588
    %3794 = vmatprep.subr.bf16.mxu0 0
    %3795 = vmatpush1.bf16.msra.mxu0 %v3589
    %3796 = vmatprep.subr.bf16.mxu0 0
    %3797 = vmatpush1.bf16.msra.mxu0 %v3590
    %3798 = vmatprep.subr.bf16.mxu0 0
    %3799 = vmatpush1.bf16.msra.mxu0 %v3591
    %3800 = vmatprep.mubr.bf16.mxu0 %v3108
    %3801 = vmatmul.mubr.bf16.gmra.mrb[0].mxu0 %v3107
    %v3802 = vpop.f32.mrb[0].mxu0
    %v3803 = vadd.f32 %v3763, %v3802
    %v3804 = vpop.f32.mrb[0].mxu0
    %v3805 = vpop.f32.mrb[0].mxu0
    %v3806 = vpop.f32.mrb[0].mxu0
    %3807 = vdwg.mxu0
    %3808 = vmatprep.subr.bf16.mxu0 0
    %3809 = vmatpush1.bf16.msra.mxu0 %v3592
    %3810 = vmatprep.subr.bf16.mxu0 0
    %3811 = vmatpush1.bf16.msra.mxu0 %v3593
    %3812 = vmatprep.subr.bf16.mxu0 0
    %3813 = vmatpush1.bf16.msra.mxu0 %v3594
    %3814 = vmatprep.subr.bf16.mxu0 0
    %3815 = vmatpush1.bf16.msra.mxu0 %v3595
    %3816 = vmatprep.subr.bf16.mxu0 0
    %3817 = vmatpush1.bf16.msra.mxu0 %v3596
    %3818 = vmatprep.subr.bf16.mxu0 0
    %3819 = vmatpush1.bf16.msra.mxu0 %v3597
    %3820 = vmatprep.subr.bf16.mxu0 0
    %3821 = vmatpush1.bf16.msra.mxu0 %v3598
    %3822 = vmatprep.subr.bf16.mxu0 0
    %3823 = vmatpush1.bf16.msra.mxu0 %v3599
    %3824 = vmatprep.subr.bf16.mxu0 0
    %3825 = vmatpush1.bf16.msra.mxu0 %v3600
    %3826 = vmatprep.subr.bf16.mxu0 0
    %3827 = vmatpush1.bf16.msra.mxu0 %v3601
    %3828 = vmatprep.subr.bf16.mxu0 0
    %3829 = vmatpush1.bf16.msra.mxu0 %v3602
    %3830 = vmatprep.subr.bf16.mxu0 0
    %3831 = vmatpush1.bf16.msra.mxu0 %v3603
    %3832 = vmatprep.subr.bf16.mxu0 0
    %3833 = vmatpush1.bf16.msra.mxu0 %v3604
    %3834 = vmatprep.subr.bf16.mxu0 0
    %3835 = vmatpush1.bf16.msra.mxu0 %v3605
    %3836 = vmatprep.subr.bf16.mxu0 0
    %3837 = vmatpush1.bf16.msra.mxu0 %v3606
    %3838 = vmatprep.subr.bf16.mxu0 0
    %3839 = vmatpush1.bf16.msra.mxu0 %v3607
    %3840 = vmatprep.mubr.bf16.mxu0 %v3110
    %3841 = vmatmul.mubr.bf16.gmra.mrb[0].mxu0 %v3109
    %v3842 = vpop.f32.mrb[0].mxu0
    %v3843 = vadd.f32 %v3803, %v3842
    %v3844 = vpop.f32.mrb[0].mxu0
    %v3845 = vpop.f32.mrb[0].mxu0
    %v3846 = vpop.f32.mrb[0].mxu0
    %3847 = vdwg.mxu0
    %3848 = vmatprep.subr.bf16.mxu0 0
    %3849 = vmatpush1.bf16.msra.mxu0 %v3608
    %3850 = vmatprep.subr.bf16.mxu0 0
    %3851 = vmatpush1.bf16.msra.mxu0 %v3609
    %3852 = vmatprep.subr.bf16.mxu0 0
    %3853 = vmatpush1.bf16.msra.mxu0 %v3610
    %3854 = vmatprep.subr.bf16.mxu0 0
    %3855 = vmatpush1.bf16.msra.mxu0 %v3611
    %3856 = vmatprep.subr.bf16.mxu0 0
    %3857 = vmatpush1.bf16.msra.mxu0 %v3612
    %3858 = vmatprep.subr.bf16.mxu0 0
    %3859 = vmatpush1.bf16.msra.mxu0 %v3613
    %3860 = vmatprep.subr.bf16.mxu0 0
    %3861 = vmatpush1.bf16.msra.mxu0 %v3614
    %3862 = vmatprep.subr.bf16.mxu0 0
    %3863 = vmatpush1.bf16.msra.mxu0 %v3615
    %3864 = vmatprep.subr.bf16.mxu0 0
    %3865 = vmatpush1.bf16.msra.mxu0 0
    %3866 = vmatprep.subr.bf16.mxu0 0
    %3867 = vmatpush1.bf16.msra.mxu0 0
    %3868 = vmatprep.subr.bf16.mxu0 0
    %3869 = vmatpush1.bf16.msra.mxu0 0
    %3870 = vmatprep.subr.bf16.mxu0 0
    %3871 = vmatpush1.bf16.msra.mxu0 0
    %3872 = vmatprep.subr.bf16.mxu0 0
    %3873 = vmatpush1.bf16.msra.mxu0 0
    %3874 = vmatprep.subr.bf16.mxu0 0
    %3875 = vmatpush1.bf16.msra.mxu0 0
    %3876 = vmatprep.subr.bf16.mxu0 0
    %3877 = vmatpush1.bf16.msra.mxu0 0
    %3878 = vmatprep.subr.bf16.mxu0 0
    %3879 = vmatpush1.bf16.msra.mxu0 0
    %3880 = vmatprep.mubr.bf16.mxu0 0
    %3881 = vmatmul.mubr.bf16.gmra.mrb[0].mxu0 %v3111
    %v3882 = vpop.f32.mrb[0].mxu0
    %v3883 = vadd.f32 %v3843, %v3882
    %v3884 = vpop.f32.mrb[0].mxu0
    %v3885 = vpop.f32.mrb[0].mxu0
    %v3886 = vpop.f32.mrb[0].mxu0
    %3887 = vdwg.mxu0
    %v3888 = vxor.u32 %v3883, 2147483648
    %v3889 = vmul.f32 %v3888, 1.442695
    %v3890 = vpow.pop %v3889
    %v3891 = vadd.f32 %v3890, 1.0
    %v3892 = vrcp.pop %v3891
    %v3893 = vmul.f32 1.0, %v3892
    %v3894 = vmul.f32 %v3883, %v3893
    %v3895 = vpack.c.bf16 %v3894, %v3894
    %v3896 = vsub.f32 %v3883, -2.2
    %v3897 = vmul.f32 %v3896, 2.5
    %v3898 = vfloor.f32 %v3897
    %v3899 = vsub.f32 %v3897, %v3898
    %v3900 = vmul.f32 %v3899, %v3899
    %v3901 = vmul.f32 %v3900, %v3899
    %v3902 = vmul.f32 %v3901, 0.16666667
    %v3903 = vsub.f32 %v3900, %v3899
    %v3904 = vmul.f32 %v3903, 0.5
    %v3905 = vadd.f32 %v3904, 0.16666667
    %v3906 = vsub.f32 %v3905, %v3902
    %v3907 = vsub.f32 0.6666667, %v3900
    %v3908 = vmul.f32 %v3901, 0.5
    %v3909 = vadd.f32 %v3907, %v3908
    %v3910 = vsub.f32 1.0, %v3906
    %v3911 = vsub.f32 %v3910, %v3909
    %v3912 = vsub.f32 %v3911, %v3902
    %vm3913 = vcmp.eq.f32.partialorder %v3898, 0.0
    %v3914 = vsel %vm3913, %v3902, 0.0
    %vm3915 = vcmp.eq.f32.partialorder %v3898, 1.0
    %v3916 = vsel %vm3915, %v3912, 0.0
    %v3917 = vadd.f32 %v3914, %v3916
    %vm3918 = vcmp.eq.f32.partialorder %v3898, 2.0
    %v3919 = vsel %vm3918, %v3909, 0.0
    %v3920 = vadd.f32 %v3917, %v3919
    %vm3921 = vcmp.eq.f32.partialorder %v3898, 3.0
    %v3922 = vsel %vm3921, %v3906, 0.0
    %v3923 = vadd.f32 %v3920, %v3922
    %v3924 = vsel %vm3915, %v3902, 0.0
    %v3925 = vsel %vm3918, %v3912, 0.0
    %v3926 = vadd.f32 %v3924, %v3925
    %v3927 = vsel %vm3921, %v3909, 0.0
    %v3928 = vadd.f32 %v3926, %v3927
    %vm3929 = vcmp.eq.f32.partialorder %v3898, 4.0
    %v3930 = vsel %vm3929, %v3906, 0.0
    %v3931 = vadd.f32 %v3928, %v3930
    %v3932 = vsel %vm3918, %v3902, 0.0
    %v3933 = vsel %vm3921, %v3912, 0.0
    %v3934 = vadd.f32 %v3932, %v3933
    %v3935 = vsel %vm3929, %v3909, 0.0
    %v3936 = vadd.f32 %v3934, %v3935
    %vm3937 = vcmp.eq.f32.partialorder %v3898, 5.0
    %v3938 = vsel %vm3937, %v3906, 0.0
    %v3939 = vadd.f32 %v3936, %v3938
    %v3940 = vsel %vm3921, %v3902, 0.0
    %v3941 = vsel %vm3929, %v3912, 0.0
    %v3942 = vadd.f32 %v3940, %v3941
    %v3943 = vsel %vm3937, %v3909, 0.0
    %v3944 = vadd.f32 %v3942, %v3943
    %vm3945 = vcmp.eq.f32.partialorder %v3898, 6.0
    %v3946 = vsel %vm3945, %v3906, 0.0
    %v3947 = vadd.f32 %v3944, %v3946
    %v3948 = vsel %vm3929, %v3902, 0.0
    %v3949 = vsel %vm3937, %v3912, 0.0
    %v3950 = vadd.f32 %v3948, %v3949
    %v3951 = vsel %vm3945, %v3909, 0.0
    %v3952 = vadd.f32 %v3950, %v3951
    %vm3953 = vcmp.eq.f32.partialorder %v3898, 7.0
    %v3954 = vsel %vm3953, %v3906, 0.0
    %v3955 = vadd.f32 %v3952, %v3954
    %v3956 = vsel %vm3937, %v3902, 0.0
    %v3957 = vsel %vm3945, %v3912, 0.0
    %v3958 = vadd.f32 %v3956, %v3957
    %v3959 = vsel %vm3953, %v3909, 0.0
    %v3960 = vadd.f32 %v3958, %v3959
    %vm3961 = vcmp.eq.f32.partialorder %v3898, 8.0
    %v3962 = vsel %vm3961, %v3906, 0.0
    %v3963 = vadd.f32 %v3960, %v3962
    %v3964 = vsel %vm3945, %v3902, 0.0
    %v3965 = vsel %vm3953, %v3912, 0.0
    %v3966 = vadd.f32 %v3964, %v3965
    %v3967 = vsel %vm3961, %v3909, 0.0
    %v3968 = vadd.f32 %v3966, %v3967
    %vm3969 = vcmp.eq.f32.partialorder %v3898, 9.0
    %v3970 = vsel %vm3969, %v3906, 0.0
    %v3971 = vadd.f32 %v3968, %v3970
    %v3972 = vsel %vm3953, %v3902, 0.0
    %v3973 = vsel %vm3961, %v3912, 0.0
    %v3974 = vadd.f32 %v3972, %v3973
    %v3975 = vsel %vm3969, %v3909, 0.0
    %v3976 = vadd.f32 %v3974, %v3975
    %vm3977 = vcmp.eq.f32.partialorder %v3898, 10.0
    %v3978 = vsel %vm3977, %v3906, 0.0
    %v3979 = vadd.f32 %v3976, %v3978
    %v3980 = vpack.c.bf16 %v3923, %v3923
    %v3981 = vpack.c.bf16 %v3931, %v3931
    %v3982 = vpack.c.bf16 %v3939, %v3939
    %v3983 = vpack.c.bf16 %v3947, %v3947
    %v3984 = vpack.c.bf16 %v3955, %v3955
    %v3985 = vpack.c.bf16 %v3963, %v3963
    %v3986 = vpack.c.bf16 %v3971, %v3971
    %v3987 = vpack.c.bf16 %v3979, %v3979
    %v3988 = vld [vmem:[#allocation11] sm:$0xf]
    %v3989 = vld [vmem:[#allocation11 + $0x4] sm:$0xf]
    %v3990 = vld [vmem:[#allocation11 + $0x8] sm:$0xf]
    %v3991 = vld [vmem:[#allocation11 + $0xc] sm:$0xf]
    %v3992 = vld [vmem:[#allocation11 + $0x10] sm:$0xf]
    %v3993 = vld [vmem:[#allocation11 + $0x14] sm:$0xf]
    %v3994 = vld [vmem:[#allocation11 + $0x18] sm:$0xf]
    %v3995 = vld [vmem:[#allocation11 + $0x1c] sm:$0xf]
    %v3996 = vld [vmem:[#allocation11 + $0x20] sm:$0xf]
    %v3997 = vld [vmem:[#allocation11 + $0x24] sm:$0xf]
    %v3998 = vld [vmem:[#allocation11 + $0x28] sm:$0xf]
    %v3999 = vld [vmem:[#allocation11 + $0x2c] sm:$0xf]
    %v4000 = vld [vmem:[#allocation11 + $0x30] sm:$0xf]
    %v4001 = vld [vmem:[#allocation11 + $0x34] sm:$0xf]
    %v4002 = vld [vmem:[#allocation11 + $0x38] sm:$0xf]
    %v4003 = vld [vmem:[#allocation11 + $0x3c] sm:$0xf]
    %v4004 = vld [vmem:[#allocation11 + $0x40] sm:$0xf]
    %v4005 = vld [vmem:[#allocation11 + $0x44] sm:$0xf]
    %v4006 = vld [vmem:[#allocation11 + $0x48] sm:$0xf]
    %v4007 = vld [vmem:[#allocation11 + $0x4c] sm:$0xf]
    %v4008 = vld [vmem:[#allocation11 + $0x50] sm:$0xf]
    %v4009 = vld [vmem:[#allocation11 + $0x54] sm:$0xf]
    %v4010 = vld [vmem:[#allocation11 + $0x58] sm:$0xf]
    %v4011 = vld [vmem:[#allocation11 + $0x5c] sm:$0xf]
    %v4012 = vld [vmem:[#allocation11 + $0x60] sm:$0xf]
    %v4013 = vld [vmem:[#allocation11 + $0x64] sm:$0xf]
    %v4014 = vld [vmem:[#allocation11 + $0x68] sm:$0xf]
    %v4015 = vld [vmem:[#allocation11 + $0x6c] sm:$0xf]
    %v4016 = vld [vmem:[#allocation11 + $0x70] sm:$0xf]
    %v4017 = vld [vmem:[#allocation11 + $0x74] sm:$0xf]
    %v4018 = vld [vmem:[#allocation11 + $0x78] sm:$0xf]
    %v4019 = vld [vmem:[#allocation11 + $0x7c] sm:$0xf]
    %v4020 = vld [vmem:[#allocation11 + $0x80] sm:$0xf]
    %v4021 = vld [vmem:[#allocation11 + $0x84] sm:$0xf]
    %v4022 = vld [vmem:[#allocation11 + $0x88] sm:$0xf]
    %v4023 = vld [vmem:[#allocation11 + $0x8c] sm:$0xf]
    %v4024 = vld [vmem:[#allocation11 + $0x90] sm:$0xf]
    %v4025 = vld [vmem:[#allocation11 + $0x94] sm:$0xf]
    %v4026 = vld [vmem:[#allocation11 + $0x98] sm:$0xf]
    %v4027 = vld [vmem:[#allocation11 + $0x9c] sm:$0xf]
    %v4028 = vld [vmem:[#allocation11 + $0xa0] sm:$0xf]
    %v4029 = vld [vmem:[#allocation11 + $0xa4] sm:$0xf]
    %v4030 = vld [vmem:[#allocation11 + $0xa8] sm:$0xf]
    %v4031 = vld [vmem:[#allocation11 + $0xac] sm:$0xf]
    %v4032 = vld [vmem:[#allocation11 + $0xb0] sm:$0xf]
    %v4033 = vld [vmem:[#allocation11 + $0xb4] sm:$0xf]
    %v4034 = vld [vmem:[#allocation11 + $0xb8] sm:$0xf]
    %v4035 = vld [vmem:[#allocation11 + $0xbc] sm:$0xf]
    %v4036 = vld [vmem:[#allocation11 + $0xc0] sm:$0xf]
    %v4037 = vld [vmem:[#allocation11 + $0xc4] sm:$0xf]
    %v4038 = vld [vmem:[#allocation11 + $0xc8] sm:$0xf]
    %v4039 = vld [vmem:[#allocation11 + $0xcc] sm:$0xf]
    %v4040 = vld [vmem:[#allocation11 + $0xd0] sm:$0xf]
    %v4041 = vld [vmem:[#allocation11 + $0xd4] sm:$0xf]
    %v4042 = vld [vmem:[#allocation11 + $0xd8] sm:$0xf]
    %v4043 = vld [vmem:[#allocation11 + $0xdc] sm:$0xf]
    %v4044 = vld [vmem:[#allocation11 + $0xe0] sm:$0xf]
    %v4045 = vld [vmem:[#allocation11 + $0xe4] sm:$0xf]
    %v4046 = vld [vmem:[#allocation11 + $0xe8] sm:$0xf]
    %v4047 = vld [vmem:[#allocation11 + $0xec] sm:$0xf]
    %v4048 = vld [vmem:[#allocation11 + $0xf0] sm:$0xf]
    %v4049 = vld [vmem:[#allocation11 + $0xf4] sm:$0xf]
    %v4050 = vld [vmem:[#allocation11 + $0xf8] sm:$0xf]
    %v4051 = vld [vmem:[#allocation11 + $0xfc] sm:$0xf]
    %v4052 = vld [vmem:[#allocation11 + $0x100] sm:$0xf]
    %v4053 = vld [vmem:[#allocation11 + $0x104] sm:$0xf]
    %v4054 = vld [vmem:[#allocation11 + $0x108] sm:$0xf]
    %v4055 = vld [vmem:[#allocation11 + $0x10c] sm:$0xf]
    %v4056 = vld [vmem:[#allocation11 + $0x110] sm:$0xf]
    %v4057 = vld [vmem:[#allocation11 + $0x114] sm:$0xf]
    %v4058 = vld [vmem:[#allocation11 + $0x118] sm:$0xf]
    %v4059 = vld [vmem:[#allocation11 + $0x11c] sm:$0xf]
    %v4060 = vld [vmem:[#allocation11 + $0x120] sm:$0xf]
    %v4061 = vld [vmem:[#allocation11 + $0x124] sm:$0xf]
    %v4062 = vld [vmem:[#allocation11 + $0x128] sm:$0xf]
    %v4063 = vld [vmem:[#allocation11 + $0x12c] sm:$0xf]
    %v4064 = vld [vmem:[#allocation11 + $0x130] sm:$0xf]
    %v4065 = vld [vmem:[#allocation11 + $0x134] sm:$0xf]
    %v4066 = vld [vmem:[#allocation11 + $0x138] sm:$0xf]
    %v4067 = vld [vmem:[#allocation11 + $0x13c] sm:$0xf]
    %v4068 = vld [vmem:[#allocation11 + $0x140] sm:$0xf]
    %v4069 = vld [vmem:[#allocation11 + $0x144] sm:$0xf]
    %v4070 = vld [vmem:[#allocation11 + $0x148] sm:$0xf]
    %v4071 = vld [vmem:[#allocation11 + $0x14c] sm:$0xf]
    %v4072 = vld [vmem:[#allocation11 + $0x150] sm:$0xf]
    %v4073 = vld [vmem:[#allocation11 + $0x154] sm:$0xf]
    %v4074 = vld [vmem:[#allocation11 + $0x158] sm:$0xf]
    %v4075 = vld [vmem:[#allocation11 + $0x15c] sm:$0xf]
    %v4076 = vld [vmem:[#allocation11 + $0x160] sm:$0xf]
    %v4077 = vld [vmem:[#allocation11 + $0x164] sm:$0xf]
    %v4078 = vld [vmem:[#allocation11 + $0x168] sm:$0xf]
    %v4079 = vld [vmem:[#allocation11 + $0x16c] sm:$0xf]
    %v4080 = vld [vmem:[#allocation11 + $0x170] sm:$0xf]
    %v4081 = vld [vmem:[#allocation11 + $0x174] sm:$0xf]
    %v4082 = vld [vmem:[#allocation11 + $0x178] sm:$0xf]
    %v4083 = vld [vmem:[#allocation11 + $0x17c] sm:$0xf]
    %v4084 = vld [vmem:[#allocation11 + $0x180] sm:$0xf]
    %v4085 = vld [vmem:[#allocation11 + $0x184] sm:$0xf]
    %v4086 = vld [vmem:[#allocation11 + $0x188] sm:$0xf]
    %v4087 = vld [vmem:[#allocation11 + $0x18c] sm:$0xf]
    %v4088 = vld [vmem:[#allocation11 + $0x190] sm:$0xf]
    %v4089 = vld [vmem:[#allocation11 + $0x194] sm:$0xf]
    %v4090 = vld [vmem:[#allocation11 + $0x198] sm:$0xf]
    %v4091 = vld [vmem:[#allocation11 + $0x19c] sm:$0xf]
    %v4092 = vld [vmem:[#allocation11 + $0x1a0] sm:$0xf]
    %v4093 = vld [vmem:[#allocation11 + $0x1a4] sm:$0xf]
    %v4094 = vld [vmem:[#allocation11 + $0x1a8] sm:$0xf]
    %v4095 = vld [vmem:[#allocation11 + $0x1ac] sm:$0xf]
    %v4096 = vld [vmem:[#allocation11 + $0x1b0] sm:$0xf]
    %v4097 = vld [vmem:[#allocation11 + $0x1b4] sm:$0xf]
    %v4098 = vld [vmem:[#allocation11 + $0x1b8] sm:$0xf]
    %v4099 = vld [vmem:[#allocation11 + $0x1bc] sm:$0xf]
    %v4100 = vld [vmem:[#allocation11 + $0x1c0] sm:$0xf]
    %v4101 = vld [vmem:[#allocation11 + $0x1c4] sm:$0xf]
    %v4102 = vld [vmem:[#allocation11 + $0x1c8] sm:$0xf]
    %v4103 = vld [vmem:[#allocation11 + $0x1cc] sm:$0xf]
    %v4104 = vld [vmem:[#allocation11 + $0x1d0] sm:$0xf]
    %v4105 = vld [vmem:[#allocation11 + $0x1d4] sm:$0xf]
    %v4106 = vld [vmem:[#allocation11 + $0x1d8] sm:$0xf]
    %v4107 = vld [vmem:[#allocation11 + $0x1dc] sm:$0xf]
    %v4108 = vld [vmem:[#allocation11 + $0x1e0] sm:$0xf]
    %v4109 = vld [vmem:[#allocation11 + $0x1e4] sm:$0xf]
    %v4110 = vld [vmem:[#allocation11 + $0x1e8] sm:$0xf]
    %v4111 = vld [vmem:[#allocation11 + $0x1ec] sm:$0xf]
    %v4112 = vld [vmem:[#allocation11 + $0x1f0] sm:$0xf]
    %v4113 = vld [vmem:[#allocation11 + $0x1f4] sm:$0xf]
    %v4114 = vld [vmem:[#allocation11 + $0x1f8] sm:$0xf]
    %v4115 = vld [vmem:[#allocation11 + $0x1fc] sm:$0xf]
    %v4116 = vld [vmem:[#allocation11 + $0x200] sm:$0xf]
    %v4117 = vld [vmem:[#allocation11 + $0x204] sm:$0xf]
    %v4118 = vld [vmem:[#allocation11 + $0x208] sm:$0xf]
    %v4119 = vld [vmem:[#allocation11 + $0x20c] sm:$0xf]
    %v4120 = vld [vmem:[#allocation11 + $0x210] sm:$0xf]
    %v4121 = vld [vmem:[#allocation11 + $0x214] sm:$0xf]
    %v4122 = vld [vmem:[#allocation11 + $0x218] sm:$0xf]
    %v4123 = vld [vmem:[#allocation11 + $0x21c] sm:$0xf]
    %v4124 = vld [vmem:[#allocation11 + $0x220] sm:$0xf]
    %v4125 = vld [vmem:[#allocation11 + $0x224] sm:$0xf]
    %v4126 = vld [vmem:[#allocation11 + $0x228] sm:$0xf]
    %v4127 = vld [vmem:[#allocation11 + $0x22c] sm:$0xf]
    %v4128 = vld [vmem:[#allocation11 + $0x230] sm:$0xf]
    %v4129 = vld [vmem:[#allocation11 + $0x234] sm:$0xf]
    %v4130 = vld [vmem:[#allocation11 + $0x238] sm:$0xf]
    %v4131 = vld [vmem:[#allocation11 + $0x23c] sm:$0xf]
    %v4276 = vunpack.c.l.b16 %v3988
    %v4277 = vunpack.c.l.b16 %v3989
    %v4278 = vunpack.c.l.b16 %v3990
    %v4279 = vunpack.c.l.b16 %v3991
    %v4280 = vunpack.c.l.b16 %v3992
    %v4281 = vunpack.c.l.b16 %v3993
    %v4282 = vunpack.c.l.b16 %v3994
    %v4283 = vunpack.c.l.b16 %v3995
    %v4284 = vunpack.c.l.b16 %v3996
    %v4285 = vunpack.c.l.b16 %v3997
    %v4286 = vunpack.c.l.b16 %v3998
    %v4287 = vunpack.c.l.b16 %v3999
    %v4288 = vunpack.c.l.b16 %v4000
    %v4289 = vunpack.c.l.b16 %v4001
    %v4290 = vunpack.c.l.b16 %v4002
    %v4291 = vunpack.c.l.b16 %v4003
    %v4292 = vunpack.c.l.b16 %v4004
    %v4293 = vunpack.c.l.b16 %v4005
    %v4294 = vunpack.c.l.b16 %v4006
    %v4295 = vunpack.c.l.b16 %v4007
    %v4296 = vunpack.c.l.b16 %v4008
    %v4297 = vunpack.c.l.b16 %v4009
    %v4298 = vunpack.c.l.b16 %v4010
    %v4299 = vunpack.c.l.b16 %v4011
    %v4300 = vunpack.c.l.b16 %v4012
    %v4301 = vunpack.c.l.b16 %v4013
    %v4302 = vunpack.c.l.b16 %v4014
    %v4303 = vunpack.c.l.b16 %v4015
    %v4304 = vunpack.c.l.b16 %v4016
    %v4305 = vunpack.c.l.b16 %v4017
    %v4306 = vunpack.c.l.b16 %v4018
    %v4307 = vunpack.c.l.b16 %v4019
    %v4308 = vunpack.c.l.b16 %v4020
    %v4309 = vunpack.c.l.b16 %v4021
    %v4310 = vunpack.c.l.b16 %v4022
    %v4311 = vunpack.c.l.b16 %v4023
    %v4312 = vunpack.c.l.b16 %v4024
    %v4313 = vunpack.c.l.b16 %v4025
    %v4314 = vunpack.c.l.b16 %v4026
    %v4315 = vunpack.c.l.b16 %v4027
    %v4316 = vunpack.c.l.b16 %v4028
    %v4317 = vunpack.c.l.b16 %v4029
    %v4318 = vunpack.c.l.b16 %v4030
    %v4319 = vunpack.c.l.b16 %v4031
    %v4320 = vunpack.c.l.b16 %v4032
    %v4321 = vunpack.c.l.b16 %v4033
    %v4322 = vunpack.c.l.b16 %v4034
    %v4323 = vunpack.c.l.b16 %v4035
    %v4324 = vunpack.c.l.b16 %v4036
    %v4325 = vunpack.c.l.b16 %v4037
    %v4326 = vunpack.c.l.b16 %v4038
    %v4327 = vunpack.c.l.b16 %v4039
    %v4328 = vunpack.c.l.b16 %v4040
    %v4329 = vunpack.c.l.b16 %v4041
    %v4330 = vunpack.c.l.b16 %v4042
    %v4331 = vunpack.c.l.b16 %v4043
    %v4332 = vunpack.c.l.b16 %v4044
    %v4333 = vunpack.c.l.b16 %v4045
    %v4334 = vunpack.c.l.b16 %v4046
    %v4335 = vunpack.c.l.b16 %v4047
    %v4336 = vunpack.c.l.b16 %v4048
    %v4337 = vunpack.c.l.b16 %v4049
    %v4338 = vunpack.c.l.b16 %v4050
    %v4339 = vunpack.c.l.b16 %v4051
    %v4340 = vunpack.c.l.b16 %v4052
    %v4341 = vunpack.c.l.b16 %v4053
    %v4342 = vunpack.c.l.b16 %v4054
    %v4343 = vunpack.c.l.b16 %v4055
    %v4344 = vunpack.c.l.b16 %v4056
    %v4345 = vunpack.c.l.b16 %v4057
    %v4346 = vunpack.c.l.b16 %v4058
    %v4347 = vunpack.c.l.b16 %v4059
    %v4348 = vunpack.c.l.b16 %v4060
    %v4349 = vunpack.c.l.b16 %v4061
    %v4350 = vunpack.c.l.b16 %v4062
    %v4351 = vunpack.c.l.b16 %v4063
    %v4352 = vunpack.c.l.b16 %v4064
    %v4353 = vunpack.c.l.b16 %v4065
    %v4354 = vunpack.c.l.b16 %v4066
    %v4355 = vunpack.c.l.b16 %v4067
    %v4356 = vunpack.c.l.b16 %v4068
    %v4357 = vunpack.c.l.b16 %v4069
    %v4358 = vunpack.c.l.b16 %v4070
    %v4359 = vunpack.c.l.b16 %v4071
    %v4360 = vunpack.c.l.b16 %v4072
    %v4361 = vunpack.c.l.b16 %v4073
    %v4362 = vunpack.c.l.b16 %v4074
    %v4363 = vunpack.c.l.b16 %v4075
    %v4364 = vunpack.c.l.b16 %v4076
    %v4365 = vunpack.c.l.b16 %v4077
    %v4366 = vunpack.c.l.b16 %v4078
    %v4367 = vunpack.c.l.b16 %v4079
    %v4368 = vunpack.c.l.b16 %v4080
    %v4369 = vunpack.c.l.b16 %v4081
    %v4370 = vunpack.c.l.b16 %v4082
    %v4371 = vunpack.c.l.b16 %v4083
    %v4372 = vunpack.c.l.b16 %v4084
    %v4373 = vunpack.c.l.b16 %v4085
    %v4374 = vunpack.c.l.b16 %v4086
    %v4375 = vunpack.c.l.b16 %v4087
    %v4376 = vunpack.c.l.b16 %v4088
    %v4377 = vunpack.c.l.b16 %v4089
    %v4378 = vunpack.c.l.b16 %v4090
    %v4379 = vunpack.c.l.b16 %v4091
    %v4380 = vunpack.c.l.b16 %v4092
    %v4381 = vunpack.c.l.b16 %v4093
    %v4382 = vunpack.c.l.b16 %v4094
    %v4383 = vunpack.c.l.b16 %v4095
    %v4384 = vunpack.c.l.b16 %v4096
    %v4385 = vunpack.c.l.b16 %v4097
    %v4386 = vunpack.c.l.b16 %v4098
    %v4387 = vunpack.c.l.b16 %v4099
    %v4388 = vunpack.c.l.b16 %v4100
    %v4389 = vunpack.c.l.b16 %v4101
    %v4390 = vunpack.c.l.b16 %v4102
    %v4391 = vunpack.c.l.b16 %v4103
    %v4392 = vunpack.c.l.b16 %v4104
    %v4393 = vunpack.c.l.b16 %v4105
    %v4394 = vunpack.c.l.b16 %v4106
    %v4395 = vunpack.c.l.b16 %v4107
    %v4396 = vunpack.c.l.b16 %v4108
    %v4397 = vunpack.c.l.b16 %v4109
    %v4398 = vunpack.c.l.b16 %v4110
    %v4399 = vunpack.c.l.b16 %v4111
    %v4400 = vunpack.c.l.b16 %v4112
    %v4401 = vunpack.c.l.b16 %v4113
    %v4402 = vunpack.c.l.b16 %v4114
    %v4403 = vunpack.c.l.b16 %v4115
    %v4404 = vunpack.c.l.b16 %v4116
    %v4405 = vunpack.c.l.b16 %v4117
    %v4406 = vunpack.c.l.b16 %v4118
    %v4407 = vunpack.c.l.b16 %v4119
    %v4408 = vunpack.c.l.b16 %v4120
    %v4409 = vunpack.c.l.b16 %v4121
    %v4410 = vunpack.c.l.b16 %v4122
    %v4411 = vunpack.c.l.b16 %v4123
    %v4412 = vunpack.c.l.b16 %v4124
    %v4413 = vunpack.c.l.b16 %v4125
    %v4414 = vunpack.c.l.b16 %v4126
    %v4415 = vunpack.c.l.b16 %v4127
    %v4416 = vunpack.c.l.b16 %v4128
    %v4417 = vunpack.c.l.b16 %v4129
    %v4418 = vunpack.c.l.b16 %v4130
    %v4419 = vunpack.c.l.b16 %v4131
    %v4420 = vpack.c.b16 %v4277, %v4276
    %v4421 = vpack.c.b16 %v4279, %v4278
    %v4422 = vpack.c.b16 %v4281, %v4280
    %v4423 = vpack.c.b16 %v4283, %v4282
    %v4424 = vpack.c.b16 %v4285, %v4284
    %v4425 = vpack.c.b16 %v4287, %v4286
    %v4426 = vpack.c.b16 %v4289, %v4288
    %v4427 = vpack.c.b16 %v4291, %v4290
    %v4428 = vpack.c.b16 %v4293, %v4292
    %v4429 = vpack.c.b16 %v4295, %v4294
    %v4430 = vpack.c.b16 %v4297, %v4296
    %v4431 = vpack.c.b16 %v4299, %v4298
    %v4432 = vpack.c.b16 %v4301, %v4300
    %v4433 = vpack.c.b16 %v4303, %v4302
    %v4434 = vpack.c.b16 %v4305, %v4304
    %v4435 = vpack.c.b16 %v4307, %v4306
    %v4436 = vpack.c.b16 %v4309, %v4308
    %v4437 = vpack.c.b16 %v4311, %v4310
    %v4438 = vpack.c.b16 %v4313, %v4312
    %v4439 = vpack.c.b16 %v4315, %v4314
    %v4440 = vpack.c.b16 %v4317, %v4316
    %v4441 = vpack.c.b16 %v4319, %v4318
    %v4442 = vpack.c.b16 %v4321, %v4320
    %v4443 = vpack.c.b16 %v4323, %v4322
    %v4444 = vpack.c.b16 %v4325, %v4324
    %v4445 = vpack.c.b16 %v4327, %v4326
    %v4446 = vpack.c.b16 %v4329, %v4328
    %v4447 = vpack.c.b16 %v4331, %v4330
    %v4448 = vpack.c.b16 %v4333, %v4332
    %v4449 = vpack.c.b16 %v4335, %v4334
    %v4450 = vpack.c.b16 %v4337, %v4336
    %v4451 = vpack.c.b16 %v4339, %v4338
    %v4452 = vpack.c.b16 %v4341, %v4340
    %v4453 = vpack.c.b16 %v4343, %v4342
    %v4454 = vpack.c.b16 %v4345, %v4344
    %v4455 = vpack.c.b16 %v4347, %v4346
    %v4456 = vpack.c.b16 %v4349, %v4348
    %v4457 = vpack.c.b16 %v4351, %v4350
    %v4458 = vpack.c.b16 %v4353, %v4352
    %v4459 = vpack.c.b16 %v4355, %v4354
    %v4460 = vpack.c.b16 %v4357, %v4356
    %v4461 = vpack.c.b16 %v4359, %v4358
    %v4462 = vpack.c.b16 %v4361, %v4360
    %v4463 = vpack.c.b16 %v4363, %v4362
    %v4464 = vpack.c.b16 %v4365, %v4364
    %v4465 = vpack.c.b16 %v4367, %v4366
    %v4466 = vpack.c.b16 %v4369, %v4368
    %v4467 = vpack.c.b16 %v4371, %v4370
    %v4468 = vpack.c.b16 %v4373, %v4372
    %v4469 = vpack.c.b16 %v4375, %v4374
    %v4470 = vpack.c.b16 %v4377, %v4376
    %v4471 = vpack.c.b16 %v4379, %v4378
    %v4472 = vpack.c.b16 %v4381, %v4380
    %v4473 = vpack.c.b16 %v4383, %v4382
    %v4474 = vpack.c.b16 %v4385, %v4384
    %v4475 = vpack.c.b16 %v4387, %v4386
    %v4476 = vpack.c.b16 %v4389, %v4388
    %v4477 = vpack.c.b16 %v4391, %v4390
    %v4478 = vpack.c.b16 %v4393, %v4392
    %v4479 = vpack.c.b16 %v4395, %v4394
    %v4480 = vpack.c.b16 %v4397, %v4396
    %v4481 = vpack.c.b16 %v4399, %v4398
    %v4482 = vpack.c.b16 %v4401, %v4400
    %v4483 = vpack.c.b16 %v4403, %v4402
    %v4484 = vpack.c.b16 %v4405, %v4404
    %v4485 = vpack.c.b16 %v4407, %v4406
    %v4486 = vpack.c.b16 %v4409, %v4408
    %v4487 = vpack.c.b16 %v4411, %v4410
    %v4488 = vpack.c.b16 %v4413, %v4412
    %v4489 = vpack.c.b16 %v4415, %v4414
    %v4490 = vpack.c.b16 %v4417, %v4416
    %v4491 = vpack.c.b16 %v4419, %v4418
    %4564 = vmatprep.subr.bf16.mxu0 0
    %4565 = vmatpush1.bf16.msra.mxu0 %v4420
    %4566 = vmatprep.subr.bf16.mxu0 0
    %4567 = vmatpush1.bf16.msra.mxu0 %v4421
    %4568 = vmatprep.subr.bf16.mxu0 0
    %4569 = vmatpush1.bf16.msra.mxu0 %v4422
    %4570 = vmatprep.subr.bf16.mxu0 0
    %4571 = vmatpush1.bf16.msra.mxu0 %v4423
    %4572 = vmatprep.subr.bf16.mxu0 0
    %4573 = vmatpush1.bf16.msra.mxu0 %v4424
    %4574 = vmatprep.subr.bf16.mxu0 0
    %4575 = vmatpush1.bf16.msra.mxu0 %v4425
    %4576 = vmatprep.subr.bf16.mxu0 0
    %4577 = vmatpush1.bf16.msra.mxu0 %v4426
    %4578 = vmatprep.subr.bf16.mxu0 0
    %4579 = vmatpush1.bf16.msra.mxu0 %v4427
    %4580 = vmatprep.subr.bf16.mxu0 0
    %4581 = vmatpush1.bf16.msra.mxu0 %v4428
    %4582 = vmatprep.subr.bf16.mxu0 0
    %4583 = vmatpush1.bf16.msra.mxu0 %v4429
    %4584 = vmatprep.subr.bf16.mxu0 0
    %4585 = vmatpush1.bf16.msra.mxu0 %v4430
    %4586 = vmatprep.subr.bf16.mxu0 0
    %4587 = vmatpush1.bf16.msra.mxu0 %v4431
    %4588 = vmatprep.subr.bf16.mxu0 0
    %4589 = vmatpush1.bf16.msra.mxu0 %v4432
    %4590 = vmatprep.subr.bf16.mxu0 0
    %4591 = vmatpush1.bf16.msra.mxu0 %v4433
    %4592 = vmatprep.subr.bf16.mxu0 0
    %4593 = vmatpush1.bf16.msra.mxu0 %v4434
    %4594 = vmatprep.subr.bf16.mxu0 0
    %4595 = vmatpush1.bf16.msra.mxu0 %v4435
    %4596 = vmatprep.mubr.bf16.mxu0 %v3980
    %4597 = vmatmul.mubr.bf16.gmra.mrb[0].mxu0 %v3895
    %v4598 = vpop.f32.mrb[0].mxu0
    %v4599 = vadd.f32 0.0, %v4598
    %v4600 = vpop.f32.mrb[0].mxu0
    %v4601 = vpop.f32.mrb[0].mxu0
    %v4602 = vpop.f32.mrb[0].mxu0
    %4603 = vdwg.mxu0
    %4604 = vmatprep.subr.bf16.mxu0 0
    %4605 = vmatpush1.bf16.msra.mxu0 %v4436
    %4606 = vmatprep.subr.bf16.mxu0 0
    %4607 = vmatpush1.bf16.msra.mxu0 %v4437
    %4608 = vmatprep.subr.bf16.mxu0 0
    %4609 = vmatpush1.bf16.msra.mxu0 %v4438
    %4610 = vmatprep.subr.bf16.mxu0 0
    %4611 = vmatpush1.bf16.msra.mxu0 %v4439
    %4612 = vmatprep.subr.bf16.mxu0 0
    %4613 = vmatpush1.bf16.msra.mxu0 %v4440
    %4614 = vmatprep.subr.bf16.mxu0 0
    %4615 = vmatpush1.bf16.msra.mxu0 %v4441
    %4616 = vmatprep.subr.bf16.mxu0 0
    %4617 = vmatpush1.bf16.msra.mxu0 %v4442
    %4618 = vmatprep.subr.bf16.mxu0 0
    %4619 = vmatpush1.bf16.msra.mxu0 %v4443
    %4620 = vmatprep.subr.bf16.mxu0 0
    %4621 = vmatpush1.bf16.msra.mxu0 %v4444
    %4622 = vmatprep.subr.bf16.mxu0 0
    %4623 = vmatpush1.bf16.msra.mxu0 %v4445
    %4624 = vmatprep.subr.bf16.mxu0 0
    %4625 = vmatpush1.bf16.msra.mxu0 %v4446
    %4626 = vmatprep.subr.bf16.mxu0 0
    %4627 = vmatpush1.bf16.msra.mxu0 %v4447
    %4628 = vmatprep.subr.bf16.mxu0 0
    %4629 = vmatpush1.bf16.msra.mxu0 %v4448
    %4630 = vmatprep.subr.bf16.mxu0 0
    %4631 = vmatpush1.bf16.msra.mxu0 %v4449
    %4632 = vmatprep.subr.bf16.mxu0 0
    %4633 = vmatpush1.bf16.msra.mxu0 %v4450
    %4634 = vmatprep.subr.bf16.mxu0 0
    %4635 = vmatpush1.bf16.msra.mxu0 %v4451
    %4636 = vmatprep.mubr.bf16.mxu0 %v3982
    %4637 = vmatmul.mubr.bf16.gmra.mrb[0].mxu0 %v3981
    %v4638 = vpop.f32.mrb[0].mxu0
    %v4639 = vadd.f32 %v4599, %v4638
    %v4640 = vpop.f32.mrb[0].mxu0
    %v4641 = vpop.f32.mrb[0].mxu0
    %v4642 = vpop.f32.mrb[0].mxu0
    %4643 = vdwg.mxu0
    %4644 = vmatprep.subr.bf16.mxu0 0
    %4645 = vmatpush1.bf16.msra.mxu0 %v4452
    %4646 = vmatprep.subr.bf16.mxu0 0
    %4647 = vmatpush1.bf16.msra.mxu0 %v4453
    %4648 = vmatprep.subr.bf16.mxu0 0
    %4649 = vmatpush1.bf16.msra.mxu0 %v4454
    %4650 = vmatprep.subr.bf16.mxu0 0
    %4651 = vmatpush1.bf16.msra.mxu0 %v4455
    %4652 = vmatprep.subr.bf16.mxu0 0
    %4653 = vmatpush1.bf16.msra.mxu0 %v4456
    %4654 = vmatprep.subr.bf16.mxu0 0
    %4655 = vmatpush1.bf16.msra.mxu0 %v4457
    %4656 = vmatprep.subr.bf16.mxu0 0
    %4657 = vmatpush1.bf16.msra.mxu0 %v4458
    %4658 = vmatprep.subr.bf16.mxu0 0
    %4659 = vmatpush1.bf16.msra.mxu0 %v4459
    %4660 = vmatprep.subr.bf16.mxu0 0
    %4661 = vmatpush1.bf16.msra.mxu0 %v4460
    %4662 = vmatprep.subr.bf16.mxu0 0
    %4663 = vmatpush1.bf16.msra.mxu0 %v4461
    %4664 = vmatprep.subr.bf16.mxu0 0
    %4665 = vmatpush1.bf16.msra.mxu0 %v4462
    %4666 = vmatprep.subr.bf16.mxu0 0
    %4667 = vmatpush1.bf16.msra.mxu0 %v4463
    %4668 = vmatprep.subr.bf16.mxu0 0
    %4669 = vmatpush1.bf16.msra.mxu0 %v4464
    %4670 = vmatprep.subr.bf16.mxu0 0
    %4671 = vmatpush1.bf16.msra.mxu0 %v4465
    %4672 = vmatprep.subr.bf16.mxu0 0
    %4673 = vmatpush1.bf16.msra.mxu0 %v4466
    %4674 = vmatprep.subr.bf16.mxu0 0
    %4675 = vmatpush1.bf16.msra.mxu0 %v4467
    %4676 = vmatprep.mubr.bf16.mxu0 %v3984
    %4677 = vmatmul.mubr.bf16.gmra.mrb[0].mxu0 %v3983
    %v4678 = vpop.f32.mrb[0].mxu0
    %v4679 = vadd.f32 %v4639, %v4678
    %v4680 = vpop.f32.mrb[0].mxu0
    %v4681 = vpop.f32.mrb[0].mxu0
    %v4682 = vpop.f32.mrb[0].mxu0
    %4683 = vdwg.mxu0
    %4684 = vmatprep.subr.bf16.mxu0 0
    %4685 = vmatpush1.bf16.msra.mxu0 %v4468
    %4686 = vmatprep.subr.bf16.mxu0 0
    %4687 = vmatpush1.bf16.msra.mxu0 %v4469
    %4688 = vmatprep.subr.bf16.mxu0 0
    %4689 = vmatpush1.bf16.msra.mxu0 %v4470
    %4690 = vmatprep.subr.bf16.mxu0 0
    %4691 = vmatpush1.bf16.msra.mxu0 %v4471
    %4692 = vmatprep.subr.bf16.mxu0 0
    %4693 = vmatpush1.bf16.msra.mxu0 %v4472
    %4694 = vmatprep.subr.bf16.mxu0 0
    %4695 = vmatpush1.bf16.msra.mxu0 %v4473
    %4696 = vmatprep.subr.bf16.mxu0 0
    %4697 = vmatpush1.bf16.msra.mxu0 %v4474
    %4698 = vmatprep.subr.bf16.mxu0 0
    %4699 = vmatpush1.bf16.msra.mxu0 %v4475
    %4700 = vmatprep.subr.bf16.mxu0 0
    %4701 = vmatpush1.bf16.msra.mxu0 %v4476
    %4702 = vmatprep.subr.bf16.mxu0 0
    %4703 = vmatpush1.bf16.msra.mxu0 %v4477
    %4704 = vmatprep.subr.bf16.mxu0 0
    %4705 = vmatpush1.bf16.msra.mxu0 %v4478
    %4706 = vmatprep.subr.bf16.mxu0 0
    %4707 = vmatpush1.bf16.msra.mxu0 %v4479
    %4708 = vmatprep.subr.bf16.mxu0 0
    %4709 = vmatpush1.bf16.msra.mxu0 %v4480
    %4710 = vmatprep.subr.bf16.mxu0 0
    %4711 = vmatpush1.bf16.msra.mxu0 %v4481
    %4712 = vmatprep.subr.bf16.mxu0 0
    %4713 = vmatpush1.bf16.msra.mxu0 %v4482
    %4714 = vmatprep.subr.bf16.mxu0 0
    %4715 = vmatpush1.bf16.msra.mxu0 %v4483
    %4716 = vmatprep.mubr.bf16.mxu0 %v3986
    %4717 = vmatmul.mubr.bf16.gmra.mrb[0].mxu0 %v3985
    %v4718 = vpop.f32.mrb[0].mxu0
    %v4719 = vadd.f32 %v4679, %v4718
    %v4720 = vpop.f32.mrb[0].mxu0
    %v4721 = vpop.f32.mrb[0].mxu0
    %v4722 = vpop.f32.mrb[0].mxu0
    %4723 = vdwg.mxu0
    %4724 = vmatprep.subr.bf16.mxu0 0
    %4725 = vmatpush1.bf16.msra.mxu0 %v4484
    %4726 = vmatprep.subr.bf16.mxu0 0
    %4727 = vmatpush1.bf16.msra.mxu0 %v4485
    %4728 = vmatprep.subr.bf16.mxu0 0
    %4729 = vmatpush1.bf16.msra.mxu0 %v4486
    %4730 = vmatprep.subr.bf16.mxu0 0
    %4731 = vmatpush1.bf16.msra.mxu0 %v4487
    %4732 = vmatprep.subr.bf16.mxu0 0
    %4733 = vmatpush1.bf16.msra.mxu0 %v4488
    %4734 = vmatprep.subr.bf16.mxu0 0
    %4735 = vmatpush1.bf16.msra.mxu0 %v4489
    %4736 = vmatprep.subr.bf16.mxu0 0
    %4737 = vmatpush1.bf16.msra.mxu0 %v4490
    %4738 = vmatprep.subr.bf16.mxu0 0
    %4739 = vmatpush1.bf16.msra.mxu0 %v4491
    %4740 = vmatprep.subr.bf16.mxu0 0
    %4741 = vmatpush1.bf16.msra.mxu0 0
    %4742 = vmatprep.subr.bf16.mxu0 0
    %4743 = vmatpush1.bf16.msra.mxu0 0
    %4744 = vmatprep.subr.bf16.mxu0 0
    %4745 = vmatpush1.bf16.msra.mxu0 0
    %4746 = vmatprep.subr.bf16.mxu0 0
    %4747 = vmatpush1.bf16.msra.mxu0 0
    %4748 = vmatprep.subr.bf16.mxu0 0
    %4749 = vmatpush1.bf16.msra.mxu0 0
    %4750 = vmatprep.subr.bf16.mxu0 0
    %4751 = vmatpush1.bf16.msra.mxu0 0
    %4752 = vmatprep.subr.bf16.mxu0 0
    %4753 = vmatpush1.bf16.msra.mxu0 0
    %4754 = vmatprep.subr.bf16.mxu0 0
    %4755 = vmatpush1.bf16.msra.mxu0 0
    %4756 = vmatprep.mubr.bf16.mxu0 0
    %4757 = vmatmul.mubr.bf16.gmra.mrb[0].mxu0 %v3987
    %v4758 = vpop.f32.mrb[0].mxu0
    %v4759 = vadd.f32 %v4719, %v4758
    %v4760 = vpop.f32.mrb[0].mxu0
    %v4761 = vpop.f32.mrb[0].mxu0
    %v4762 = vpop.f32.mrb[0].mxu0
    %4763 = vdwg.mxu0
    %4764 = vst [vmem:[#allocation13] sm:$0xff] %v4759
    // Predicated region
    $region70: #{tpu_custom_call.1} parent=1 // pred_check
      _
    $region71: #{tpu_custom_call.1} parent=1 // pred_check_branch
      %4766 = sbr.rel (0) target = $region73
    $region72: #{tpu_custom_call.1} parent=1 // pred_region
      %s4768 = ssub.s32 128, 128
      %4769 = vsyncadd [#allocation4], %s4768
      %s4771 = sshll.u32 [#allocation13], 4
      %s4772 = int_to_ptr.vmem [resolvable:$true] %s4771
      %4774 = dma.vmem_to_hbm [thread:$0]  %s4772, 128, %s11, [#allocation4]
    $region73: #{tpu_custom_call.1} parent=1 // pred_fallthru
      _
    // Predicated region
    $region74: #{tpu_custom_call.1} parent=1 // pred_check
      _
    $region75: #{tpu_custom_call.1} parent=1 // pred_check_branch
      %4776 = sbr.rel (0) target = $region77
    $region76: #{tpu_custom_call.1} parent=1 // pred_region
      %4777 = dma.done [#allocation4], 128
    $region77: #{tpu_custom_call.1} parent=1 // pred_fallthru
      _
    %4778 = vsyncpa [#allocation3], 1
    %4779 = vsyncpa [#allocation6], 1
    %4780 = vsyncpa [#allocation9], 1
    %4781 = vsyncpa [#allocation12], 1
    %4782 = vsyncpa [#allocation4], 1

</llo_original>
